<compile_context>
chip_gen: v7x
topology: tpu7x:2x2x1
jax: 0.10.0
libtpu: 0.0.40
codegen_flags: <defaults>
</compile_context>

<pallas_src>
import functools

import jax
import jax.numpy as jnp
from jax.experimental import pallas as pl
from jax.experimental.pallas import tpu as pltpu


# ----------------------------------------------------------------------------
# fused DIFRINT kernel (one (batch, HW-tile) block per grid step)
# ----------------------------------------------------------------------------
def _difrint_kernel(*refs, H, W, C):
    (ftm_hw_ref, ft_hw_ref, ftp_hw_ref,          # (1, C*H, W)  bf16 warp sources
     ftm_f_ref, ft_f_ref, ftp_f_ref,             # (1, C, THW)  bf16 MLP inputs
     gx_ref, gy_ref,                             # (1, THW)     f32 target coords
     p_w1a, p_w1b, p_b1, p_w2, p_b2,             # pwc  stand-in
     u_w11, u_w12, u_w13, u_w14, u_w15, u_w16,   # unet stand-in (6 input blocks)
     u_b1, u_w2, u_b2,
     r_w1a, r_w1b, r_b1, r_w2, r_b2,             # resnet stand-in
     fint_ref, fout_ref) = refs

    gx = gx_ref[...]                              # (1, THW) global target x
    gy = gy_ref[...]                              # (1, THW) global target y
    THW = gx.shape[-1]

    ftm = ftm_f_ref[0]                            # (C, THW) bf16
    ft = ft_f_ref[0]
    ftp = ftp_f_ref[0]
    ftm_img = ftm_hw_ref[0]                       # (C*H, W) bf16
    ft_img = ft_hw_ref[0]
    ftp_img = ftp_hw_ref[0]

    # Cheap grid-invariant selector iotas (gx/gy with the mod/div are host-side).
    col_iota = jax.lax.broadcasted_iota(jnp.int32, (W, THW), 0)
    row_iota = jax.lax.broadcasted_iota(jnp.int32, (H, THW), 0)

    # ---- pointwise (1x1 conv) two-layer MLP, channels-first, lane-dense ----
    # Channel-concat along the contraction dim is implicit: one accumulation
    # chain of partial matmuls (bf16 operands, f32 accumulation).
    def mlp(parts, w1_refs, b1_ref, w2_ref, b2_ref, tanh_scale=None):
        acc = None
        for w_ref, part in zip(w1_refs, parts):
            d = jnp.dot(w_ref[...], part.astype(jnp.bfloat16),
                        preferred_element_type=jnp.float32)
            acc = d if acc is None else acc + d
        h = jnp.maximum(acc + b1_ref[...], 0.0)                   # (hid, THW) f32
        o = jnp.dot(w2_ref[...], h.astype(jnp.bfloat16),
                    preferred_element_type=jnp.float32) + b2_ref[...]
        if tanh_scale is not None:
            o = jnp.tanh(o) * tanh_scale
        return o                                                   # (cout, THW) f32

    def get_flow(img1, img2):
        # matches get_flow: map images from [-1,1] to [0,1], then flow net.
        return mlp([(img1 + 1.0) * 0.5, (img2 + 1.0) * 0.5],
                   (p_w1a, p_w1b), p_b1, p_w2, p_b2, tanh_scale=2.0)

    # ---- bilinear warp (dense_warp + grid_sample, align_corners=False, ----
    # ---- zero padding): separable weighted gather, 4 corners factored  ----
    # ---- into one (img @ ox_sum) ⊙ oy_sum product.                     ----
    def warp(img_chw, flow):
        fx = flow[0:1, :]
        fy = flow[1:2, :]
        # dense_warp normalization (matches the torch code) ...
        nx = (gx + fx) / jnp.float32(W - 1) * 2.0 - 1.0
        ny = (gy + fy) / jnp.float32(H - 1) * 2.0 - 1.0
        # ... then grid_sample align_corners=False un-normalization.
        sx = ((nx + 1.0) * W - 1.0) * 0.5
        sy = ((ny + 1.0) * H - 1.0) * 0.5

        x0 = jnp.floor(sx)
        y0 = jnp.floor(sy)
        wx1 = sx - x0
        wx0 = 1.0 - wx1
        wy1 = sy - y0
        wy0 = 1.0 - wy1

        def xsel(xc, wx):                         # column select+weight (W, THW)
            valid = (xc >= 0.0) & (xc <= W - 1.0)
            xi = jnp.clip(xc, 0.0, W - 1.0).astype(jnp.int32)
            wxm = jnp.where(valid, wx, 0.0)       # zero padding
            return jnp.where(col_iota == xi, wxm, 0.0)

        def ysel(yc, wy):                         # row select+weight (H, THW)
            valid = (yc >= 0.0) & (yc <= H - 1.0)
            yi = jnp.clip(yc, 0.0, H - 1.0).astype(jnp.int32)
            wym = jnp.where(valid, wy, 0.0)
            return jnp.where(row_iota == yi, wym, 0.0)

        ox = xsel(x0, wx0) + xsel(x0 + 1.0, wx1)  # sum of the two x-corners
        oy = ysel(y0, wy0) + ysel(y0 + 1.0, wy1)  # sum of the two y-corners

        # single column-gather on the MXU
        cols = jnp.dot(img_chw, ox.astype(jnp.bfloat16),
                       preferred_element_type=jnp.float32)         # (C*H, THW)

        # weighted row-sum per channel: (H, THW) mask reused across channels.
        outs = []
        for c in range(C):
            blk = cols[c * H:(c + 1) * H, :] * oy
            outs.append(jnp.sum(blk, axis=0, keepdims=True))        # (1, THW)
        return jnp.concatenate(outs, axis=0)                        # (C, THW)

    # ---- DIFRINT forward pipeline, fully resident in VMEM per tile ----
    flo1 = get_flow(ftm, ft)                     # (2, THW)
    flo2 = get_flow(ftp, ft)
    warped1 = warp(ftm_img, 0.5 * flo1)          # (C, THW)
    warped2 = warp(ftp_img, 0.5 * flo2)
    fint = mlp([warped1, warped2, flo1, flo2, ftm, ftp],
               (u_w11, u_w12, u_w13, u_w14, u_w15, u_w16),
               u_b1, u_w2, u_b2, tanh_scale=1.0)
    flo3 = get_flow(ft, fint)
    warped3 = warp(ft_img, flo3)
    res = mlp([fint, warped3], (r_w1a, r_w1b), r_b1, r_w2, r_b2,
              tanh_scale=None)

    fint_ref[0] = fint
    fout_ref[0] = fint + res                     # residual refinement


# ----------------------------------------------------------------------------
# wrapper
# ----------------------------------------------------------------------------
def _pick_hw_tile(hw, max_tile=2048):
    """Largest multiple-of-128 divisor of hw not exceeding max_tile (else hw)."""
    if hw <= max_tile:
        return hw
    best = None
    t = 128
    while t <= max_tile:
        if hw % t == 0:
            best = t
        t += 128
    return best if best is not None else hw


def difrint_forward(ft_minus, ft, ft_plus, params):
    B, C, H, W = ft_minus.shape
    HW = H * W
    THW = _pick_hw_tile(HW)
    NT = HW // THW

    pwc, unet, resnet = params["pwc"], params["unet"], params["resnet"]

    def net_args(net):
        w1 = tuple(w.astype(jnp.bfloat16) for w in net["w1"])       # MXU operands bf16
        return w1 + (net["b1"], net["w2"].astype(jnp.bfloat16), net["b2"])

    weight_args = net_args(pwc) + net_args(unet) + net_args(resnet)

    # Grid-invariant target-pixel coordinates (host-side: avoids per-step
    # integer mod/div on the VPU).
    pix = jnp.arange(HW, dtype=jnp.int32)
    gx = (pix % W).astype(jnp.float32).reshape(1, HW)
    gy = (pix // W).astype(jnp.float32).reshape(1, HW)

    # TODO(synk): each frame is still streamed in two layouts ((C*H,W) gather
    # source + (C,HW) flat MLP view) -> 2x image read traffic; deriving the
    # flat view in-kernel needs a sublane->lane relayout, deferred.
    imgs_hw = [x.reshape(B, C * H, W).astype(jnp.bfloat16)
               for x in (ft_minus, ft, ft_plus)]
    imgs_f = [x.reshape(B, C, HW).astype(jnp.bfloat16)
              for x in (ft_minus, ft, ft_plus)]

    img_hw_specs = [pl.BlockSpec((1, C * H, W), lambda b, t: (b, 0, 0))] * 3
    img_f_specs = [pl.BlockSpec((1, C, THW), lambda b, t: (b, 0, t))] * 3
    g_specs = [pl.BlockSpec((1, THW), lambda b, t: (0, t))] * 2
    w_specs = [pl.BlockSpec(w.shape, lambda b, t: (0, 0)) for w in weight_args]
    out_spec = pl.BlockSpec((1, C, THW), lambda b, t: (b, 0, t))

    kernel = functools.partial(_difrint_kernel, H=H, W=W, C=C)

    fint, fout = pl.pallas_call(
        kernel,
        out_shape=(jax.ShapeDtypeStruct((B, C, HW), jnp.float32),
                   jax.ShapeDtypeStruct((B, C, HW), jnp.float32)),
        grid=(B, NT),
        in_specs=img_hw_specs + img_f_specs + g_specs + w_specs,
        out_specs=(out_spec, out_spec),
        compiler_params=pltpu.CompilerParams(
            # Both axes parallel: keeps both v7x TensorCores busy even at B=1.
            dimension_semantics=("parallel", "parallel"),
            # Explicit budget, comfortably under v7x's 64 MiB physical VMEM.
            vmem_limit_bytes=32 * 1024 * 1024),
    )(*imgs_hw, *imgs_f, gx, gy, *weight_args)

    return fint.reshape(B, C, H, W), fout.reshape(B, C, H, W)


# ----------------------------------------------------------------------------
# deterministic parameter init (channels-first, per-input weight blocks)
# ----------------------------------------------------------------------------
def init_net(key, cins, hidden, cout):
    k1, k2, k3, k4 = jax.random.split(key, 4)
    cin = sum(cins)
    w1 = jax.random.normal(k1, (hidden, cin), jnp.float32) * 0.1
    b1 = jax.random.normal(k2, (hidden, 1), jnp.float32) * 0.01
    w2 = jax.random.normal(k3, (cout, hidden), jnp.float32) * 0.1
    b2 = jax.random.normal(k4, (cout, 1), jnp.float32) * 0.01
    # split w1 columns per input; the kernel sums the partial matmuls
    # (implicit channel-concat along the contraction dim).
    w1_blocks = []
    off = 0
    for c in cins:
        w1_blocks.append(w1[:, off:off + c])
        off += c
    return {"w1": tuple(w1_blocks), "b1": b1, "w2": w2, "b2": b2}


if __name__ == "__main__":
    key = jax.random.PRNGKey(0)
    keys = jax.random.split(key, 6)
    B, C, H, W = 2, 3, 16, 16

    ft_minus = jax.random.uniform(keys[0], (B, C, H, W), jnp.float32, -1.0, 1.0)
    ft = jax.random.uniform(keys[1], (B, C, H, W), jnp.float32, -1.0, 1.0)
    ft_plus = jax.random.uniform(keys[2], (B, C, H, W), jnp.float32, -1.0, 1.0)

    params = {
        "pwc": init_net(keys[3], cins=(C, C), hidden=32, cout=2),
        "unet": init_net(keys[4], cins=(C, C, 2, 2, C, C), hidden=64, cout=C),
        "resnet": init_net(keys[5], cins=(C, C), hidden=64, cout=C),
    }

    fint, fout = jax.jit(difrint_forward)(ft_minus, ft, ft_plus, params)
    jax.block_until_ready((fint, fout))
    assert fint.shape == (B, C, H, W) and fout.shape == (B, C, H, W)
    assert fint.dtype == jnp.float32 and fout.dtype == jnp.float32
    assert bool(jnp.all(jnp.isfinite(fint))) and bool(jnp.all(jnp.isfinite(fout)))
    print("KERNEL_OK")
</pallas_src>

<mosaic_0001>
module attributes {stable_mosaic.version = 11 : i64} {
  func.func @_difrint_kernel(%arg0: i32, %arg1: i32, %arg2: memref<1x48x16xbf16, #tpu.memory_space<vmem>>, %arg3: memref<1x48x16xbf16, #tpu.memory_space<vmem>>, %arg4: memref<1x48x16xbf16, #tpu.memory_space<vmem>>, %arg5: memref<1x3x256xbf16, #tpu.memory_space<vmem>>, %arg6: memref<1x3x256xbf16, #tpu.memory_space<vmem>>, %arg7: memref<1x3x256xbf16, #tpu.memory_space<vmem>>, %arg8: memref<1x256xf32, #tpu.memory_space<vmem>>, %arg9: memref<1x256xf32, #tpu.memory_space<vmem>>, %arg10: memref<32x3xbf16, #tpu.memory_space<vmem>>, %arg11: memref<32x3xbf16, #tpu.memory_space<vmem>>, %arg12: memref<32x1xf32, #tpu.memory_space<vmem>>, %arg13: memref<2x32xbf16, #tpu.memory_space<vmem>>, %arg14: memref<2x1xf32, #tpu.memory_space<vmem>>, %arg15: memref<64x3xbf16, #tpu.memory_space<vmem>>, %arg16: memref<64x3xbf16, #tpu.memory_space<vmem>>, %arg17: memref<64x2xbf16, #tpu.memory_space<vmem>>, %arg18: memref<64x2xbf16, #tpu.memory_space<vmem>>, %arg19: memref<64x3xbf16, #tpu.memory_space<vmem>>, %arg20: memref<64x3xbf16, #tpu.memory_space<vmem>>, %arg21: memref<64x1xf32, #tpu.memory_space<vmem>>, %arg22: memref<3x64xbf16, #tpu.memory_space<vmem>>, %arg23: memref<3x1xf32, #tpu.memory_space<vmem>>, %arg24: memref<64x3xbf16, #tpu.memory_space<vmem>>, %arg25: memref<64x3xbf16, #tpu.memory_space<vmem>>, %arg26: memref<64x1xf32, #tpu.memory_space<vmem>>, %arg27: memref<3x64xbf16, #tpu.memory_space<vmem>>, %arg28: memref<3x1xf32, #tpu.memory_space<vmem>>, %arg29: memref<1x3x256xf32, #tpu.memory_space<vmem>>, %arg30: memref<1x3x256xf32, #tpu.memory_space<vmem>>) attributes {dimension_semantics = [#tpu.dimension_semantics<parallel>, #tpu.dimension_semantics<parallel>], iteration_bounds = array<i64: 2, 1>, scalar_prefetch = 0 : i64, scratch_operands = 0 : i64, tpu.core_type = #tpu.core_type<tc>, window_params = [{transform_indices = @transform_0, window_bounds = array<i64: 1, 48, 16>}, {transform_indices = @transform_1, window_bounds = array<i64: 1, 48, 16>}, {transform_indices = @transform_2, window_bounds = array<i64: 1, 48, 16>}, {transform_indices = @transform_3, window_bounds = array<i64: 1, 3, 256>}, {transform_indices = @transform_4, window_bounds = array<i64: 1, 3, 256>}, {transform_indices = @transform_5, window_bounds = array<i64: 1, 3, 256>}, {transform_indices = @transform_6, window_bounds = array<i64: 1, 256>}, {transform_indices = @transform_7, window_bounds = array<i64: 1, 256>}, {pipeline_mode = #tpu.pipeline_mode<synchronous>, transform_indices = @transform_8, window_bounds = array<i64: 32, 3>}, {pipeline_mode = #tpu.pipeline_mode<synchronous>, transform_indices = @transform_9, window_bounds = array<i64: 32, 3>}, {pipeline_mode = #tpu.pipeline_mode<synchronous>, transform_indices = @transform_10, window_bounds = array<i64: 32, 1>}, {pipeline_mode = #tpu.pipeline_mode<synchronous>, transform_indices = @transform_11, window_bounds = array<i64: 2, 32>}, {pipeline_mode = #tpu.pipeline_mode<synchronous>, transform_indices = @transform_12, window_bounds = array<i64: 2, 1>}, {pipeline_mode = #tpu.pipeline_mode<synchronous>, transform_indices = @transform_13, window_bounds = array<i64: 64, 3>}, {pipeline_mode = #tpu.pipeline_mode<synchronous>, transform_indices = @transform_14, window_bounds = array<i64: 64, 3>}, {pipeline_mode = #tpu.pipeline_mode<synchronous>, transform_indices = @transform_15, window_bounds = array<i64: 64, 2>}, {pipeline_mode = #tpu.pipeline_mode<synchronous>, transform_indices = @transform_16, window_bounds = array<i64: 64, 2>}, {pipeline_mode = #tpu.pipeline_mode<synchronous>, transform_indices = @transform_17, window_bounds = array<i64: 64, 3>}, {pipeline_mode = #tpu.pipeline_mode<synchronous>, transform_indices = @transform_18, window_bounds = array<i64: 64, 3>}, {pipeline_mode = #tpu.pipeline_mode<synchronous>, transform_indices = @transform_19, window_bounds = array<i64: 64, 1>}, {pipeline_mode = #tpu.pipeline_mode<synchronous>, transform_indices = @transform_20, window_bounds = array<i64: 3, 64>}, {pipeline_mode = #tpu.pipeline_mode<synchronous>, transform_indices = @transform_21, window_bounds = array<i64: 3, 1>}, {pipeline_mode = #tpu.pipeline_mode<synchronous>, transform_indices = @transform_22, window_bounds = array<i64: 64, 3>}, {pipeline_mode = #tpu.pipeline_mode<synchronous>, transform_indices = @transform_23, window_bounds = array<i64: 64, 3>}, {pipeline_mode = #tpu.pipeline_mode<synchronous>, transform_indices = @transform_24, window_bounds = array<i64: 64, 1>}, {pipeline_mode = #tpu.pipeline_mode<synchronous>, transform_indices = @transform_25, window_bounds = array<i64: 3, 64>}, {pipeline_mode = #tpu.pipeline_mode<synchronous>, transform_indices = @transform_26, window_bounds = array<i64: 3, 1>}, {transform_indices = @transform_27, window_bounds = array<i64: 1, 3, 256>}, {transform_indices = @transform_28, window_bounds = array<i64: 1, 3, 256>}]} {
    %c0 = arith.constant 0 : index
    %c0_0 = arith.constant 0 : index
    %0 = vector.load %arg8[%c0, %c0_0] : memref<1x256xf32, #tpu.memory_space<vmem>>, vector<1x256xf32>
    %c0_1 = arith.constant 0 : index
    %c0_2 = arith.constant 0 : index
    %1 = vector.load %arg9[%c0_1, %c0_2] : memref<1x256xf32, #tpu.memory_space<vmem>>, vector<1x256xf32>
    %c0_3 = arith.constant 0 : index
    %c0_4 = arith.constant 0 : index
    %c0_5 = arith.constant 0 : index
    %2 = vector.load %arg5[%c0_3, %c0_4, %c0_5] : memref<1x3x256xbf16, #tpu.memory_space<vmem>>, vector<1x3x256xbf16>
    %3 = vector.shape_cast %2 : vector<1x3x256xbf16> to vector<3x256xbf16>
    %c0_6 = arith.constant 0 : index
    %c0_7 = arith.constant 0 : index
    %c0_8 = arith.constant 0 : index
    %4 = vector.load %arg6[%c0_6, %c0_7, %c0_8] : memref<1x3x256xbf16, #tpu.memory_space<vmem>>, vector<1x3x256xbf16>
    %5 = vector.shape_cast %4 : vector<1x3x256xbf16> to vector<3x256xbf16>
    %c0_9 = arith.constant 0 : index
    %c0_10 = arith.constant 0 : index
    %c0_11 = arith.constant 0 : index
    %6 = vector.load %arg7[%c0_9, %c0_10, %c0_11] : memref<1x3x256xbf16, #tpu.memory_space<vmem>>, vector<1x3x256xbf16>
    %7 = vector.shape_cast %6 : vector<1x3x256xbf16> to vector<3x256xbf16>
    %c0_12 = arith.constant 0 : index
    %c0_13 = arith.constant 0 : index
    %c0_14 = arith.constant 0 : index
    %8 = vector.load %arg2[%c0_12, %c0_13, %c0_14] : memref<1x48x16xbf16, #tpu.memory_space<vmem>>, vector<1x48x16xbf16>
    %9 = vector.shape_cast %8 : vector<1x48x16xbf16> to vector<48x16xbf16>
    %c0_15 = arith.constant 0 : index
    %c0_16 = arith.constant 0 : index
    %c0_17 = arith.constant 0 : index
    %10 = vector.load %arg3[%c0_15, %c0_16, %c0_17] : memref<1x48x16xbf16, #tpu.memory_space<vmem>>, vector<1x48x16xbf16>
    %11 = vector.shape_cast %10 : vector<1x48x16xbf16> to vector<48x16xbf16>
    %c0_18 = arith.constant 0 : index
    %c0_19 = arith.constant 0 : index
    %c0_20 = arith.constant 0 : index
    %12 = vector.load %arg4[%c0_18, %c0_19, %c0_20] : memref<1x48x16xbf16, #tpu.memory_space<vmem>>, vector<1x48x16xbf16>
    %13 = vector.shape_cast %12 : vector<1x48x16xbf16> to vector<48x16xbf16>
    %14 = tpu.iota {dimensions = array<i32: 0>} : vector<16x256xi32>
    %15 = tpu.iota {dimensions = array<i32: 0>} : vector<16x256xi32>
    %cst = arith.constant 1.000000e+00 : bf16
    %16 = vector.broadcast %cst : bf16 to vector<3x256xbf16>
    %17 = arith.addf %3, %16 : vector<3x256xbf16>
    %cst_21 = arith.constant 5.000000e-01 : bf16
    %18 = vector.broadcast %cst_21 : bf16 to vector<3x256xbf16>
    %19 = arith.mulf %17, %18 : vector<3x256xbf16>
    %cst_22 = arith.constant 1.000000e+00 : bf16
    %20 = vector.broadcast %cst_22 : bf16 to vector<3x256xbf16>
    %21 = arith.addf %5, %20 : vector<3x256xbf16>
    %cst_23 = arith.constant 5.000000e-01 : bf16
    %22 = vector.broadcast %cst_23 : bf16 to vector<3x256xbf16>
    %23 = arith.mulf %21, %22 : vector<3x256xbf16>
    %c0_24 = arith.constant 0 : index
    %c0_25 = arith.constant 0 : index
    %24 = vector.load %arg10[%c0_24, %c0_25] : memref<32x3xbf16, #tpu.memory_space<vmem>>, vector<32x3xbf16>
    %cst_26 = arith.constant dense<0.000000e+00> : vector<32x256xf32>
    %25 = tpu.matmul %24, %19, %cst_26 {dimension_numbers = #tpu.dot_dimension_numbers<[1], [0], [0], [1], [0, 0, 1, 1], [], []>} : vector<32x3xbf16>, vector<3x256xbf16>, vector<32x256xf32> -> vector<32x256xf32>
    %c0_27 = arith.constant 0 : index
    %c0_28 = arith.constant 0 : index
    %26 = vector.load %arg11[%c0_27, %c0_28] : memref<32x3xbf16, #tpu.memory_space<vmem>>, vector<32x3xbf16>
    %cst_29 = arith.constant dense<0.000000e+00> : vector<32x256xf32>
    %27 = tpu.matmul %26, %23, %cst_29 {dimension_numbers = #tpu.dot_dimension_numbers<[1], [0], [0], [1], [0, 0, 1, 1], [], []>} : vector<32x3xbf16>, vector<3x256xbf16>, vector<32x256xf32> -> vector<32x256xf32>
    %28 = arith.addf %25, %27 : vector<32x256xf32>
    %c0_30 = arith.constant 0 : index
    %c0_31 = arith.constant 0 : index
    %29 = vector.load %arg12[%c0_30, %c0_31] : memref<32x1xf32, #tpu.memory_space<vmem>>, vector<32x1xf32>
    %30 = vector.broadcast %29 : vector<32x1xf32> to vector<32x256xf32>
    %31 = arith.addf %28, %30 : vector<32x256xf32>
    %cst_32 = arith.constant 0.000000e+00 : f32
    %32 = vector.broadcast %cst_32 : f32 to vector<32x256xf32>
    %33 = arith.maximumf %31, %32 : vector<32x256xf32>
    %c0_33 = arith.constant 0 : index
    %c0_34 = arith.constant 0 : index
    %34 = vector.load %arg13[%c0_33, %c0_34] : memref<2x32xbf16, #tpu.memory_space<vmem>>, vector<2x32xbf16>
    %35 = arith.truncf %33 : vector<32x256xf32> to vector<32x256xbf16>
    %cst_35 = arith.constant dense<0.000000e+00> : vector<2x256xf32>
    %36 = tpu.matmul %34, %35, %cst_35 {dimension_numbers = #tpu.dot_dimension_numbers<[1], [0], [0], [1], [0, 0, 1, 1], [], []>} : vector<2x32xbf16>, vector<32x256xbf16>, vector<2x256xf32> -> vector<2x256xf32>
    %c0_36 = arith.constant 0 : index
    %c0_37 = arith.constant 0 : index
    %37 = vector.load %arg14[%c0_36, %c0_37] : memref<2x1xf32, #tpu.memory_space<vmem>>, vector<2x1xf32>
    %38 = vector.broadcast %37 : vector<2x1xf32> to vector<2x256xf32>
    %39 = arith.addf %36, %38 : vector<2x256xf32>
    %40 = math.tanh %39 : vector<2x256xf32>
    %cst_38 = arith.constant 2.000000e+00 : f32
    %41 = vector.broadcast %cst_38 : f32 to vector<2x256xf32>
    %42 = arith.mulf %40, %41 : vector<2x256xf32>
    %cst_39 = arith.constant 1.000000e+00 : bf16
    %43 = vector.broadcast %cst_39 : bf16 to vector<3x256xbf16>
    %44 = arith.addf %7, %43 : vector<3x256xbf16>
    %cst_40 = arith.constant 5.000000e-01 : bf16
    %45 = vector.broadcast %cst_40 : bf16 to vector<3x256xbf16>
    %46 = arith.mulf %44, %45 : vector<3x256xbf16>
    %cst_41 = arith.constant 1.000000e+00 : bf16
    %47 = vector.broadcast %cst_41 : bf16 to vector<3x256xbf16>
    %48 = arith.addf %5, %47 : vector<3x256xbf16>
    %cst_42 = arith.constant 5.000000e-01 : bf16
    %49 = vector.broadcast %cst_42 : bf16 to vector<3x256xbf16>
    %50 = arith.mulf %48, %49 : vector<3x256xbf16>
    %c0_43 = arith.constant 0 : index
    %c0_44 = arith.constant 0 : index
    %51 = vector.load %arg10[%c0_43, %c0_44] : memref<32x3xbf16, #tpu.memory_space<vmem>>, vector<32x3xbf16>
    %cst_45 = arith.constant dense<0.000000e+00> : vector<32x256xf32>
    %52 = tpu.matmul %51, %46, %cst_45 {dimension_numbers = #tpu.dot_dimension_numbers<[1], [0], [0], [1], [0, 0, 1, 1], [], []>} : vector<32x3xbf16>, vector<3x256xbf16>, vector<32x256xf32> -> vector<32x256xf32>
    %c0_46 = arith.constant 0 : index
    %c0_47 = arith.constant 0 : index
    %53 = vector.load %arg11[%c0_46, %c0_47] : memref<32x3xbf16, #tpu.memory_space<vmem>>, vector<32x3xbf16>
    %cst_48 = arith.constant dense<0.000000e+00> : vector<32x256xf32>
    %54 = tpu.matmul %53, %50, %cst_48 {dimension_numbers = #tpu.dot_dimension_numbers<[1], [0], [0], [1], [0, 0, 1, 1], [], []>} : vector<32x3xbf16>, vector<3x256xbf16>, vector<32x256xf32> -> vector<32x256xf32>
    %55 = arith.addf %52, %54 : vector<32x256xf32>
    %c0_49 = arith.constant 0 : index
    %c0_50 = arith.constant 0 : index
    %56 = vector.load %arg12[%c0_49, %c0_50] : memref<32x1xf32, #tpu.memory_space<vmem>>, vector<32x1xf32>
    %57 = vector.broadcast %56 : vector<32x1xf32> to vector<32x256xf32>
    %58 = arith.addf %55, %57 : vector<32x256xf32>
    %cst_51 = arith.constant 0.000000e+00 : f32
    %59 = vector.broadcast %cst_51 : f32 to vector<32x256xf32>
    %60 = arith.maximumf %58, %59 : vector<32x256xf32>
    %c0_52 = arith.constant 0 : index
    %c0_53 = arith.constant 0 : index
    %61 = vector.load %arg13[%c0_52, %c0_53] : memref<2x32xbf16, #tpu.memory_space<vmem>>, vector<2x32xbf16>
    %62 = arith.truncf %60 : vector<32x256xf32> to vector<32x256xbf16>
    %cst_54 = arith.constant dense<0.000000e+00> : vector<2x256xf32>
    %63 = tpu.matmul %61, %62, %cst_54 {dimension_numbers = #tpu.dot_dimension_numbers<[1], [0], [0], [1], [0, 0, 1, 1], [], []>} : vector<2x32xbf16>, vector<32x256xbf16>, vector<2x256xf32> -> vector<2x256xf32>
    %c0_55 = arith.constant 0 : index
    %c0_56 = arith.constant 0 : index
    %64 = vector.load %arg14[%c0_55, %c0_56] : memref<2x1xf32, #tpu.memory_space<vmem>>, vector<2x1xf32>
    %65 = vector.broadcast %64 : vector<2x1xf32> to vector<2x256xf32>
    %66 = arith.addf %63, %65 : vector<2x256xf32>
    %67 = math.tanh %66 : vector<2x256xf32>
    %cst_57 = arith.constant 2.000000e+00 : f32
    %68 = vector.broadcast %cst_57 : f32 to vector<2x256xf32>
    %69 = arith.mulf %67, %68 : vector<2x256xf32>
    %cst_58 = arith.constant 5.000000e-01 : f32
    %70 = vector.broadcast %cst_58 : f32 to vector<2x256xf32>
    %71 = arith.mulf %70, %42 : vector<2x256xf32>
    %72 = vector.extract_strided_slice %71 {offsets = [0, 0], sizes = [1, 256], strides = [1, 1]} : vector<2x256xf32> to vector<1x256xf32>
    %73 = vector.extract_strided_slice %71 {offsets = [1, 0], sizes = [1, 256], strides = [1, 1]} : vector<2x256xf32> to vector<1x256xf32>
    %74 = arith.addf %0, %72 : vector<1x256xf32>
    %cst_59 = arith.constant 1.500000e+01 : f32
    %75 = vector.broadcast %cst_59 : f32 to vector<1x256xf32>
    %76 = arith.divf %74, %75 : vector<1x256xf32>
    %cst_60 = arith.constant 2.000000e+00 : f32
    %77 = vector.broadcast %cst_60 : f32 to vector<1x256xf32>
    %78 = arith.mulf %76, %77 : vector<1x256xf32>
    %cst_61 = arith.constant 1.000000e+00 : f32
    %79 = vector.broadcast %cst_61 : f32 to vector<1x256xf32>
    %80 = arith.subf %78, %79 : vector<1x256xf32>
    %81 = arith.addf %1, %73 : vector<1x256xf32>
    %cst_62 = arith.constant 1.500000e+01 : f32
    %82 = vector.broadcast %cst_62 : f32 to vector<1x256xf32>
    %83 = arith.divf %81, %82 : vector<1x256xf32>
    %cst_63 = arith.constant 2.000000e+00 : f32
    %84 = vector.broadcast %cst_63 : f32 to vector<1x256xf32>
    %85 = arith.mulf %83, %84 : vector<1x256xf32>
    %cst_64 = arith.constant 1.000000e+00 : f32
    %86 = vector.broadcast %cst_64 : f32 to vector<1x256xf32>
    %87 = arith.subf %85, %86 : vector<1x256xf32>
    %cst_65 = arith.constant 1.000000e+00 : f32
    %88 = vector.broadcast %cst_65 : f32 to vector<1x256xf32>
    %89 = arith.addf %80, %88 : vector<1x256xf32>
    %cst_66 = arith.constant 1.600000e+01 : f32
    %90 = vector.broadcast %cst_66 : f32 to vector<1x256xf32>
    %91 = arith.mulf %89, %90 : vector<1x256xf32>
    %cst_67 = arith.constant 1.000000e+00 : f32
    %92 = vector.broadcast %cst_67 : f32 to vector<1x256xf32>
    %93 = arith.subf %91, %92 : vector<1x256xf32>
    %cst_68 = arith.constant 5.000000e-01 : f32
    %94 = vector.broadcast %cst_68 : f32 to vector<1x256xf32>
    %95 = arith.mulf %93, %94 : vector<1x256xf32>
    %cst_69 = arith.constant 1.000000e+00 : f32
    %96 = vector.broadcast %cst_69 : f32 to vector<1x256xf32>
    %97 = arith.addf %87, %96 : vector<1x256xf32>
    %cst_70 = arith.constant 1.600000e+01 : f32
    %98 = vector.broadcast %cst_70 : f32 to vector<1x256xf32>
    %99 = arith.mulf %97, %98 : vector<1x256xf32>
    %cst_71 = arith.constant 1.000000e+00 : f32
    %100 = vector.broadcast %cst_71 : f32 to vector<1x256xf32>
    %101 = arith.subf %99, %100 : vector<1x256xf32>
    %cst_72 = arith.constant 5.000000e-01 : f32
    %102 = vector.broadcast %cst_72 : f32 to vector<1x256xf32>
    %103 = arith.mulf %101, %102 : vector<1x256xf32>
    %104 = math.floor %95 : vector<1x256xf32>
    %105 = math.floor %103 : vector<1x256xf32>
    %106 = arith.subf %95, %104 : vector<1x256xf32>
    %cst_73 = arith.constant 1.000000e+00 : f32
    %107 = vector.broadcast %cst_73 : f32 to vector<1x256xf32>
    %108 = arith.subf %107, %106 : vector<1x256xf32>
    %109 = arith.subf %103, %105 : vector<1x256xf32>
    %cst_74 = arith.constant 1.000000e+00 : f32
    %110 = vector.broadcast %cst_74 : f32 to vector<1x256xf32>
    %111 = arith.subf %110, %109 : vector<1x256xf32>
    %cst_75 = arith.constant 0.000000e+00 : f32
    %112 = vector.broadcast %cst_75 : f32 to vector<1x256xf32>
    %113 = arith.cmpf oge, %104, %112 : vector<1x256xf32>
    %cst_76 = arith.constant 1.500000e+01 : f32
    %114 = vector.broadcast %cst_76 : f32 to vector<1x256xf32>
    %115 = arith.cmpf ole, %104, %114 : vector<1x256xf32>
    %116 = arith.andi %113, %115 : vector<1x256xi1>
    %cst_77 = arith.constant 0.000000e+00 : f32
    %cst_78 = arith.constant 1.500000e+01 : f32
    %117 = vector.broadcast %cst_77 : f32 to vector<1x256xf32>
    %118 = arith.maximumf %117, %104 : vector<1x256xf32>
    %119 = vector.broadcast %cst_78 : f32 to vector<1x256xf32>
    %120 = arith.minimumf %119, %118 : vector<1x256xf32>
    %121 = arith.fptosi %120 : vector<1x256xf32> to vector<1x256xi32>
    %cst_79 = arith.constant 0.000000e+00 : f32
    %122 = vector.broadcast %cst_79 : f32 to vector<1x256xf32>
    %123 = arith.select %116, %108, %122 : vector<1x256xi1>, vector<1x256xf32>
    %124 = vector.broadcast %121 : vector<1x256xi32> to vector<16x256xi32>
    %125 = arith.cmpi eq, %14, %124 : vector<16x256xi32>
    %cst_80 = arith.constant 0.000000e+00 : f32
    %126 = vector.shape_cast %123 : vector<1x256xf32> to vector<1x256xf32>
    %127 = vector.broadcast %126 : vector<1x256xf32> to vector<16x256xf32>
    %128 = vector.broadcast %cst_80 : f32 to vector<16x256xf32>
    %129 = arith.select %125, %127, %128 : vector<16x256xi1>, vector<16x256xf32>
    %cst_81 = arith.constant 1.000000e+00 : f32
    %130 = vector.broadcast %cst_81 : f32 to vector<1x256xf32>
    %131 = arith.addf %104, %130 : vector<1x256xf32>
    %cst_82 = arith.constant 0.000000e+00 : f32
    %132 = vector.broadcast %cst_82 : f32 to vector<1x256xf32>
    %133 = arith.cmpf oge, %131, %132 : vector<1x256xf32>
    %cst_83 = arith.constant 1.500000e+01 : f32
    %134 = vector.broadcast %cst_83 : f32 to vector<1x256xf32>
    %135 = arith.cmpf ole, %131, %134 : vector<1x256xf32>
    %136 = arith.andi %133, %135 : vector<1x256xi1>
    %cst_84 = arith.constant 0.000000e+00 : f32
    %cst_85 = arith.constant 1.500000e+01 : f32
    %137 = vector.broadcast %cst_84 : f32 to vector<1x256xf32>
    %138 = arith.maximumf %137, %131 : vector<1x256xf32>
    %139 = vector.broadcast %cst_85 : f32 to vector<1x256xf32>
    %140 = arith.minimumf %139, %138 : vector<1x256xf32>
    %141 = arith.fptosi %140 : vector<1x256xf32> to vector<1x256xi32>
    %cst_86 = arith.constant 0.000000e+00 : f32
    %142 = vector.broadcast %cst_86 : f32 to vector<1x256xf32>
    %143 = arith.select %136, %106, %142 : vector<1x256xi1>, vector<1x256xf32>
    %144 = vector.broadcast %141 : vector<1x256xi32> to vector<16x256xi32>
    %145 = arith.cmpi eq, %14, %144 : vector<16x256xi32>
    %cst_87 = arith.constant 0.000000e+00 : f32
    %146 = vector.shape_cast %143 : vector<1x256xf32> to vector<1x256xf32>
    %147 = vector.broadcast %146 : vector<1x256xf32> to vector<16x256xf32>
    %148 = vector.broadcast %cst_87 : f32 to vector<16x256xf32>
    %149 = arith.select %145, %147, %148 : vector<16x256xi1>, vector<16x256xf32>
    %150 = arith.addf %129, %149 : vector<16x256xf32>
    %cst_88 = arith.constant 0.000000e+00 : f32
    %151 = vector.broadcast %cst_88 : f32 to vector<1x256xf32>
    %152 = arith.cmpf oge, %105, %151 : vector<1x256xf32>
    %cst_89 = arith.constant 1.500000e+01 : f32
    %153 = vector.broadcast %cst_89 : f32 to vector<1x256xf32>
    %154 = arith.cmpf ole, %105, %153 : vector<1x256xf32>
    %155 = arith.andi %152, %154 : vector<1x256xi1>
    %cst_90 = arith.constant 0.000000e+00 : f32
    %cst_91 = arith.constant 1.500000e+01 : f32
    %156 = vector.broadcast %cst_90 : f32 to vector<1x256xf32>
    %157 = arith.maximumf %156, %105 : vector<1x256xf32>
    %158 = vector.broadcast %cst_91 : f32 to vector<1x256xf32>
    %159 = arith.minimumf %158, %157 : vector<1x256xf32>
    %160 = arith.fptosi %159 : vector<1x256xf32> to vector<1x256xi32>
    %cst_92 = arith.constant 0.000000e+00 : f32
    %161 = vector.broadcast %cst_92 : f32 to vector<1x256xf32>
    %162 = arith.select %155, %111, %161 : vector<1x256xi1>, vector<1x256xf32>
    %163 = vector.broadcast %160 : vector<1x256xi32> to vector<16x256xi32>
    %164 = arith.cmpi eq, %15, %163 : vector<16x256xi32>
    %cst_93 = arith.constant 0.000000e+00 : f32
    %165 = vector.shape_cast %162 : vector<1x256xf32> to vector<1x256xf32>
    %166 = vector.broadcast %165 : vector<1x256xf32> to vector<16x256xf32>
    %167 = vector.broadcast %cst_93 : f32 to vector<16x256xf32>
    %168 = arith.select %164, %166, %167 : vector<16x256xi1>, vector<16x256xf32>
    %cst_94 = arith.constant 1.000000e+00 : f32
    %169 = vector.broadcast %cst_94 : f32 to vector<1x256xf32>
    %170 = arith.addf %105, %169 : vector<1x256xf32>
    %cst_95 = arith.constant 0.000000e+00 : f32
    %171 = vector.broadcast %cst_95 : f32 to vector<1x256xf32>
    %172 = arith.cmpf oge, %170, %171 : vector<1x256xf32>
    %cst_96 = arith.constant 1.500000e+01 : f32
    %173 = vector.broadcast %cst_96 : f32 to vector<1x256xf32>
    %174 = arith.cmpf ole, %170, %173 : vector<1x256xf32>
    %175 = arith.andi %172, %174 : vector<1x256xi1>
    %cst_97 = arith.constant 0.000000e+00 : f32
    %cst_98 = arith.constant 1.500000e+01 : f32
    %176 = vector.broadcast %cst_97 : f32 to vector<1x256xf32>
    %177 = arith.maximumf %176, %170 : vector<1x256xf32>
    %178 = vector.broadcast %cst_98 : f32 to vector<1x256xf32>
    %179 = arith.minimumf %178, %177 : vector<1x256xf32>
    %180 = arith.fptosi %179 : vector<1x256xf32> to vector<1x256xi32>
    %cst_99 = arith.constant 0.000000e+00 : f32
    %181 = vector.broadcast %cst_99 : f32 to vector<1x256xf32>
    %182 = arith.select %175, %109, %181 : vector<1x256xi1>, vector<1x256xf32>
    %183 = vector.broadcast %180 : vector<1x256xi32> to vector<16x256xi32>
    %184 = arith.cmpi eq, %15, %183 : vector<16x256xi32>
    %cst_100 = arith.constant 0.000000e+00 : f32
    %185 = vector.shape_cast %182 : vector<1x256xf32> to vector<1x256xf32>
    %186 = vector.broadcast %185 : vector<1x256xf32> to vector<16x256xf32>
    %187 = vector.broadcast %cst_100 : f32 to vector<16x256xf32>
    %188 = arith.select %184, %186, %187 : vector<16x256xi1>, vector<16x256xf32>
    %189 = arith.addf %168, %188 : vector<16x256xf32>
    %190 = arith.truncf %150 : vector<16x256xf32> to vector<16x256xbf16>
    %cst_101 = arith.constant dense<0.000000e+00> : vector<48x256xf32>
    %191 = tpu.matmul %9, %190, %cst_101 {dimension_numbers = #tpu.dot_dimension_numbers<[1], [0], [0], [1], [0, 0, 1, 1], [], []>} : vector<48x16xbf16>, vector<16x256xbf16>, vector<48x256xf32> -> vector<48x256xf32>
    %192 = vector.extract_strided_slice %191 {offsets = [0, 0], sizes = [16, 256], strides = [1, 1]} : vector<48x256xf32> to vector<16x256xf32>
    %193 = arith.mulf %192, %189 : vector<16x256xf32>
    %cst_102 = arith.constant dense<0.000000e+00> : vector<256xf32>
    %194 = vector.multi_reduction <add>, %193, %cst_102 [0] : vector<16x256xf32> to vector<256xf32>
    %195 = vector.shape_cast %194 : vector<256xf32> to vector<1x256xf32>
    %196 = vector.extract_strided_slice %191 {offsets = [16, 0], sizes = [16, 256], strides = [1, 1]} : vector<48x256xf32> to vector<16x256xf32>
    %197 = arith.mulf %196, %189 : vector<16x256xf32>
    %cst_103 = arith.constant dense<0.000000e+00> : vector<256xf32>
    %198 = vector.multi_reduction <add>, %197, %cst_103 [0] : vector<16x256xf32> to vector<256xf32>
    %199 = vector.shape_cast %198 : vector<256xf32> to vector<1x256xf32>
    %200 = vector.extract_strided_slice %191 {offsets = [32, 0], sizes = [16, 256], strides = [1, 1]} : vector<48x256xf32> to vector<16x256xf32>
    %201 = arith.mulf %200, %189 : vector<16x256xf32>
    %cst_104 = arith.constant dense<0.000000e+00> : vector<256xf32>
    %202 = vector.multi_reduction <add>, %201, %cst_104 [0] : vector<16x256xf32> to vector<256xf32>
    %203 = vector.shape_cast %202 : vector<256xf32> to vector<1x256xf32>
    %204 = tpu.concatenate %195, %199, %203 in 0 : vector<1x256xf32>, vector<1x256xf32>, vector<1x256xf32> -> vector<3x256xf32>
    %cst_105 = arith.constant 5.000000e-01 : f32
    %205 = vector.broadcast %cst_105 : f32 to vector<2x256xf32>
    %206 = arith.mulf %205, %69 : vector<2x256xf32>
    %207 = vector.extract_strided_slice %206 {offsets = [0, 0], sizes = [1, 256], strides = [1, 1]} : vector<2x256xf32> to vector<1x256xf32>
    %208 = vector.extract_strided_slice %206 {offsets = [1, 0], sizes = [1, 256], strides = [1, 1]} : vector<2x256xf32> to vector<1x256xf32>
    %209 = arith.addf %0, %207 : vector<1x256xf32>
    %cst_106 = arith.constant 1.500000e+01 : f32
    %210 = vector.broadcast %cst_106 : f32 to vector<1x256xf32>
    %211 = arith.divf %209, %210 : vector<1x256xf32>
    %cst_107 = arith.constant 2.000000e+00 : f32
    %212 = vector.broadcast %cst_107 : f32 to vector<1x256xf32>
    %213 = arith.mulf %211, %212 : vector<1x256xf32>
    %cst_108 = arith.constant 1.000000e+00 : f32
    %214 = vector.broadcast %cst_108 : f32 to vector<1x256xf32>
    %215 = arith.subf %213, %214 : vector<1x256xf32>
    %216 = arith.addf %1, %208 : vector<1x256xf32>
    %cst_109 = arith.constant 1.500000e+01 : f32
    %217 = vector.broadcast %cst_109 : f32 to vector<1x256xf32>
    %218 = arith.divf %216, %217 : vector<1x256xf32>
    %cst_110 = arith.constant 2.000000e+00 : f32
    %219 = vector.broadcast %cst_110 : f32 to vector<1x256xf32>
    %220 = arith.mulf %218, %219 : vector<1x256xf32>
    %cst_111 = arith.constant 1.000000e+00 : f32
    %221 = vector.broadcast %cst_111 : f32 to vector<1x256xf32>
    %222 = arith.subf %220, %221 : vector<1x256xf32>
    %cst_112 = arith.constant 1.000000e+00 : f32
    %223 = vector.broadcast %cst_112 : f32 to vector<1x256xf32>
    %224 = arith.addf %215, %223 : vector<1x256xf32>
    %cst_113 = arith.constant 1.600000e+01 : f32
    %225 = vector.broadcast %cst_113 : f32 to vector<1x256xf32>
    %226 = arith.mulf %224, %225 : vector<1x256xf32>
    %cst_114 = arith.constant 1.000000e+00 : f32
    %227 = vector.broadcast %cst_114 : f32 to vector<1x256xf32>
    %228 = arith.subf %226, %227 : vector<1x256xf32>
    %cst_115 = arith.constant 5.000000e-01 : f32
    %229 = vector.broadcast %cst_115 : f32 to vector<1x256xf32>
    %230 = arith.mulf %228, %229 : vector<1x256xf32>
    %cst_116 = arith.constant 1.000000e+00 : f32
    %231 = vector.broadcast %cst_116 : f32 to vector<1x256xf32>
    %232 = arith.addf %222, %231 : vector<1x256xf32>
    %cst_117 = arith.constant 1.600000e+01 : f32
    %233 = vector.broadcast %cst_117 : f32 to vector<1x256xf32>
    %234 = arith.mulf %232, %233 : vector<1x256xf32>
    %cst_118 = arith.constant 1.000000e+00 : f32
    %235 = vector.broadcast %cst_118 : f32 to vector<1x256xf32>
    %236 = arith.subf %234, %235 : vector<1x256xf32>
    %cst_119 = arith.constant 5.000000e-01 : f32
    %237 = vector.broadcast %cst_119 : f32 to vector<1x256xf32>
    %238 = arith.mulf %236, %237 : vector<1x256xf32>
    %239 = math.floor %230 : vector<1x256xf32>
    %240 = math.floor %238 : vector<1x256xf32>
    %241 = arith.subf %230, %239 : vector<1x256xf32>
    %cst_120 = arith.constant 1.000000e+00 : f32
    %242 = vector.broadcast %cst_120 : f32 to vector<1x256xf32>
    %243 = arith.subf %242, %241 : vector<1x256xf32>
    %244 = arith.subf %238, %240 : vector<1x256xf32>
    %cst_121 = arith.constant 1.000000e+00 : f32
    %245 = vector.broadcast %cst_121 : f32 to vector<1x256xf32>
    %246 = arith.subf %245, %244 : vector<1x256xf32>
    %cst_122 = arith.constant 0.000000e+00 : f32
    %247 = vector.broadcast %cst_122 : f32 to vector<1x256xf32>
    %248 = arith.cmpf oge, %239, %247 : vector<1x256xf32>
    %cst_123 = arith.constant 1.500000e+01 : f32
    %249 = vector.broadcast %cst_123 : f32 to vector<1x256xf32>
    %250 = arith.cmpf ole, %239, %249 : vector<1x256xf32>
    %251 = arith.andi %248, %250 : vector<1x256xi1>
    %cst_124 = arith.constant 0.000000e+00 : f32
    %cst_125 = arith.constant 1.500000e+01 : f32
    %252 = vector.broadcast %cst_124 : f32 to vector<1x256xf32>
    %253 = arith.maximumf %252, %239 : vector<1x256xf32>
    %254 = vector.broadcast %cst_125 : f32 to vector<1x256xf32>
    %255 = arith.minimumf %254, %253 : vector<1x256xf32>
    %256 = arith.fptosi %255 : vector<1x256xf32> to vector<1x256xi32>
    %cst_126 = arith.constant 0.000000e+00 : f32
    %257 = vector.broadcast %cst_126 : f32 to vector<1x256xf32>
    %258 = arith.select %251, %243, %257 : vector<1x256xi1>, vector<1x256xf32>
    %259 = vector.broadcast %256 : vector<1x256xi32> to vector<16x256xi32>
    %260 = arith.cmpi eq, %14, %259 : vector<16x256xi32>
    %cst_127 = arith.constant 0.000000e+00 : f32
    %261 = vector.shape_cast %258 : vector<1x256xf32> to vector<1x256xf32>
    %262 = vector.broadcast %261 : vector<1x256xf32> to vector<16x256xf32>
    %263 = vector.broadcast %cst_127 : f32 to vector<16x256xf32>
    %264 = arith.select %260, %262, %263 : vector<16x256xi1>, vector<16x256xf32>
    %cst_128 = arith.constant 1.000000e+00 : f32
    %265 = vector.broadcast %cst_128 : f32 to vector<1x256xf32>
    %266 = arith.addf %239, %265 : vector<1x256xf32>
    %cst_129 = arith.constant 0.000000e+00 : f32
    %267 = vector.broadcast %cst_129 : f32 to vector<1x256xf32>
    %268 = arith.cmpf oge, %266, %267 : vector<1x256xf32>
    %cst_130 = arith.constant 1.500000e+01 : f32
    %269 = vector.broadcast %cst_130 : f32 to vector<1x256xf32>
    %270 = arith.cmpf ole, %266, %269 : vector<1x256xf32>
    %271 = arith.andi %268, %270 : vector<1x256xi1>
    %cst_131 = arith.constant 0.000000e+00 : f32
    %cst_132 = arith.constant 1.500000e+01 : f32
    %272 = vector.broadcast %cst_131 : f32 to vector<1x256xf32>
    %273 = arith.maximumf %272, %266 : vector<1x256xf32>
    %274 = vector.broadcast %cst_132 : f32 to vector<1x256xf32>
    %275 = arith.minimumf %274, %273 : vector<1x256xf32>
    %276 = arith.fptosi %275 : vector<1x256xf32> to vector<1x256xi32>
    %cst_133 = arith.constant 0.000000e+00 : f32
    %277 = vector.broadcast %cst_133 : f32 to vector<1x256xf32>
    %278 = arith.select %271, %241, %277 : vector<1x256xi1>, vector<1x256xf32>
    %279 = vector.broadcast %276 : vector<1x256xi32> to vector<16x256xi32>
    %280 = arith.cmpi eq, %14, %279 : vector<16x256xi32>
    %cst_134 = arith.constant 0.000000e+00 : f32
    %281 = vector.shape_cast %278 : vector<1x256xf32> to vector<1x256xf32>
    %282 = vector.broadcast %281 : vector<1x256xf32> to vector<16x256xf32>
    %283 = vector.broadcast %cst_134 : f32 to vector<16x256xf32>
    %284 = arith.select %280, %282, %283 : vector<16x256xi1>, vector<16x256xf32>
    %285 = arith.addf %264, %284 : vector<16x256xf32>
    %cst_135 = arith.constant 0.000000e+00 : f32
    %286 = vector.broadcast %cst_135 : f32 to vector<1x256xf32>
    %287 = arith.cmpf oge, %240, %286 : vector<1x256xf32>
    %cst_136 = arith.constant 1.500000e+01 : f32
    %288 = vector.broadcast %cst_136 : f32 to vector<1x256xf32>
    %289 = arith.cmpf ole, %240, %288 : vector<1x256xf32>
    %290 = arith.andi %287, %289 : vector<1x256xi1>
    %cst_137 = arith.constant 0.000000e+00 : f32
    %cst_138 = arith.constant 1.500000e+01 : f32
    %291 = vector.broadcast %cst_137 : f32 to vector<1x256xf32>
    %292 = arith.maximumf %291, %240 : vector<1x256xf32>
    %293 = vector.broadcast %cst_138 : f32 to vector<1x256xf32>
    %294 = arith.minimumf %293, %292 : vector<1x256xf32>
    %295 = arith.fptosi %294 : vector<1x256xf32> to vector<1x256xi32>
    %cst_139 = arith.constant 0.000000e+00 : f32
    %296 = vector.broadcast %cst_139 : f32 to vector<1x256xf32>
    %297 = arith.select %290, %246, %296 : vector<1x256xi1>, vector<1x256xf32>
    %298 = vector.broadcast %295 : vector<1x256xi32> to vector<16x256xi32>
    %299 = arith.cmpi eq, %15, %298 : vector<16x256xi32>
    %cst_140 = arith.constant 0.000000e+00 : f32
    %300 = vector.shape_cast %297 : vector<1x256xf32> to vector<1x256xf32>
    %301 = vector.broadcast %300 : vector<1x256xf32> to vector<16x256xf32>
    %302 = vector.broadcast %cst_140 : f32 to vector<16x256xf32>
    %303 = arith.select %299, %301, %302 : vector<16x256xi1>, vector<16x256xf32>
    %cst_141 = arith.constant 1.000000e+00 : f32
    %304 = vector.broadcast %cst_141 : f32 to vector<1x256xf32>
    %305 = arith.addf %240, %304 : vector<1x256xf32>
    %cst_142 = arith.constant 0.000000e+00 : f32
    %306 = vector.broadcast %cst_142 : f32 to vector<1x256xf32>
    %307 = arith.cmpf oge, %305, %306 : vector<1x256xf32>
    %cst_143 = arith.constant 1.500000e+01 : f32
    %308 = vector.broadcast %cst_143 : f32 to vector<1x256xf32>
    %309 = arith.cmpf ole, %305, %308 : vector<1x256xf32>
    %310 = arith.andi %307, %309 : vector<1x256xi1>
    %cst_144 = arith.constant 0.000000e+00 : f32
    %cst_145 = arith.constant 1.500000e+01 : f32
    %311 = vector.broadcast %cst_144 : f32 to vector<1x256xf32>
    %312 = arith.maximumf %311, %305 : vector<1x256xf32>
    %313 = vector.broadcast %cst_145 : f32 to vector<1x256xf32>
    %314 = arith.minimumf %313, %312 : vector<1x256xf32>
    %315 = arith.fptosi %314 : vector<1x256xf32> to vector<1x256xi32>
    %cst_146 = arith.constant 0.000000e+00 : f32
    %316 = vector.broadcast %cst_146 : f32 to vector<1x256xf32>
    %317 = arith.select %310, %244, %316 : vector<1x256xi1>, vector<1x256xf32>
    %318 = vector.broadcast %315 : vector<1x256xi32> to vector<16x256xi32>
    %319 = arith.cmpi eq, %15, %318 : vector<16x256xi32>
    %cst_147 = arith.constant 0.000000e+00 : f32
    %320 = vector.shape_cast %317 : vector<1x256xf32> to vector<1x256xf32>
    %321 = vector.broadcast %320 : vector<1x256xf32> to vector<16x256xf32>
    %322 = vector.broadcast %cst_147 : f32 to vector<16x256xf32>
    %323 = arith.select %319, %321, %322 : vector<16x256xi1>, vector<16x256xf32>
    %324 = arith.addf %303, %323 : vector<16x256xf32>
    %325 = arith.truncf %285 : vector<16x256xf32> to vector<16x256xbf16>
    %cst_148 = arith.constant dense<0.000000e+00> : vector<48x256xf32>
    %326 = tpu.matmul %13, %325, %cst_148 {dimension_numbers = #tpu.dot_dimension_numbers<[1], [0], [0], [1], [0, 0, 1, 1], [], []>} : vector<48x16xbf16>, vector<16x256xbf16>, vector<48x256xf32> -> vector<48x256xf32>
    %327 = vector.extract_strided_slice %326 {offsets = [0, 0], sizes = [16, 256], strides = [1, 1]} : vector<48x256xf32> to vector<16x256xf32>
    %328 = arith.mulf %327, %324 : vector<16x256xf32>
    %cst_149 = arith.constant dense<0.000000e+00> : vector<256xf32>
    %329 = vector.multi_reduction <add>, %328, %cst_149 [0] : vector<16x256xf32> to vector<256xf32>
    %330 = vector.shape_cast %329 : vector<256xf32> to vector<1x256xf32>
    %331 = vector.extract_strided_slice %326 {offsets = [16, 0], sizes = [16, 256], strides = [1, 1]} : vector<48x256xf32> to vector<16x256xf32>
    %332 = arith.mulf %331, %324 : vector<16x256xf32>
    %cst_150 = arith.constant dense<0.000000e+00> : vector<256xf32>
    %333 = vector.multi_reduction <add>, %332, %cst_150 [0] : vector<16x256xf32> to vector<256xf32>
    %334 = vector.shape_cast %333 : vector<256xf32> to vector<1x256xf32>
    %335 = vector.extract_strided_slice %326 {offsets = [32, 0], sizes = [16, 256], strides = [1, 1]} : vector<48x256xf32> to vector<16x256xf32>
    %336 = arith.mulf %335, %324 : vector<16x256xf32>
    %cst_151 = arith.constant dense<0.000000e+00> : vector<256xf32>
    %337 = vector.multi_reduction <add>, %336, %cst_151 [0] : vector<16x256xf32> to vector<256xf32>
    %338 = vector.shape_cast %337 : vector<256xf32> to vector<1x256xf32>
    %339 = tpu.concatenate %330, %334, %338 in 0 : vector<1x256xf32>, vector<1x256xf32>, vector<1x256xf32> -> vector<3x256xf32>
    %c0_152 = arith.constant 0 : index
    %c0_153 = arith.constant 0 : index
    %340 = vector.load %arg15[%c0_152, %c0_153] : memref<64x3xbf16, #tpu.memory_space<vmem>>, vector<64x3xbf16>
    %341 = arith.truncf %204 : vector<3x256xf32> to vector<3x256xbf16>
    %cst_154 = arith.constant dense<0.000000e+00> : vector<64x256xf32>
    %342 = tpu.matmul %340, %341, %cst_154 {dimension_numbers = #tpu.dot_dimension_numbers<[1], [0], [0], [1], [0, 0, 1, 1], [], []>} : vector<64x3xbf16>, vector<3x256xbf16>, vector<64x256xf32> -> vector<64x256xf32>
    %c0_155 = arith.constant 0 : index
    %c0_156 = arith.constant 0 : index
    %343 = vector.load %arg16[%c0_155, %c0_156] : memref<64x3xbf16, #tpu.memory_space<vmem>>, vector<64x3xbf16>
    %344 = arith.truncf %339 : vector<3x256xf32> to vector<3x256xbf16>
    %cst_157 = arith.constant dense<0.000000e+00> : vector<64x256xf32>
    %345 = tpu.matmul %343, %344, %cst_157 {dimension_numbers = #tpu.dot_dimension_numbers<[1], [0], [0], [1], [0, 0, 1, 1], [], []>} : vector<64x3xbf16>, vector<3x256xbf16>, vector<64x256xf32> -> vector<64x256xf32>
    %346 = arith.addf %342, %345 : vector<64x256xf32>
    %c0_158 = arith.constant 0 : index
    %c0_159 = arith.constant 0 : index
    %347 = vector.load %arg17[%c0_158, %c0_159] : memref<64x2xbf16, #tpu.memory_space<vmem>>, vector<64x2xbf16>
    %348 = arith.truncf %42 : vector<2x256xf32> to vector<2x256xbf16>
    %cst_160 = arith.constant dense<0.000000e+00> : vector<64x256xf32>
    %349 = tpu.matmul %347, %348, %cst_160 {dimension_numbers = #tpu.dot_dimension_numbers<[1], [0], [0], [1], [0, 0, 1, 1], [], []>} : vector<64x2xbf16>, vector<2x256xbf16>, vector<64x256xf32> -> vector<64x256xf32>
    %350 = arith.addf %346, %349 : vector<64x256xf32>
    %c0_161 = arith.constant 0 : index
    %c0_162 = arith.constant 0 : index
    %351 = vector.load %arg18[%c0_161, %c0_162] : memref<64x2xbf16, #tpu.memory_space<vmem>>, vector<64x2xbf16>
    %352 = arith.truncf %69 : vector<2x256xf32> to vector<2x256xbf16>
    %cst_163 = arith.constant dense<0.000000e+00> : vector<64x256xf32>
    %353 = tpu.matmul %351, %352, %cst_163 {dimension_numbers = #tpu.dot_dimension_numbers<[1], [0], [0], [1], [0, 0, 1, 1], [], []>} : vector<64x2xbf16>, vector<2x256xbf16>, vector<64x256xf32> -> vector<64x256xf32>
    %354 = arith.addf %350, %353 : vector<64x256xf32>
    %c0_164 = arith.constant 0 : index
    %c0_165 = arith.constant 0 : index
    %355 = vector.load %arg19[%c0_164, %c0_165] : memref<64x3xbf16, #tpu.memory_space<vmem>>, vector<64x3xbf16>
    %cst_166 = arith.constant dense<0.000000e+00> : vector<64x256xf32>
    %356 = tpu.matmul %355, %3, %cst_166 {dimension_numbers = #tpu.dot_dimension_numbers<[1], [0], [0], [1], [0, 0, 1, 1], [], []>} : vector<64x3xbf16>, vector<3x256xbf16>, vector<64x256xf32> -> vector<64x256xf32>
    %357 = arith.addf %354, %356 : vector<64x256xf32>
    %c0_167 = arith.constant 0 : index
    %c0_168 = arith.constant 0 : index
    %358 = vector.load %arg20[%c0_167, %c0_168] : memref<64x3xbf16, #tpu.memory_space<vmem>>, vector<64x3xbf16>
    %cst_169 = arith.constant dense<0.000000e+00> : vector<64x256xf32>
    %359 = tpu.matmul %358, %7, %cst_169 {dimension_numbers = #tpu.dot_dimension_numbers<[1], [0], [0], [1], [0, 0, 1, 1], [], []>} : vector<64x3xbf16>, vector<3x256xbf16>, vector<64x256xf32> -> vector<64x256xf32>
    %360 = arith.addf %357, %359 : vector<64x256xf32>
    %c0_170 = arith.constant 0 : index
    %c0_171 = arith.constant 0 : index
    %361 = vector.load %arg21[%c0_170, %c0_171] : memref<64x1xf32, #tpu.memory_space<vmem>>, vector<64x1xf32>
    %362 = vector.broadcast %361 : vector<64x1xf32> to vector<64x256xf32>
    %363 = arith.addf %360, %362 : vector<64x256xf32>
    %cst_172 = arith.constant 0.000000e+00 : f32
    %364 = vector.broadcast %cst_172 : f32 to vector<64x256xf32>
    %365 = arith.maximumf %363, %364 : vector<64x256xf32>
    %c0_173 = arith.constant 0 : index
    %c0_174 = arith.constant 0 : index
    %366 = vector.load %arg22[%c0_173, %c0_174] : memref<3x64xbf16, #tpu.memory_space<vmem>>, vector<3x64xbf16>
    %367 = arith.truncf %365 : vector<64x256xf32> to vector<64x256xbf16>
    %cst_175 = arith.constant dense<0.000000e+00> : vector<3x256xf32>
    %368 = tpu.matmul %366, %367, %cst_175 {dimension_numbers = #tpu.dot_dimension_numbers<[1], [0], [0], [1], [0, 0, 1, 1], [], []>} : vector<3x64xbf16>, vector<64x256xbf16>, vector<3x256xf32> -> vector<3x256xf32>
    %c0_176 = arith.constant 0 : index
    %c0_177 = arith.constant 0 : index
    %369 = vector.load %arg23[%c0_176, %c0_177] : memref<3x1xf32, #tpu.memory_space<vmem>>, vector<3x1xf32>
    %370 = vector.broadcast %369 : vector<3x1xf32> to vector<3x256xf32>
    %371 = arith.addf %368, %370 : vector<3x256xf32>
    %372 = math.tanh %371 : vector<3x256xf32>
    %cst_178 = arith.constant 1.000000e+00 : f32
    %373 = vector.broadcast %cst_178 : f32 to vector<3x256xf32>
    %374 = arith.mulf %372, %373 : vector<3x256xf32>
    %cst_179 = arith.constant 1.000000e+00 : bf16
    %375 = vector.broadcast %cst_179 : bf16 to vector<3x256xbf16>
    %376 = arith.addf %5, %375 : vector<3x256xbf16>
    %cst_180 = arith.constant 5.000000e-01 : bf16
    %377 = vector.broadcast %cst_180 : bf16 to vector<3x256xbf16>
    %378 = arith.mulf %376, %377 : vector<3x256xbf16>
    %cst_181 = arith.constant 1.000000e+00 : f32
    %379 = vector.broadcast %cst_181 : f32 to vector<3x256xf32>
    %380 = arith.addf %374, %379 : vector<3x256xf32>
    %cst_182 = arith.constant 5.000000e-01 : f32
    %381 = vector.broadcast %cst_182 : f32 to vector<3x256xf32>
    %382 = arith.mulf %380, %381 : vector<3x256xf32>
    %c0_183 = arith.constant 0 : index
    %c0_184 = arith.constant 0 : index
    %383 = vector.load %arg10[%c0_183, %c0_184] : memref<32x3xbf16, #tpu.memory_space<vmem>>, vector<32x3xbf16>
    %cst_185 = arith.constant dense<0.000000e+00> : vector<32x256xf32>
    %384 = tpu.matmul %383, %378, %cst_185 {dimension_numbers = #tpu.dot_dimension_numbers<[1], [0], [0], [1], [0, 0, 1, 1], [], []>} : vector<32x3xbf16>, vector<3x256xbf16>, vector<32x256xf32> -> vector<32x256xf32>
    %c0_186 = arith.constant 0 : index
    %c0_187 = arith.constant 0 : index
    %385 = vector.load %arg11[%c0_186, %c0_187] : memref<32x3xbf16, #tpu.memory_space<vmem>>, vector<32x3xbf16>
    %386 = arith.truncf %382 : vector<3x256xf32> to vector<3x256xbf16>
    %cst_188 = arith.constant dense<0.000000e+00> : vector<32x256xf32>
    %387 = tpu.matmul %385, %386, %cst_188 {dimension_numbers = #tpu.dot_dimension_numbers<[1], [0], [0], [1], [0, 0, 1, 1], [], []>} : vector<32x3xbf16>, vector<3x256xbf16>, vector<32x256xf32> -> vector<32x256xf32>
    %388 = arith.addf %384, %387 : vector<32x256xf32>
    %c0_189 = arith.constant 0 : index
    %c0_190 = arith.constant 0 : index
    %389 = vector.load %arg12[%c0_189, %c0_190] : memref<32x1xf32, #tpu.memory_space<vmem>>, vector<32x1xf32>
    %390 = vector.broadcast %389 : vector<32x1xf32> to vector<32x256xf32>
    %391 = arith.addf %388, %390 : vector<32x256xf32>
    %cst_191 = arith.constant 0.000000e+00 : f32
    %392 = vector.broadcast %cst_191 : f32 to vector<32x256xf32>
    %393 = arith.maximumf %391, %392 : vector<32x256xf32>
    %c0_192 = arith.constant 0 : index
    %c0_193 = arith.constant 0 : index
    %394 = vector.load %arg13[%c0_192, %c0_193] : memref<2x32xbf16, #tpu.memory_space<vmem>>, vector<2x32xbf16>
    %395 = arith.truncf %393 : vector<32x256xf32> to vector<32x256xbf16>
    %cst_194 = arith.constant dense<0.000000e+00> : vector<2x256xf32>
    %396 = tpu.matmul %394, %395, %cst_194 {dimension_numbers = #tpu.dot_dimension_numbers<[1], [0], [0], [1], [0, 0, 1, 1], [], []>} : vector<2x32xbf16>, vector<32x256xbf16>, vector<2x256xf32> -> vector<2x256xf32>
    %c0_195 = arith.constant 0 : index
    %c0_196 = arith.constant 0 : index
    %397 = vector.load %arg14[%c0_195, %c0_196] : memref<2x1xf32, #tpu.memory_space<vmem>>, vector<2x1xf32>
    %398 = vector.broadcast %397 : vector<2x1xf32> to vector<2x256xf32>
    %399 = arith.addf %396, %398 : vector<2x256xf32>
    %400 = math.tanh %399 : vector<2x256xf32>
    %cst_197 = arith.constant 2.000000e+00 : f32
    %401 = vector.broadcast %cst_197 : f32 to vector<2x256xf32>
    %402 = arith.mulf %400, %401 : vector<2x256xf32>
    %403 = vector.extract_strided_slice %402 {offsets = [0, 0], sizes = [1, 256], strides = [1, 1]} : vector<2x256xf32> to vector<1x256xf32>
    %404 = vector.extract_strided_slice %402 {offsets = [1, 0], sizes = [1, 256], strides = [1, 1]} : vector<2x256xf32> to vector<1x256xf32>
    %405 = arith.addf %0, %403 : vector<1x256xf32>
    %cst_198 = arith.constant 1.500000e+01 : f32
    %406 = vector.broadcast %cst_198 : f32 to vector<1x256xf32>
    %407 = arith.divf %405, %406 : vector<1x256xf32>
    %cst_199 = arith.constant 2.000000e+00 : f32
    %408 = vector.broadcast %cst_199 : f32 to vector<1x256xf32>
    %409 = arith.mulf %407, %408 : vector<1x256xf32>
    %cst_200 = arith.constant 1.000000e+00 : f32
    %410 = vector.broadcast %cst_200 : f32 to vector<1x256xf32>
    %411 = arith.subf %409, %410 : vector<1x256xf32>
    %412 = arith.addf %1, %404 : vector<1x256xf32>
    %cst_201 = arith.constant 1.500000e+01 : f32
    %413 = vector.broadcast %cst_201 : f32 to vector<1x256xf32>
    %414 = arith.divf %412, %413 : vector<1x256xf32>
    %cst_202 = arith.constant 2.000000e+00 : f32
    %415 = vector.broadcast %cst_202 : f32 to vector<1x256xf32>
    %416 = arith.mulf %414, %415 : vector<1x256xf32>
    %cst_203 = arith.constant 1.000000e+00 : f32
    %417 = vector.broadcast %cst_203 : f32 to vector<1x256xf32>
    %418 = arith.subf %416, %417 : vector<1x256xf32>
    %cst_204 = arith.constant 1.000000e+00 : f32
    %419 = vector.broadcast %cst_204 : f32 to vector<1x256xf32>
    %420 = arith.addf %411, %419 : vector<1x256xf32>
    %cst_205 = arith.constant 1.600000e+01 : f32
    %421 = vector.broadcast %cst_205 : f32 to vector<1x256xf32>
    %422 = arith.mulf %420, %421 : vector<1x256xf32>
    %cst_206 = arith.constant 1.000000e+00 : f32
    %423 = vector.broadcast %cst_206 : f32 to vector<1x256xf32>
    %424 = arith.subf %422, %423 : vector<1x256xf32>
    %cst_207 = arith.constant 5.000000e-01 : f32
    %425 = vector.broadcast %cst_207 : f32 to vector<1x256xf32>
    %426 = arith.mulf %424, %425 : vector<1x256xf32>
    %cst_208 = arith.constant 1.000000e+00 : f32
    %427 = vector.broadcast %cst_208 : f32 to vector<1x256xf32>
    %428 = arith.addf %418, %427 : vector<1x256xf32>
    %cst_209 = arith.constant 1.600000e+01 : f32
    %429 = vector.broadcast %cst_209 : f32 to vector<1x256xf32>
    %430 = arith.mulf %428, %429 : vector<1x256xf32>
    %cst_210 = arith.constant 1.000000e+00 : f32
    %431 = vector.broadcast %cst_210 : f32 to vector<1x256xf32>
    %432 = arith.subf %430, %431 : vector<1x256xf32>
    %cst_211 = arith.constant 5.000000e-01 : f32
    %433 = vector.broadcast %cst_211 : f32 to vector<1x256xf32>
    %434 = arith.mulf %432, %433 : vector<1x256xf32>
    %435 = math.floor %426 : vector<1x256xf32>
    %436 = math.floor %434 : vector<1x256xf32>
    %437 = arith.subf %426, %435 : vector<1x256xf32>
    %cst_212 = arith.constant 1.000000e+00 : f32
    %438 = vector.broadcast %cst_212 : f32 to vector<1x256xf32>
    %439 = arith.subf %438, %437 : vector<1x256xf32>
    %440 = arith.subf %434, %436 : vector<1x256xf32>
    %cst_213 = arith.constant 1.000000e+00 : f32
    %441 = vector.broadcast %cst_213 : f32 to vector<1x256xf32>
    %442 = arith.subf %441, %440 : vector<1x256xf32>
    %cst_214 = arith.constant 0.000000e+00 : f32
    %443 = vector.broadcast %cst_214 : f32 to vector<1x256xf32>
    %444 = arith.cmpf oge, %435, %443 : vector<1x256xf32>
    %cst_215 = arith.constant 1.500000e+01 : f32
    %445 = vector.broadcast %cst_215 : f32 to vector<1x256xf32>
    %446 = arith.cmpf ole, %435, %445 : vector<1x256xf32>
    %447 = arith.andi %444, %446 : vector<1x256xi1>
    %cst_216 = arith.constant 0.000000e+00 : f32
    %cst_217 = arith.constant 1.500000e+01 : f32
    %448 = vector.broadcast %cst_216 : f32 to vector<1x256xf32>
    %449 = arith.maximumf %448, %435 : vector<1x256xf32>
    %450 = vector.broadcast %cst_217 : f32 to vector<1x256xf32>
    %451 = arith.minimumf %450, %449 : vector<1x256xf32>
    %452 = arith.fptosi %451 : vector<1x256xf32> to vector<1x256xi32>
    %cst_218 = arith.constant 0.000000e+00 : f32
    %453 = vector.broadcast %cst_218 : f32 to vector<1x256xf32>
    %454 = arith.select %447, %439, %453 : vector<1x256xi1>, vector<1x256xf32>
    %455 = vector.broadcast %452 : vector<1x256xi32> to vector<16x256xi32>
    %456 = arith.cmpi eq, %14, %455 : vector<16x256xi32>
    %cst_219 = arith.constant 0.000000e+00 : f32
    %457 = vector.shape_cast %454 : vector<1x256xf32> to vector<1x256xf32>
    %458 = vector.broadcast %457 : vector<1x256xf32> to vector<16x256xf32>
    %459 = vector.broadcast %cst_219 : f32 to vector<16x256xf32>
    %460 = arith.select %456, %458, %459 : vector<16x256xi1>, vector<16x256xf32>
    %cst_220 = arith.constant 1.000000e+00 : f32
    %461 = vector.broadcast %cst_220 : f32 to vector<1x256xf32>
    %462 = arith.addf %435, %461 : vector<1x256xf32>
    %cst_221 = arith.constant 0.000000e+00 : f32
    %463 = vector.broadcast %cst_221 : f32 to vector<1x256xf32>
    %464 = arith.cmpf oge, %462, %463 : vector<1x256xf32>
    %cst_222 = arith.constant 1.500000e+01 : f32
    %465 = vector.broadcast %cst_222 : f32 to vector<1x256xf32>
    %466 = arith.cmpf ole, %462, %465 : vector<1x256xf32>
    %467 = arith.andi %464, %466 : vector<1x256xi1>
    %cst_223 = arith.constant 0.000000e+00 : f32
    %cst_224 = arith.constant 1.500000e+01 : f32
    %468 = vector.broadcast %cst_223 : f32 to vector<1x256xf32>
    %469 = arith.maximumf %468, %462 : vector<1x256xf32>
    %470 = vector.broadcast %cst_224 : f32 to vector<1x256xf32>
    %471 = arith.minimumf %470, %469 : vector<1x256xf32>
    %472 = arith.fptosi %471 : vector<1x256xf32> to vector<1x256xi32>
    %cst_225 = arith.constant 0.000000e+00 : f32
    %473 = vector.broadcast %cst_225 : f32 to vector<1x256xf32>
    %474 = arith.select %467, %437, %473 : vector<1x256xi1>, vector<1x256xf32>
    %475 = vector.broadcast %472 : vector<1x256xi32> to vector<16x256xi32>
    %476 = arith.cmpi eq, %14, %475 : vector<16x256xi32>
    %cst_226 = arith.constant 0.000000e+00 : f32
    %477 = vector.shape_cast %474 : vector<1x256xf32> to vector<1x256xf32>
    %478 = vector.broadcast %477 : vector<1x256xf32> to vector<16x256xf32>
    %479 = vector.broadcast %cst_226 : f32 to vector<16x256xf32>
    %480 = arith.select %476, %478, %479 : vector<16x256xi1>, vector<16x256xf32>
    %481 = arith.addf %460, %480 : vector<16x256xf32>
    %cst_227 = arith.constant 0.000000e+00 : f32
    %482 = vector.broadcast %cst_227 : f32 to vector<1x256xf32>
    %483 = arith.cmpf oge, %436, %482 : vector<1x256xf32>
    %cst_228 = arith.constant 1.500000e+01 : f32
    %484 = vector.broadcast %cst_228 : f32 to vector<1x256xf32>
    %485 = arith.cmpf ole, %436, %484 : vector<1x256xf32>
    %486 = arith.andi %483, %485 : vector<1x256xi1>
    %cst_229 = arith.constant 0.000000e+00 : f32
    %cst_230 = arith.constant 1.500000e+01 : f32
    %487 = vector.broadcast %cst_229 : f32 to vector<1x256xf32>
    %488 = arith.maximumf %487, %436 : vector<1x256xf32>
    %489 = vector.broadcast %cst_230 : f32 to vector<1x256xf32>
    %490 = arith.minimumf %489, %488 : vector<1x256xf32>
    %491 = arith.fptosi %490 : vector<1x256xf32> to vector<1x256xi32>
    %cst_231 = arith.constant 0.000000e+00 : f32
    %492 = vector.broadcast %cst_231 : f32 to vector<1x256xf32>
    %493 = arith.select %486, %442, %492 : vector<1x256xi1>, vector<1x256xf32>
    %494 = vector.broadcast %491 : vector<1x256xi32> to vector<16x256xi32>
    %495 = arith.cmpi eq, %15, %494 : vector<16x256xi32>
    %cst_232 = arith.constant 0.000000e+00 : f32
    %496 = vector.shape_cast %493 : vector<1x256xf32> to vector<1x256xf32>
    %497 = vector.broadcast %496 : vector<1x256xf32> to vector<16x256xf32>
    %498 = vector.broadcast %cst_232 : f32 to vector<16x256xf32>
    %499 = arith.select %495, %497, %498 : vector<16x256xi1>, vector<16x256xf32>
    %cst_233 = arith.constant 1.000000e+00 : f32
    %500 = vector.broadcast %cst_233 : f32 to vector<1x256xf32>
    %501 = arith.addf %436, %500 : vector<1x256xf32>
    %cst_234 = arith.constant 0.000000e+00 : f32
    %502 = vector.broadcast %cst_234 : f32 to vector<1x256xf32>
    %503 = arith.cmpf oge, %501, %502 : vector<1x256xf32>
    %cst_235 = arith.constant 1.500000e+01 : f32
    %504 = vector.broadcast %cst_235 : f32 to vector<1x256xf32>
    %505 = arith.cmpf ole, %501, %504 : vector<1x256xf32>
    %506 = arith.andi %503, %505 : vector<1x256xi1>
    %cst_236 = arith.constant 0.000000e+00 : f32
    %cst_237 = arith.constant 1.500000e+01 : f32
    %507 = vector.broadcast %cst_236 : f32 to vector<1x256xf32>
    %508 = arith.maximumf %507, %501 : vector<1x256xf32>
    %509 = vector.broadcast %cst_237 : f32 to vector<1x256xf32>
    %510 = arith.minimumf %509, %508 : vector<1x256xf32>
    %511 = arith.fptosi %510 : vector<1x256xf32> to vector<1x256xi32>
    %cst_238 = arith.constant 0.000000e+00 : f32
    %512 = vector.broadcast %cst_238 : f32 to vector<1x256xf32>
    %513 = arith.select %506, %440, %512 : vector<1x256xi1>, vector<1x256xf32>
    %514 = vector.broadcast %511 : vector<1x256xi32> to vector<16x256xi32>
    %515 = arith.cmpi eq, %15, %514 : vector<16x256xi32>
    %cst_239 = arith.constant 0.000000e+00 : f32
    %516 = vector.shape_cast %513 : vector<1x256xf32> to vector<1x256xf32>
    %517 = vector.broadcast %516 : vector<1x256xf32> to vector<16x256xf32>
    %518 = vector.broadcast %cst_239 : f32 to vector<16x256xf32>
    %519 = arith.select %515, %517, %518 : vector<16x256xi1>, vector<16x256xf32>
    %520 = arith.addf %499, %519 : vector<16x256xf32>
    %521 = arith.truncf %481 : vector<16x256xf32> to vector<16x256xbf16>
    %cst_240 = arith.constant dense<0.000000e+00> : vector<48x256xf32>
    %522 = tpu.matmul %11, %521, %cst_240 {dimension_numbers = #tpu.dot_dimension_numbers<[1], [0], [0], [1], [0, 0, 1, 1], [], []>} : vector<48x16xbf16>, vector<16x256xbf16>, vector<48x256xf32> -> vector<48x256xf32>
    %523 = vector.extract_strided_slice %522 {offsets = [0, 0], sizes = [16, 256], strides = [1, 1]} : vector<48x256xf32> to vector<16x256xf32>
    %524 = arith.mulf %523, %520 : vector<16x256xf32>
    %cst_241 = arith.constant dense<0.000000e+00> : vector<256xf32>
    %525 = vector.multi_reduction <add>, %524, %cst_241 [0] : vector<16x256xf32> to vector<256xf32>
    %526 = vector.shape_cast %525 : vector<256xf32> to vector<1x256xf32>
    %527 = vector.extract_strided_slice %522 {offsets = [16, 0], sizes = [16, 256], strides = [1, 1]} : vector<48x256xf32> to vector<16x256xf32>
    %528 = arith.mulf %527, %520 : vector<16x256xf32>
    %cst_242 = arith.constant dense<0.000000e+00> : vector<256xf32>
    %529 = vector.multi_reduction <add>, %528, %cst_242 [0] : vector<16x256xf32> to vector<256xf32>
    %530 = vector.shape_cast %529 : vector<256xf32> to vector<1x256xf32>
    %531 = vector.extract_strided_slice %522 {offsets = [32, 0], sizes = [16, 256], strides = [1, 1]} : vector<48x256xf32> to vector<16x256xf32>
    %532 = arith.mulf %531, %520 : vector<16x256xf32>
    %cst_243 = arith.constant dense<0.000000e+00> : vector<256xf32>
    %533 = vector.multi_reduction <add>, %532, %cst_243 [0] : vector<16x256xf32> to vector<256xf32>
    %534 = vector.shape_cast %533 : vector<256xf32> to vector<1x256xf32>
    %535 = tpu.concatenate %526, %530, %534 in 0 : vector<1x256xf32>, vector<1x256xf32>, vector<1x256xf32> -> vector<3x256xf32>
    %c0_244 = arith.constant 0 : index
    %c0_245 = arith.constant 0 : index
    %536 = vector.load %arg24[%c0_244, %c0_245] : memref<64x3xbf16, #tpu.memory_space<vmem>>, vector<64x3xbf16>
    %537 = arith.truncf %374 : vector<3x256xf32> to vector<3x256xbf16>
    %cst_246 = arith.constant dense<0.000000e+00> : vector<64x256xf32>
    %538 = tpu.matmul %536, %537, %cst_246 {dimension_numbers = #tpu.dot_dimension_numbers<[1], [0], [0], [1], [0, 0, 1, 1], [], []>} : vector<64x3xbf16>, vector<3x256xbf16>, vector<64x256xf32> -> vector<64x256xf32>
    %c0_247 = arith.constant 0 : index
    %c0_248 = arith.constant 0 : index
    %539 = vector.load %arg25[%c0_247, %c0_248] : memref<64x3xbf16, #tpu.memory_space<vmem>>, vector<64x3xbf16>
    %540 = arith.truncf %535 : vector<3x256xf32> to vector<3x256xbf16>
    %cst_249 = arith.constant dense<0.000000e+00> : vector<64x256xf32>
    %541 = tpu.matmul %539, %540, %cst_249 {dimension_numbers = #tpu.dot_dimension_numbers<[1], [0], [0], [1], [0, 0, 1, 1], [], []>} : vector<64x3xbf16>, vector<3x256xbf16>, vector<64x256xf32> -> vector<64x256xf32>
    %542 = arith.addf %538, %541 : vector<64x256xf32>
    %c0_250 = arith.constant 0 : index
    %c0_251 = arith.constant 0 : index
    %543 = vector.load %arg26[%c0_250, %c0_251] : memref<64x1xf32, #tpu.memory_space<vmem>>, vector<64x1xf32>
    %544 = vector.broadcast %543 : vector<64x1xf32> to vector<64x256xf32>
    %545 = arith.addf %542, %544 : vector<64x256xf32>
    %cst_252 = arith.constant 0.000000e+00 : f32
    %546 = vector.broadcast %cst_252 : f32 to vector<64x256xf32>
    %547 = arith.maximumf %545, %546 : vector<64x256xf32>
    %c0_253 = arith.constant 0 : index
    %c0_254 = arith.constant 0 : index
    %548 = vector.load %arg27[%c0_253, %c0_254] : memref<3x64xbf16, #tpu.memory_space<vmem>>, vector<3x64xbf16>
    %549 = arith.truncf %547 : vector<64x256xf32> to vector<64x256xbf16>
    %cst_255 = arith.constant dense<0.000000e+00> : vector<3x256xf32>
    %550 = tpu.matmul %548, %549, %cst_255 {dimension_numbers = #tpu.dot_dimension_numbers<[1], [0], [0], [1], [0, 0, 1, 1], [], []>} : vector<3x64xbf16>, vector<64x256xbf16>, vector<3x256xf32> -> vector<3x256xf32>
    %c0_256 = arith.constant 0 : index
    %c0_257 = arith.constant 0 : index
    %551 = vector.load %arg28[%c0_256, %c0_257] : memref<3x1xf32, #tpu.memory_space<vmem>>, vector<3x1xf32>
    %552 = vector.broadcast %551 : vector<3x1xf32> to vector<3x256xf32>
    %553 = arith.addf %550, %552 : vector<3x256xf32>
    %c0_258 = arith.constant 0 : index
    %c0_259 = arith.constant 0 : index
    %c0_260 = arith.constant 0 : index
    %554 = vector.load %arg29[%c0_258, %c0_259, %c0_260] : memref<1x3x256xf32, #tpu.memory_space<vmem>>, vector<1x3x256xf32>
    %555 = vector.shape_cast %554 : vector<1x3x256xf32> to vector<3x256xf32>
    %556 = vector.shape_cast %374 : vector<3x256xf32> to vector<1x3x256xf32>
    tpu.vector_store %arg29[%c0_258, %c0_259, %c0_260], %556 {strides = array<i32>} : memref<1x3x256xf32, #tpu.memory_space<vmem>>, vector<1x3x256xf32>,
    %557 = arith.addf %374, %553 : vector<3x256xf32>
    %c0_261 = arith.constant 0 : index
    %c0_262 = arith.constant 0 : index
    %c0_263 = arith.constant 0 : index
    %558 = vector.load %arg30[%c0_261, %c0_262, %c0_263] : memref<1x3x256xf32, #tpu.memory_space<vmem>>, vector<1x3x256xf32>
    %559 = vector.shape_cast %558 : vector<1x3x256xf32> to vector<3x256xf32>
    %560 = vector.shape_cast %557 : vector<3x256xf32> to vector<1x3x256xf32>
    tpu.vector_store %arg30[%c0_261, %c0_262, %c0_263], %560 {strides = array<i32>} : memref<1x3x256xf32, #tpu.memory_space<vmem>>, vector<1x3x256xf32>,
    return
  }
  func.func @transform_0(%arg0: i32, %arg1: i32) -> (i32, i32, i32) {
    %c0_i32 = arith.constant 0 : i32
    %c0_i32_0 = arith.constant 0 : i32
    %c0_i32_1 = arith.constant 0 : i32
    return %arg0, %c0_i32, %c0_i32_0 : i32, i32, i32
  }
  func.func @transform_1(%arg0: i32, %arg1: i32) -> (i32, i32, i32) {
    %c0_i32 = arith.constant 0 : i32
    %c0_i32_0 = arith.constant 0 : i32
    %c0_i32_1 = arith.constant 0 : i32
    return %arg0, %c0_i32, %c0_i32_0 : i32, i32, i32
  }
  func.func @transform_2(%arg0: i32, %arg1: i32) -> (i32, i32, i32) {
    %c0_i32 = arith.constant 0 : i32
    %c0_i32_0 = arith.constant 0 : i32
    %c0_i32_1 = arith.constant 0 : i32
    return %arg0, %c0_i32, %c0_i32_0 : i32, i32, i32
  }
  func.func @transform_3(%arg0: i32, %arg1: i32) -> (i32, i32, i32) {
    %c0_i32 = arith.constant 0 : i32
    %c0_i32_0 = arith.constant 0 : i32
    return %arg0, %c0_i32, %arg1 : i32, i32, i32
  }
  func.func @transform_4(%arg0: i32, %arg1: i32) -> (i32, i32, i32) {
    %c0_i32 = arith.constant 0 : i32
    %c0_i32_0 = arith.constant 0 : i32
    return %arg0, %c0_i32, %arg1 : i32, i32, i32
  }
  func.func @transform_5(%arg0: i32, %arg1: i32) -> (i32, i32, i32) {
    %c0_i32 = arith.constant 0 : i32
    %c0_i32_0 = arith.constant 0 : i32
    return %arg0, %c0_i32, %arg1 : i32, i32, i32
  }
  func.func @transform_6(%arg0: i32, %arg1: i32) -> (i32, i32) {
    %c0_i32 = arith.constant 0 : i32
    %c0_i32_0 = arith.constant 0 : i32
    return %c0_i32, %arg1 : i32, i32
  }
  func.func @transform_7(%arg0: i32, %arg1: i32) -> (i32, i32) {
    %c0_i32 = arith.constant 0 : i32
    %c0_i32_0 = arith.constant 0 : i32
    return %c0_i32, %arg1 : i32, i32
  }
  func.func @transform_8(%arg0: i32, %arg1: i32) -> (i32, i32) {
    %c0_i32 = arith.constant 0 : i32
    %c0_i32_0 = arith.constant 0 : i32
    %c0_i32_1 = arith.constant 0 : i32
    return %c0_i32, %c0_i32_0 : i32, i32
  }
  func.func @transform_9(%arg0: i32, %arg1: i32) -> (i32, i32) {
    %c0_i32 = arith.constant 0 : i32
    %c0_i32_0 = arith.constant 0 : i32
    %c0_i32_1 = arith.constant 0 : i32
    return %c0_i32, %c0_i32_0 : i32, i32
  }
  func.func @transform_10(%arg0: i32, %arg1: i32) -> (i32, i32) {
    %c0_i32 = arith.constant 0 : i32
    %c0_i32_0 = arith.constant 0 : i32
    %c0_i32_1 = arith.constant 0 : i32
    return %c0_i32, %c0_i32_0 : i32, i32
  }
  func.func @transform_11(%arg0: i32, %arg1: i32) -> (i32, i32) {
    %c0_i32 = arith.constant 0 : i32
    %c0_i32_0 = arith.constant 0 : i32
    %c0_i32_1 = arith.constant 0 : i32
    return %c0_i32, %c0_i32_0 : i32, i32
  }
  func.func @transform_12(%arg0: i32, %arg1: i32) -> (i32, i32) {
    %c0_i32 = arith.constant 0 : i32
    %c0_i32_0 = arith.constant 0 : i32
    %c0_i32_1 = arith.constant 0 : i32
    return %c0_i32, %c0_i32_0 : i32, i32
  }
  func.func @transform_13(%arg0: i32, %arg1: i32) -> (i32, i32) {
    %c0_i32 = arith.constant 0 : i32
    %c0_i32_0 = arith.constant 0 : i32
    %c0_i32_1 = arith.constant 0 : i32
    return %c0_i32, %c0_i32_0 : i32, i32
  }
  func.func @transform_14(%arg0: i32, %arg1: i32) -> (i32, i32) {
    %c0_i32 = arith.constant 0 : i32
    %c0_i32_0 = arith.constant 0 : i32
    %c0_i32_1 = arith.constant 0 : i32
    return %c0_i32, %c0_i32_0 : i32, i32
  }
  func.func @transform_15(%arg0: i32, %arg1: i32) -> (i32, i32) {
    %c0_i32 = arith.constant 0 : i32
    %c0_i32_0 = arith.constant 0 : i32
    %c0_i32_1 = arith.constant 0 : i32
    return %c0_i32, %c0_i32_0 : i32, i32
  }
  func.func @transform_16(%arg0: i32, %arg1: i32) -> (i32, i32) {
    %c0_i32 = arith.constant 0 : i32
    %c0_i32_0 = arith.constant 0 : i32
    %c0_i32_1 = arith.constant 0 : i32
    return %c0_i32, %c0_i32_0 : i32, i32
  }
  func.func @transform_17(%arg0: i32, %arg1: i32) -> (i32, i32) {
    %c0_i32 = arith.constant 0 : i32
    %c0_i32_0 = arith.constant 0 : i32
    %c0_i32_1 = arith.constant 0 : i32
    return %c0_i32, %c0_i32_0 : i32, i32
  }
  func.func @transform_18(%arg0: i32, %arg1: i32) -> (i32, i32) {
    %c0_i32 = arith.constant 0 : i32
    %c0_i32_0 = arith.constant 0 : i32
    %c0_i32_1 = arith.constant 0 : i32
    return %c0_i32, %c0_i32_0 : i32, i32
  }
  func.func @transform_19(%arg0: i32, %arg1: i32) -> (i32, i32) {
    %c0_i32 = arith.constant 0 : i32
    %c0_i32_0 = arith.constant 0 : i32
    %c0_i32_1 = arith.constant 0 : i32
    return %c0_i32, %c0_i32_0 : i32, i32
  }
  func.func @transform_20(%arg0: i32, %arg1: i32) -> (i32, i32) {
    %c0_i32 = arith.constant 0 : i32
    %c0_i32_0 = arith.constant 0 : i32
    %c0_i32_1 = arith.constant 0 : i32
    return %c0_i32, %c0_i32_0 : i32, i32
  }
  func.func @transform_21(%arg0: i32, %arg1: i32) -> (i32, i32) {
    %c0_i32 = arith.constant 0 : i32
    %c0_i32_0 = arith.constant 0 : i32
    %c0_i32_1 = arith.constant 0 : i32
    return %c0_i32, %c0_i32_0 : i32, i32
  }
  func.func @transform_22(%arg0: i32, %arg1: i32) -> (i32, i32) {
    %c0_i32 = arith.constant 0 : i32
    %c0_i32_0 = arith.constant 0 : i32
    %c0_i32_1 = arith.constant 0 : i32
    return %c0_i32, %c0_i32_0 : i32, i32
  }
  func.func @transform_23(%arg0: i32, %arg1: i32) -> (i32, i32) {
    %c0_i32 = arith.constant 0 : i32
    %c0_i32_0 = arith.constant 0 : i32
    %c0_i32_1 = arith.constant 0 : i32
    return %c0_i32, %c0_i32_0 : i32, i32
  }
  func.func @transform_24(%arg0: i32, %arg1: i32) -> (i32, i32) {
    %c0_i32 = arith.constant 0 : i32
    %c0_i32_0 = arith.constant 0 : i32
    %c0_i32_1 = arith.constant 0 : i32
    return %c0_i32, %c0_i32_0 : i32, i32
  }
  func.func @transform_25(%arg0: i32, %arg1: i32) -> (i32, i32) {
    %c0_i32 = arith.constant 0 : i32
    %c0_i32_0 = arith.constant 0 : i32
    %c0_i32_1 = arith.constant 0 : i32
    return %c0_i32, %c0_i32_0 : i32, i32
  }
  func.func @transform_26(%arg0: i32, %arg1: i32) -> (i32, i32) {
    %c0_i32 = arith.constant 0 : i32
    %c0_i32_0 = arith.constant 0 : i32
    %c0_i32_1 = arith.constant 0 : i32
    return %c0_i32, %c0_i32_0 : i32, i32
  }
  func.func @transform_27(%arg0: i32, %arg1: i32) -> (i32, i32, i32) {
    %c0_i32 = arith.constant 0 : i32
    %c0_i32_0 = arith.constant 0 : i32
    return %arg0, %c0_i32, %arg1 : i32, i32, i32
  }
  func.func @transform_28(%arg0: i32, %arg1: i32) -> (i32, i32, i32) {
    %c0_i32 = arith.constant 0 : i32
    %c0_i32_0 = arith.constant 0 : i32
    return %arg0, %c0_i32, %arg1 : i32, i32, i32
  }
}

</mosaic_0001>

<llo_original>
// kernel: difrint_forward.1
$region0: #{difrint_forward.1}
  #allocation0 [shape = 'u32[]', space=smem, size = 0x4, offset = 0x4, fixed_abs, tag = 'smem constant byte address 0x4 - core index']
  #allocation1 [shape = 'u32[144,128]{1,0:T(1,128)}', space=vmem, size = 0x12000, scoped, tag = 'internal scratch']
  %s0 = inlined_call_operand.vmem [shape: bf16[2,48,16], index: 0, kind: input, shape index: {}]
  %s1 = inlined_call_operand.vmem [shape: bf16[2,48,16], index: 1, kind: input, shape index: {}]
  %s2 = inlined_call_operand.vmem [shape: bf16[2,48,16], index: 2, kind: input, shape index: {}]
  %s3 = inlined_call_operand.vmem [shape: bf16[2,3,256], index: 3, kind: input, shape index: {}]
  %s4 = inlined_call_operand.vmem [shape: bf16[2,3,256], index: 4, kind: input, shape index: {}]
  %s5 = inlined_call_operand.vmem [shape: bf16[2,3,256], index: 5, kind: input, shape index: {}]
  %s6 = inlined_call_operand.vmem [shape: f32[1,256], index: 6, kind: input, shape index: {}]
  %s7 = inlined_call_operand.vmem [shape: f32[1,256], index: 7, kind: input, shape index: {}]
  %s8 = inlined_call_operand.vmem [shape: bf16[32,3], index: 8, kind: input, shape index: {}]
  %s9 = inlined_call_operand.vmem [shape: bf16[32,3], index: 9, kind: input, shape index: {}]
  %s10 = inlined_call_operand.vmem [shape: f32[32,1], index: 10, kind: input, shape index: {}]
  %s11 = inlined_call_operand.vmem [shape: bf16[2,32], index: 11, kind: input, shape index: {}]
  %s12 = inlined_call_operand.vmem [shape: f32[2,1], index: 12, kind: input, shape index: {}]
  %s13 = inlined_call_operand.vmem [shape: bf16[64,3], index: 13, kind: input, shape index: {}]
  %s14 = inlined_call_operand.vmem [shape: bf16[64,3], index: 14, kind: input, shape index: {}]
  %s15 = inlined_call_operand.vmem [shape: bf16[64,2], index: 15, kind: input, shape index: {}]
  %s16 = inlined_call_operand.vmem [shape: bf16[64,2], index: 16, kind: input, shape index: {}]
  %s17 = inlined_call_operand.vmem [shape: bf16[64,3], index: 17, kind: input, shape index: {}]
  %s18 = inlined_call_operand.vmem [shape: bf16[64,3], index: 18, kind: input, shape index: {}]
  %s19 = inlined_call_operand.vmem [shape: f32[64,1], index: 19, kind: input, shape index: {}]
  %s20 = inlined_call_operand.vmem [shape: bf16[3,64], index: 20, kind: input, shape index: {}]
  %s21 = inlined_call_operand.vmem [shape: f32[3,1], index: 21, kind: input, shape index: {}]
  %s22 = inlined_call_operand.vmem [shape: bf16[64,3], index: 22, kind: input, shape index: {}]
  %s23 = inlined_call_operand.vmem [shape: bf16[64,3], index: 23, kind: input, shape index: {}]
  %s24 = inlined_call_operand.vmem [shape: f32[64,1], index: 24, kind: input, shape index: {}]
  %s25 = inlined_call_operand.vmem [shape: bf16[3,64], index: 25, kind: input, shape index: {}]
  %s26 = inlined_call_operand.vmem [shape: f32[3,1], index: 26, kind: input, shape index: {}]
  %s27 = inlined_call_operand.vmem [shape: f32[2,3,256], index: 27, kind: output, shape index: {0}]
  %s28 = inlined_call_operand.vmem [shape: f32[2,3,256], index: 28, kind: output, shape index: {1}]
  %29 = xla_tuple %s27, %s28
  %s30 = sld [smem:[#allocation0]]
  $region149: #{difrint_forward.1} parent=0
    _
  %s32 = ssub.s32 1, %s30
  %s33 = scalar_select 0, %s32, %s30
  loop: start=0, step=1, limit=4
  $region2: #{difrint_forward.1} parent=0 // loop_pre_header
    _
  $region3: #{difrint_forward.1} parent=0 // loop_header
    %s35 = sphi 0, %s39
    %p36 = scmp.ge.s32.totalorder %s35, 4
    %s42 = sphi 0, %s54
    %s43 = sphi 0, %s50
    %s44 = sphi 0, %s42
    %s45 = sphi 0, %s43
    %s46 = sphi 0, %s44
    %s47 = sphi 0, %s45
    %s57 = sphi 0, %s59
    %s60 = sphi 0, %s57
    %s61 = sphi 0, %s60
    %s77 = sphi 0, %s61
    %s83 = sphi 0, %s85
    %s86 = sphi 0, %s83
    %s87 = sphi 0, %s86
    %s103 = sphi 0, %s87
    %s109 = sphi 0, %s111
    %s112 = sphi 0, %s109
    %s113 = sphi 0, %s112
    %s129 = sphi 0, %s113
    %s137 = sphi 0, %s139
    %s140 = sphi 0, %s137
    %s141 = sphi 0, %s140
    %s157 = sphi 0, %s141
    %s165 = sphi 0, %s167
    %s168 = sphi 0, %s165
    %s169 = sphi 0, %s168
    %s185 = sphi 0, %s169
    %s193 = sphi 0, %s195
    %s196 = sphi 0, %s193
    %s197 = sphi 0, %s196
    %s213 = sphi 0, %s197
    %s219 = sphi 0, %s221
    %s222 = sphi 0, %s219
    %s223 = sphi 0, %s222
    %s239 = sphi 0, %s223
    %s245 = sphi 0, %s247
    %s248 = sphi 0, %s245
    %s249 = sphi 0, %s248
    %s265 = sphi 0, %s249
    %s269 = sphi 0, %s269
    %s271 = sphi 0, %s269
    %s272 = sphi 0, %s271
    %s286 = sphi 0, %s272
    %s290 = sphi 0, %s290
    %s292 = sphi 0, %s290
    %s293 = sphi 0, %s292
    %s307 = sphi 0, %s293
    %s311 = sphi 0, %s311
    %s313 = sphi 0, %s311
    %s314 = sphi 0, %s313
    %s328 = sphi 0, %s314
    %s332 = sphi 0, %s332
    %s334 = sphi 0, %s332
    %s335 = sphi 0, %s334
    %s349 = sphi 0, %s335
    %s353 = sphi 0, %s353
    %s355 = sphi 0, %s353
    %s356 = sphi 0, %s355
    %s370 = sphi 0, %s356
    %s374 = sphi 0, %s374
    %s376 = sphi 0, %s374
    %s377 = sphi 0, %s376
    %s391 = sphi 0, %s377
    %s395 = sphi 0, %s395
    %s397 = sphi 0, %s395
    %s398 = sphi 0, %s397
    %s412 = sphi 0, %s398
    %s416 = sphi 0, %s416
    %s418 = sphi 0, %s416
    %s419 = sphi 0, %s418
    %s433 = sphi 0, %s419
    %s437 = sphi 0, %s437
    %s439 = sphi 0, %s437
    %s440 = sphi 0, %s439
    %s454 = sphi 0, %s440
    %s458 = sphi 0, %s458
    %s460 = sphi 0, %s458
    %s461 = sphi 0, %s460
    %s475 = sphi 0, %s461
    %s479 = sphi 0, %s479
    %s481 = sphi 0, %s479
    %s482 = sphi 0, %s481
    %s496 = sphi 0, %s482
    %s500 = sphi 0, %s500
    %s502 = sphi 0, %s500
    %s503 = sphi 0, %s502
    %s517 = sphi 0, %s503
    %s521 = sphi 0, %s521
    %s523 = sphi 0, %s521
    %s524 = sphi 0, %s523
    %s538 = sphi 0, %s524
    %s542 = sphi 0, %s542
    %s544 = sphi 0, %s542
    %s545 = sphi 0, %s544
    %s559 = sphi 0, %s545
    %s563 = sphi 0, %s563
    %s565 = sphi 0, %s563
    %s566 = sphi 0, %s565
    %s580 = sphi 0, %s566
    %s584 = sphi 0, %s584
    %s586 = sphi 0, %s584
    %s587 = sphi 0, %s586
    %s601 = sphi 0, %s587
    %s605 = sphi 0, %s605
    %s607 = sphi 0, %s605
    %s608 = sphi 0, %s607
    %s622 = sphi 0, %s608
    %s626 = sphi 0, %s626
    %s628 = sphi 0, %s626
    %s629 = sphi 0, %s628
    %s643 = sphi 0, %s629
    %s647 = sphi 0, %s647
    %s649 = sphi 0, %s647
    %s650 = sphi 0, %s649
    %s664 = sphi 0, %s650
    %s672 = sphi 0, %s674
    %s675 = sphi 0, %s672
    %s676 = sphi 0, %s675
    %s692 = sphi 0, %s676
    %s700 = sphi 0, %s702
    %s703 = sphi 0, %s700
    %s704 = sphi 0, %s703
    %s720 = sphi 0, %s704
  $region4: #{difrint_forward.1} parent=0 // loop_header_branch
    %38 = sbr.rel (%p36) target = $region8
  $region5: #{difrint_forward.1} parent=0 // loop_body
    %s40 = ssub.s32 %s35, 1
    %s41 = ssub.s32 %s35, 2
    %s48 = sadd.s32 1, %s43
    %p49 = scmp.ge.s32.totalorder %s48, 1
    %s50 = scalar_select %p49, 0, %s48
    %s51 = sadd.s32 1, %s42
    %s52 = scalar_select %p49, %s51, %s42
    %p53 = scmp.ge.s32.totalorder %s52, 2
    %s54 = scalar_select %p53, 0, %s52
    %s55 = ssub.s32 %s42, %s54
    %p56 = scmp.eq.s32.totalorder %s55, 0
    %s58 = sadd.s32 %s57, 1
    %s59 = scalar_select %p56, %s57, %s58
    %p62 = pneg %p56
    %p63 = scmp.eq.s32.totalorder %s35, 1
    %p64 = por %p62, %p63
    %p65 = scmp.ne.s32.totalorder %s57, %s60
    %p66 = scmp.eq.s32.totalorder %s35, 0
    %p67 = por %p65, %p66
    %p68 = scmp.ne.s32.totalorder %s57, %s60
    %p69 = scmp.eq.s32.totalorder %s40, 1
    %p70 = por %p68, %p69
    %p71 = scmp.ne.s32.totalorder %s60, %s61
    %p72 = scmp.eq.s32.totalorder %s40, 0
    %p73 = por %p71, %p72
    %p74 = scmp.ne.s32.totalorder %s60, %s61
    %p75 = scmp.eq.s32.totalorder %s41, 1
    %p76 = por %p74, %p75
    %p78 = scmp.ne.s32.totalorder %s61, %s77
    %p79 = scmp.eq.s32.totalorder %s41, 0
    %p80 = por %p78, %p79
    %s81 = ssub.s32 %s42, %s54
    %p82 = scmp.eq.s32.totalorder %s81, 0
    %s84 = sadd.s32 %s83, 1
    %s85 = scalar_select %p82, %s83, %s84
    %p88 = pneg %p82
    %p89 = scmp.eq.s32.totalorder %s35, 1
    %p90 = por %p88, %p89
    %p91 = scmp.ne.s32.totalorder %s83, %s86
    %p92 = scmp.eq.s32.totalorder %s35, 0
    %p93 = por %p91, %p92
    %p94 = scmp.ne.s32.totalorder %s83, %s86
    %p95 = scmp.eq.s32.totalorder %s40, 1
    %p96 = por %p94, %p95
    %p97 = scmp.ne.s32.totalorder %s86, %s87
    %p98 = scmp.eq.s32.totalorder %s40, 0
    %p99 = por %p97, %p98
    %p100 = scmp.ne.s32.totalorder %s86, %s87
    %p101 = scmp.eq.s32.totalorder %s41, 1
    %p102 = por %p100, %p101
    %p104 = scmp.ne.s32.totalorder %s87, %s103
    %p105 = scmp.eq.s32.totalorder %s41, 0
    %p106 = por %p104, %p105
    %s107 = ssub.s32 %s42, %s54
    %p108 = scmp.eq.s32.totalorder %s107, 0
    %s110 = sadd.s32 %s109, 1
    %s111 = scalar_select %p108, %s109, %s110
    %p114 = pneg %p108
    %p115 = scmp.eq.s32.totalorder %s35, 1
    %p116 = por %p114, %p115
    %p117 = scmp.ne.s32.totalorder %s109, %s112
    %p118 = scmp.eq.s32.totalorder %s35, 0
    %p119 = por %p117, %p118
    %p120 = scmp.ne.s32.totalorder %s109, %s112
    %p121 = scmp.eq.s32.totalorder %s40, 1
    %p122 = por %p120, %p121
    %p123 = scmp.ne.s32.totalorder %s112, %s113
    %p124 = scmp.eq.s32.totalorder %s40, 0
    %p125 = por %p123, %p124
    %p126 = scmp.ne.s32.totalorder %s112, %s113
    %p127 = scmp.eq.s32.totalorder %s41, 1
    %p128 = por %p126, %p127
    %p130 = scmp.ne.s32.totalorder %s113, %s129
    %p131 = scmp.eq.s32.totalorder %s41, 0
    %p132 = por %p130, %p131
    %s133 = ssub.s32 %s42, %s54
    %s134 = ssub.s32 %s43, %s50
    %s135 = sor.u32 %s133, %s134
    %p136 = scmp.eq.s32.totalorder %s135, 0
    %s138 = sadd.s32 %s137, 1
    %s139 = scalar_select %p136, %s137, %s138
    %p142 = pneg %p136
    %p143 = scmp.eq.s32.totalorder %s35, 1
    %p144 = por %p142, %p143
    %p145 = scmp.ne.s32.totalorder %s137, %s140
    %p146 = scmp.eq.s32.totalorder %s35, 0
    %p147 = por %p145, %p146
    %p148 = scmp.ne.s32.totalorder %s137, %s140
    %p149 = scmp.eq.s32.totalorder %s40, 1
    %p150 = por %p148, %p149
    %p151 = scmp.ne.s32.totalorder %s140, %s141
    %p152 = scmp.eq.s32.totalorder %s40, 0
    %p153 = por %p151, %p152
    %p154 = scmp.ne.s32.totalorder %s140, %s141
    %p155 = scmp.eq.s32.totalorder %s41, 1
    %p156 = por %p154, %p155
    %p158 = scmp.ne.s32.totalorder %s141, %s157
    %p159 = scmp.eq.s32.totalorder %s41, 0
    %p160 = por %p158, %p159
    %s161 = ssub.s32 %s42, %s54
    %s162 = ssub.s32 %s43, %s50
    %s163 = sor.u32 %s161, %s162
    %p164 = scmp.eq.s32.totalorder %s163, 0
    %s166 = sadd.s32 %s165, 1
    %s167 = scalar_select %p164, %s165, %s166
    %p170 = pneg %p164
    %p171 = scmp.eq.s32.totalorder %s35, 1
    %p172 = por %p170, %p171
    %p173 = scmp.ne.s32.totalorder %s165, %s168
    %p174 = scmp.eq.s32.totalorder %s35, 0
    %p175 = por %p173, %p174
    %p176 = scmp.ne.s32.totalorder %s165, %s168
    %p177 = scmp.eq.s32.totalorder %s40, 1
    %p178 = por %p176, %p177
    %p179 = scmp.ne.s32.totalorder %s168, %s169
    %p180 = scmp.eq.s32.totalorder %s40, 0
    %p181 = por %p179, %p180
    %p182 = scmp.ne.s32.totalorder %s168, %s169
    %p183 = scmp.eq.s32.totalorder %s41, 1
    %p184 = por %p182, %p183
    %p186 = scmp.ne.s32.totalorder %s169, %s185
    %p187 = scmp.eq.s32.totalorder %s41, 0
    %p188 = por %p186, %p187
    %s189 = ssub.s32 %s42, %s54
    %s190 = ssub.s32 %s43, %s50
    %s191 = sor.u32 %s189, %s190
    %p192 = scmp.eq.s32.totalorder %s191, 0
    %s194 = sadd.s32 %s193, 1
    %s195 = scalar_select %p192, %s193, %s194
    %p198 = pneg %p192
    %p199 = scmp.eq.s32.totalorder %s35, 1
    %p200 = por %p198, %p199
    %p201 = scmp.ne.s32.totalorder %s193, %s196
    %p202 = scmp.eq.s32.totalorder %s35, 0
    %p203 = por %p201, %p202
    %p204 = scmp.ne.s32.totalorder %s193, %s196
    %p205 = scmp.eq.s32.totalorder %s40, 1
    %p206 = por %p204, %p205
    %p207 = scmp.ne.s32.totalorder %s196, %s197
    %p208 = scmp.eq.s32.totalorder %s40, 0
    %p209 = por %p207, %p208
    %p210 = scmp.ne.s32.totalorder %s196, %s197
    %p211 = scmp.eq.s32.totalorder %s41, 1
    %p212 = por %p210, %p211
    %p214 = scmp.ne.s32.totalorder %s197, %s213
    %p215 = scmp.eq.s32.totalorder %s41, 0
    %p216 = por %p214, %p215
    %s217 = ssub.s32 %s43, %s50
    %p218 = scmp.eq.s32.totalorder %s217, 0
    %s220 = sadd.s32 %s219, 1
    %s221 = scalar_select %p218, %s219, %s220
    %p224 = pneg %p218
    %p225 = scmp.eq.s32.totalorder %s35, 1
    %p226 = por %p224, %p225
    %p227 = scmp.ne.s32.totalorder %s219, %s222
    %p228 = scmp.eq.s32.totalorder %s35, 0
    %p229 = por %p227, %p228
    %p230 = scmp.ne.s32.totalorder %s219, %s222
    %p231 = scmp.eq.s32.totalorder %s40, 1
    %p232 = por %p230, %p231
    %p233 = scmp.ne.s32.totalorder %s222, %s223
    %p234 = scmp.eq.s32.totalorder %s40, 0
    %p235 = por %p233, %p234
    %p236 = scmp.ne.s32.totalorder %s222, %s223
    %p237 = scmp.eq.s32.totalorder %s41, 1
    %p238 = por %p236, %p237
    %p240 = scmp.ne.s32.totalorder %s223, %s239
    %p241 = scmp.eq.s32.totalorder %s41, 0
    %p242 = por %p240, %p241
    %s243 = ssub.s32 %s43, %s50
    %p244 = scmp.eq.s32.totalorder %s243, 0
    %s246 = sadd.s32 %s245, 1
    %s247 = scalar_select %p244, %s245, %s246
    %p250 = pneg %p244
    %p251 = scmp.eq.s32.totalorder %s35, 1
    %p252 = por %p250, %p251
    %p253 = scmp.ne.s32.totalorder %s245, %s248
    %p254 = scmp.eq.s32.totalorder %s35, 0
    %p255 = por %p253, %p254
    %p256 = scmp.ne.s32.totalorder %s245, %s248
    %p257 = scmp.eq.s32.totalorder %s40, 1
    %p258 = por %p256, %p257
    %p259 = scmp.ne.s32.totalorder %s248, %s249
    %p260 = scmp.eq.s32.totalorder %s40, 0
    %p261 = por %p259, %p260
    %p262 = scmp.ne.s32.totalorder %s248, %s249
    %p263 = scmp.eq.s32.totalorder %s41, 1
    %p264 = por %p262, %p263
    %p266 = scmp.ne.s32.totalorder %s249, %s265
    %p267 = scmp.eq.s32.totalorder %s41, 0
    %p268 = por %p266, %p267
    %s270 = sadd.s32 %s269, 1
    %p273 = scmp.eq.s32.totalorder %s35, 1
    %p274 = scmp.ne.s32.totalorder %s269, %s271
    %p275 = scmp.eq.s32.totalorder %s35, 0
    %p276 = por %p274, %p275
    %p277 = scmp.ne.s32.totalorder %s269, %s271
    %p278 = scmp.eq.s32.totalorder %s40, 1
    %p279 = por %p277, %p278
    %p280 = scmp.ne.s32.totalorder %s271, %s272
    %p281 = scmp.eq.s32.totalorder %s40, 0
    %p282 = por %p280, %p281
    %p283 = scmp.ne.s32.totalorder %s271, %s272
    %p284 = scmp.eq.s32.totalorder %s41, 1
    %p285 = por %p283, %p284
    %p287 = scmp.ne.s32.totalorder %s272, %s286
    %p288 = scmp.eq.s32.totalorder %s41, 0
    %p289 = por %p287, %p288
    %s291 = sadd.s32 %s290, 1
    %p294 = scmp.eq.s32.totalorder %s35, 1
    %p295 = scmp.ne.s32.totalorder %s290, %s292
    %p296 = scmp.eq.s32.totalorder %s35, 0
    %p297 = por %p295, %p296
    %p298 = scmp.ne.s32.totalorder %s290, %s292
    %p299 = scmp.eq.s32.totalorder %s40, 1
    %p300 = por %p298, %p299
    %p301 = scmp.ne.s32.totalorder %s292, %s293
    %p302 = scmp.eq.s32.totalorder %s40, 0
    %p303 = por %p301, %p302
    %p304 = scmp.ne.s32.totalorder %s292, %s293
    %p305 = scmp.eq.s32.totalorder %s41, 1
    %p306 = por %p304, %p305
    %p308 = scmp.ne.s32.totalorder %s293, %s307
    %p309 = scmp.eq.s32.totalorder %s41, 0
    %p310 = por %p308, %p309
    %s312 = sadd.s32 %s311, 1
    %p315 = scmp.eq.s32.totalorder %s35, 1
    %p316 = scmp.ne.s32.totalorder %s311, %s313
    %p317 = scmp.eq.s32.totalorder %s35, 0
    %p318 = por %p316, %p317
    %p319 = scmp.ne.s32.totalorder %s311, %s313
    %p320 = scmp.eq.s32.totalorder %s40, 1
    %p321 = por %p319, %p320
    %p322 = scmp.ne.s32.totalorder %s313, %s314
    %p323 = scmp.eq.s32.totalorder %s40, 0
    %p324 = por %p322, %p323
    %p325 = scmp.ne.s32.totalorder %s313, %s314
    %p326 = scmp.eq.s32.totalorder %s41, 1
    %p327 = por %p325, %p326
    %p329 = scmp.ne.s32.totalorder %s314, %s328
    %p330 = scmp.eq.s32.totalorder %s41, 0
    %p331 = por %p329, %p330
    %s333 = sadd.s32 %s332, 1
    %p336 = scmp.eq.s32.totalorder %s35, 1
    %p337 = scmp.ne.s32.totalorder %s332, %s334
    %p338 = scmp.eq.s32.totalorder %s35, 0
    %p339 = por %p337, %p338
    %p340 = scmp.ne.s32.totalorder %s332, %s334
    %p341 = scmp.eq.s32.totalorder %s40, 1
    %p342 = por %p340, %p341
    %p343 = scmp.ne.s32.totalorder %s334, %s335
    %p344 = scmp.eq.s32.totalorder %s40, 0
    %p345 = por %p343, %p344
    %p346 = scmp.ne.s32.totalorder %s334, %s335
    %p347 = scmp.eq.s32.totalorder %s41, 1
    %p348 = por %p346, %p347
    %p350 = scmp.ne.s32.totalorder %s335, %s349
    %p351 = scmp.eq.s32.totalorder %s41, 0
    %p352 = por %p350, %p351
    %s354 = sadd.s32 %s353, 1
    %p357 = scmp.eq.s32.totalorder %s35, 1
    %p358 = scmp.ne.s32.totalorder %s353, %s355
    %p359 = scmp.eq.s32.totalorder %s35, 0
    %p360 = por %p358, %p359
    %p361 = scmp.ne.s32.totalorder %s353, %s355
    %p362 = scmp.eq.s32.totalorder %s40, 1
    %p363 = por %p361, %p362
    %p364 = scmp.ne.s32.totalorder %s355, %s356
    %p365 = scmp.eq.s32.totalorder %s40, 0
    %p366 = por %p364, %p365
    %p367 = scmp.ne.s32.totalorder %s355, %s356
    %p368 = scmp.eq.s32.totalorder %s41, 1
    %p369 = por %p367, %p368
    %p371 = scmp.ne.s32.totalorder %s356, %s370
    %p372 = scmp.eq.s32.totalorder %s41, 0
    %p373 = por %p371, %p372
    %s375 = sadd.s32 %s374, 1
    %p378 = scmp.eq.s32.totalorder %s35, 1
    %p379 = scmp.ne.s32.totalorder %s374, %s376
    %p380 = scmp.eq.s32.totalorder %s35, 0
    %p381 = por %p379, %p380
    %p382 = scmp.ne.s32.totalorder %s374, %s376
    %p383 = scmp.eq.s32.totalorder %s40, 1
    %p384 = por %p382, %p383
    %p385 = scmp.ne.s32.totalorder %s376, %s377
    %p386 = scmp.eq.s32.totalorder %s40, 0
    %p387 = por %p385, %p386
    %p388 = scmp.ne.s32.totalorder %s376, %s377
    %p389 = scmp.eq.s32.totalorder %s41, 1
    %p390 = por %p388, %p389
    %p392 = scmp.ne.s32.totalorder %s377, %s391
    %p393 = scmp.eq.s32.totalorder %s41, 0
    %p394 = por %p392, %p393
    %s396 = sadd.s32 %s395, 1
    %p399 = scmp.eq.s32.totalorder %s35, 1
    %p400 = scmp.ne.s32.totalorder %s395, %s397
    %p401 = scmp.eq.s32.totalorder %s35, 0
    %p402 = por %p400, %p401
    %p403 = scmp.ne.s32.totalorder %s395, %s397
    %p404 = scmp.eq.s32.totalorder %s40, 1
    %p405 = por %p403, %p404
    %p406 = scmp.ne.s32.totalorder %s397, %s398
    %p407 = scmp.eq.s32.totalorder %s40, 0
    %p408 = por %p406, %p407
    %p409 = scmp.ne.s32.totalorder %s397, %s398
    %p410 = scmp.eq.s32.totalorder %s41, 1
    %p411 = por %p409, %p410
    %p413 = scmp.ne.s32.totalorder %s398, %s412
    %p414 = scmp.eq.s32.totalorder %s41, 0
    %p415 = por %p413, %p414
    %s417 = sadd.s32 %s416, 1
    %p420 = scmp.eq.s32.totalorder %s35, 1
    %p421 = scmp.ne.s32.totalorder %s416, %s418
    %p422 = scmp.eq.s32.totalorder %s35, 0
    %p423 = por %p421, %p422
    %p424 = scmp.ne.s32.totalorder %s416, %s418
    %p425 = scmp.eq.s32.totalorder %s40, 1
    %p426 = por %p424, %p425
    %p427 = scmp.ne.s32.totalorder %s418, %s419
    %p428 = scmp.eq.s32.totalorder %s40, 0
    %p429 = por %p427, %p428
    %p430 = scmp.ne.s32.totalorder %s418, %s419
    %p431 = scmp.eq.s32.totalorder %s41, 1
    %p432 = por %p430, %p431
    %p434 = scmp.ne.s32.totalorder %s419, %s433
    %p435 = scmp.eq.s32.totalorder %s41, 0
    %p436 = por %p434, %p435
    %s438 = sadd.s32 %s437, 1
    %p441 = scmp.eq.s32.totalorder %s35, 1
    %p442 = scmp.ne.s32.totalorder %s437, %s439
    %p443 = scmp.eq.s32.totalorder %s35, 0
    %p444 = por %p442, %p443
    %p445 = scmp.ne.s32.totalorder %s437, %s439
    %p446 = scmp.eq.s32.totalorder %s40, 1
    %p447 = por %p445, %p446
    %p448 = scmp.ne.s32.totalorder %s439, %s440
    %p449 = scmp.eq.s32.totalorder %s40, 0
    %p450 = por %p448, %p449
    %p451 = scmp.ne.s32.totalorder %s439, %s440
    %p452 = scmp.eq.s32.totalorder %s41, 1
    %p453 = por %p451, %p452
    %p455 = scmp.ne.s32.totalorder %s440, %s454
    %p456 = scmp.eq.s32.totalorder %s41, 0
    %p457 = por %p455, %p456
    %s459 = sadd.s32 %s458, 1
    %p462 = scmp.eq.s32.totalorder %s35, 1
    %p463 = scmp.ne.s32.totalorder %s458, %s460
    %p464 = scmp.eq.s32.totalorder %s35, 0
    %p465 = por %p463, %p464
    %p466 = scmp.ne.s32.totalorder %s458, %s460
    %p467 = scmp.eq.s32.totalorder %s40, 1
    %p468 = por %p466, %p467
    %p469 = scmp.ne.s32.totalorder %s460, %s461
    %p470 = scmp.eq.s32.totalorder %s40, 0
    %p471 = por %p469, %p470
    %p472 = scmp.ne.s32.totalorder %s460, %s461
    %p473 = scmp.eq.s32.totalorder %s41, 1
    %p474 = por %p472, %p473
    %p476 = scmp.ne.s32.totalorder %s461, %s475
    %p477 = scmp.eq.s32.totalorder %s41, 0
    %p478 = por %p476, %p477
    %s480 = sadd.s32 %s479, 1
    %p483 = scmp.eq.s32.totalorder %s35, 1
    %p484 = scmp.ne.s32.totalorder %s479, %s481
    %p485 = scmp.eq.s32.totalorder %s35, 0
    %p486 = por %p484, %p485
    %p487 = scmp.ne.s32.totalorder %s479, %s481
    %p488 = scmp.eq.s32.totalorder %s40, 1
    %p489 = por %p487, %p488
    %p490 = scmp.ne.s32.totalorder %s481, %s482
    %p491 = scmp.eq.s32.totalorder %s40, 0
    %p492 = por %p490, %p491
    %p493 = scmp.ne.s32.totalorder %s481, %s482
    %p494 = scmp.eq.s32.totalorder %s41, 1
    %p495 = por %p493, %p494
    %p497 = scmp.ne.s32.totalorder %s482, %s496
    %p498 = scmp.eq.s32.totalorder %s41, 0
    %p499 = por %p497, %p498
    %s501 = sadd.s32 %s500, 1
    %p504 = scmp.eq.s32.totalorder %s35, 1
    %p505 = scmp.ne.s32.totalorder %s500, %s502
    %p506 = scmp.eq.s32.totalorder %s35, 0
    %p507 = por %p505, %p506
    %p508 = scmp.ne.s32.totalorder %s500, %s502
    %p509 = scmp.eq.s32.totalorder %s40, 1
    %p510 = por %p508, %p509
    %p511 = scmp.ne.s32.totalorder %s502, %s503
    %p512 = scmp.eq.s32.totalorder %s40, 0
    %p513 = por %p511, %p512
    %p514 = scmp.ne.s32.totalorder %s502, %s503
    %p515 = scmp.eq.s32.totalorder %s41, 1
    %p516 = por %p514, %p515
    %p518 = scmp.ne.s32.totalorder %s503, %s517
    %p519 = scmp.eq.s32.totalorder %s41, 0
    %p520 = por %p518, %p519
    %s522 = sadd.s32 %s521, 1
    %p525 = scmp.eq.s32.totalorder %s35, 1
    %p526 = scmp.ne.s32.totalorder %s521, %s523
    %p527 = scmp.eq.s32.totalorder %s35, 0
    %p528 = por %p526, %p527
    %p529 = scmp.ne.s32.totalorder %s521, %s523
    %p530 = scmp.eq.s32.totalorder %s40, 1
    %p531 = por %p529, %p530
    %p532 = scmp.ne.s32.totalorder %s523, %s524
    %p533 = scmp.eq.s32.totalorder %s40, 0
    %p534 = por %p532, %p533
    %p535 = scmp.ne.s32.totalorder %s523, %s524
    %p536 = scmp.eq.s32.totalorder %s41, 1
    %p537 = por %p535, %p536
    %p539 = scmp.ne.s32.totalorder %s524, %s538
    %p540 = scmp.eq.s32.totalorder %s41, 0
    %p541 = por %p539, %p540
    %s543 = sadd.s32 %s542, 1
    %p546 = scmp.eq.s32.totalorder %s35, 1
    %p547 = scmp.ne.s32.totalorder %s542, %s544
    %p548 = scmp.eq.s32.totalorder %s35, 0
    %p549 = por %p547, %p548
    %p550 = scmp.ne.s32.totalorder %s542, %s544
    %p551 = scmp.eq.s32.totalorder %s40, 1
    %p552 = por %p550, %p551
    %p553 = scmp.ne.s32.totalorder %s544, %s545
    %p554 = scmp.eq.s32.totalorder %s40, 0
    %p555 = por %p553, %p554
    %p556 = scmp.ne.s32.totalorder %s544, %s545
    %p557 = scmp.eq.s32.totalorder %s41, 1
    %p558 = por %p556, %p557
    %p560 = scmp.ne.s32.totalorder %s545, %s559
    %p561 = scmp.eq.s32.totalorder %s41, 0
    %p562 = por %p560, %p561
    %s564 = sadd.s32 %s563, 1
    %p567 = scmp.eq.s32.totalorder %s35, 1
    %p568 = scmp.ne.s32.totalorder %s563, %s565
    %p569 = scmp.eq.s32.totalorder %s35, 0
    %p570 = por %p568, %p569
    %p571 = scmp.ne.s32.totalorder %s563, %s565
    %p572 = scmp.eq.s32.totalorder %s40, 1
    %p573 = por %p571, %p572
    %p574 = scmp.ne.s32.totalorder %s565, %s566
    %p575 = scmp.eq.s32.totalorder %s40, 0
    %p576 = por %p574, %p575
    %p577 = scmp.ne.s32.totalorder %s565, %s566
    %p578 = scmp.eq.s32.totalorder %s41, 1
    %p579 = por %p577, %p578
    %p581 = scmp.ne.s32.totalorder %s566, %s580
    %p582 = scmp.eq.s32.totalorder %s41, 0
    %p583 = por %p581, %p582
    %s585 = sadd.s32 %s584, 1
    %p588 = scmp.eq.s32.totalorder %s35, 1
    %p589 = scmp.ne.s32.totalorder %s584, %s586
    %p590 = scmp.eq.s32.totalorder %s35, 0
    %p591 = por %p589, %p590
    %p592 = scmp.ne.s32.totalorder %s584, %s586
    %p593 = scmp.eq.s32.totalorder %s40, 1
    %p594 = por %p592, %p593
    %p595 = scmp.ne.s32.totalorder %s586, %s587
    %p596 = scmp.eq.s32.totalorder %s40, 0
    %p597 = por %p595, %p596
    %p598 = scmp.ne.s32.totalorder %s586, %s587
    %p599 = scmp.eq.s32.totalorder %s41, 1
    %p600 = por %p598, %p599
    %p602 = scmp.ne.s32.totalorder %s587, %s601
    %p603 = scmp.eq.s32.totalorder %s41, 0
    %p604 = por %p602, %p603
    %s606 = sadd.s32 %s605, 1
    %p609 = scmp.eq.s32.totalorder %s35, 1
    %p610 = scmp.ne.s32.totalorder %s605, %s607
    %p611 = scmp.eq.s32.totalorder %s35, 0
    %p612 = por %p610, %p611
    %p613 = scmp.ne.s32.totalorder %s605, %s607
    %p614 = scmp.eq.s32.totalorder %s40, 1
    %p615 = por %p613, %p614
    %p616 = scmp.ne.s32.totalorder %s607, %s608
    %p617 = scmp.eq.s32.totalorder %s40, 0
    %p618 = por %p616, %p617
    %p619 = scmp.ne.s32.totalorder %s607, %s608
    %p620 = scmp.eq.s32.totalorder %s41, 1
    %p621 = por %p619, %p620
    %p623 = scmp.ne.s32.totalorder %s608, %s622
    %p624 = scmp.eq.s32.totalorder %s41, 0
    %p625 = por %p623, %p624
    %s627 = sadd.s32 %s626, 1
    %p630 = scmp.eq.s32.totalorder %s35, 1
    %p631 = scmp.ne.s32.totalorder %s626, %s628
    %p632 = scmp.eq.s32.totalorder %s35, 0
    %p633 = por %p631, %p632
    %p634 = scmp.ne.s32.totalorder %s626, %s628
    %p635 = scmp.eq.s32.totalorder %s40, 1
    %p636 = por %p634, %p635
    %p637 = scmp.ne.s32.totalorder %s628, %s629
    %p638 = scmp.eq.s32.totalorder %s40, 0
    %p639 = por %p637, %p638
    %p640 = scmp.ne.s32.totalorder %s628, %s629
    %p641 = scmp.eq.s32.totalorder %s41, 1
    %p642 = por %p640, %p641
    %p644 = scmp.ne.s32.totalorder %s629, %s643
    %p645 = scmp.eq.s32.totalorder %s41, 0
    %p646 = por %p644, %p645
    %s648 = sadd.s32 %s647, 1
    %p651 = scmp.eq.s32.totalorder %s35, 1
    %p652 = scmp.ne.s32.totalorder %s647, %s649
    %p653 = scmp.eq.s32.totalorder %s35, 0
    %p654 = por %p652, %p653
    %p655 = scmp.ne.s32.totalorder %s647, %s649
    %p656 = scmp.eq.s32.totalorder %s40, 1
    %p657 = por %p655, %p656
    %p658 = scmp.ne.s32.totalorder %s649, %s650
    %p659 = scmp.eq.s32.totalorder %s40, 0
    %p660 = por %p658, %p659
    %p661 = scmp.ne.s32.totalorder %s649, %s650
    %p662 = scmp.eq.s32.totalorder %s41, 1
    %p663 = por %p661, %p662
    %p665 = scmp.ne.s32.totalorder %s650, %s664
    %p666 = scmp.eq.s32.totalorder %s41, 0
    %p667 = por %p665, %p666
    %s668 = ssub.s32 %s42, %s54
    %s669 = ssub.s32 %s43, %s50
    %s670 = sor.u32 %s668, %s669
    %p671 = scmp.eq.s32.totalorder %s670, 0
    %s673 = sadd.s32 %s672, 1
    %s674 = scalar_select %p671, %s672, %s673
    %p677 = pneg %p671
    %p678 = scmp.eq.s32.totalorder %s35, 1
    %p679 = por %p677, %p678
    %p680 = scmp.ne.s32.totalorder %s672, %s675
    %p681 = scmp.eq.s32.totalorder %s35, 0
    %p682 = por %p680, %p681
    %p683 = scmp.ne.s32.totalorder %s672, %s675
    %p684 = scmp.eq.s32.totalorder %s40, 1
    %p685 = por %p683, %p684
    %p686 = scmp.ne.s32.totalorder %s675, %s676
    %p687 = scmp.eq.s32.totalorder %s40, 0
    %p688 = por %p686, %p687
    %p689 = scmp.ne.s32.totalorder %s675, %s676
    %p690 = scmp.eq.s32.totalorder %s41, 1
    %p691 = por %p689, %p690
    %p693 = scmp.ne.s32.totalorder %s676, %s692
    %p694 = scmp.eq.s32.totalorder %s41, 0
    %p695 = por %p693, %p694
    %s696 = ssub.s32 %s42, %s54
    %s697 = ssub.s32 %s43, %s50
    %s698 = sor.u32 %s696, %s697
    %p699 = scmp.eq.s32.totalorder %s698, 0
    %s701 = sadd.s32 %s700, 1
    %s702 = scalar_select %p699, %s700, %s701
    %p705 = pneg %p699
    %p706 = scmp.eq.s32.totalorder %s35, 1
    %p707 = por %p705, %p706
    %p708 = scmp.ne.s32.totalorder %s700, %s703
    %p709 = scmp.eq.s32.totalorder %s35, 0
    %p710 = por %p708, %p709
    %p711 = scmp.ne.s32.totalorder %s700, %s703
    %p712 = scmp.eq.s32.totalorder %s40, 1
    %p713 = por %p711, %p712
    %p714 = scmp.ne.s32.totalorder %s703, %s704
    %p715 = scmp.eq.s32.totalorder %s40, 0
    %p716 = por %p714, %p715
    %p717 = scmp.ne.s32.totalorder %s703, %s704
    %p718 = scmp.eq.s32.totalorder %s41, 1
    %p719 = por %p717, %p718
    %p721 = scmp.ne.s32.totalorder %s704, %s720
    %p722 = scmp.eq.s32.totalorder %s41, 0
    %p723 = por %p721, %p722
    %p724 = scmp.le.s32.totalorder 1, %s35
    %p725 = scmp.lt.s32.totalorder %s35, 3
    %p726 = pnand %p724, %p725
    %p727 = pneg %p726
    // Predicated region
    $region9: #{difrint_forward.1} parent=5 // pred_check
      _
    $region10: #{difrint_forward.1} parent=5 // pred_check_branch
      %729 = sbr.rel (%p726) target = $region12
    $region11: #{difrint_forward.1} parent=5 // pred_region
      %s730 = ssub.s32 %s35, 1
      // Predicated region
      $region13: #{difrint_forward.1} parent=11 // pred_check
        %p731 = pneg %p235
      $region14: #{difrint_forward.1} parent=11 // pred_check_branch
        %733 = sbr.rel (%p731) target = $region16
      $region15: #{difrint_forward.1} parent=11 // pred_region
        %s734 = smul.u32 2, %s45
        %p735 = scmp.lt.s32.totalorder %s734, 1
        %s736 = scalar_select %p735, %s734, 1
        %s737 = scalar_lea.vmem %s6, %s736
        %s738 = smul.u32 2, %s45
      $region16: #{difrint_forward.1} parent=11 // pred_fallthru
        _
      // Predicated region
      $region17: #{difrint_forward.1} parent=11 // pred_check
        %p739 = pneg %p261
      $region18: #{difrint_forward.1} parent=11 // pred_check_branch
        %741 = sbr.rel (%p739) target = $region20
      $region19: #{difrint_forward.1} parent=11 // pred_region
        %s742 = smul.u32 2, %s45
        %p743 = scmp.lt.s32.totalorder %s742, 1
        %s744 = scalar_select %p743, %s742, 1
        %s745 = scalar_lea.vmem %s7, %s744
        %s746 = smul.u32 2, %s45
      $region20: #{difrint_forward.1} parent=11 // pred_fallthru
        _
      // Predicated region
      $region21: #{difrint_forward.1} parent=11 // pred_check
        %p747 = pneg %p282
      $region22: #{difrint_forward.1} parent=11 // pred_check_branch
        %749 = sbr.rel (%p747) target = $region24
      $region23: #{difrint_forward.1} parent=11 // pred_region
        _
      $region24: #{difrint_forward.1} parent=11 // pred_fallthru
        _
      // Predicated region
      $region25: #{difrint_forward.1} parent=11 // pred_check
        %p750 = pneg %p303
      $region26: #{difrint_forward.1} parent=11 // pred_check_branch
        %752 = sbr.rel (%p750) target = $region28
      $region27: #{difrint_forward.1} parent=11 // pred_region
        _
      $region28: #{difrint_forward.1} parent=11 // pred_fallthru
        _
      // Predicated region
      $region29: #{difrint_forward.1} parent=11 // pred_check
        %p753 = pneg %p324
      $region30: #{difrint_forward.1} parent=11 // pred_check_branch
        %755 = sbr.rel (%p753) target = $region32
      $region31: #{difrint_forward.1} parent=11 // pred_region
        _
      $region32: #{difrint_forward.1} parent=11 // pred_fallthru
        _
      // Predicated region
      $region33: #{difrint_forward.1} parent=11 // pred_check
        %p756 = pneg %p345
      $region34: #{difrint_forward.1} parent=11 // pred_check_branch
        %758 = sbr.rel (%p756) target = $region36
      $region35: #{difrint_forward.1} parent=11 // pred_region
        _
      $region36: #{difrint_forward.1} parent=11 // pred_fallthru
        _
      // Predicated region
      $region37: #{difrint_forward.1} parent=11 // pred_check
        %p759 = pneg %p366
      $region38: #{difrint_forward.1} parent=11 // pred_check_branch
        %761 = sbr.rel (%p759) target = $region40
      $region39: #{difrint_forward.1} parent=11 // pred_region
        _
      $region40: #{difrint_forward.1} parent=11 // pred_fallthru
        _
      // Predicated region
      $region41: #{difrint_forward.1} parent=11 // pred_check
        %p762 = pneg %p387
      $region42: #{difrint_forward.1} parent=11 // pred_check_branch
        %764 = sbr.rel (%p762) target = $region44
      $region43: #{difrint_forward.1} parent=11 // pred_region
        _
      $region44: #{difrint_forward.1} parent=11 // pred_fallthru
        _
      // Predicated region
      $region45: #{difrint_forward.1} parent=11 // pred_check
        %p765 = pneg %p408
      $region46: #{difrint_forward.1} parent=11 // pred_check_branch
        %767 = sbr.rel (%p765) target = $region48
      $region47: #{difrint_forward.1} parent=11 // pred_region
        _
      $region48: #{difrint_forward.1} parent=11 // pred_fallthru
        _
      // Predicated region
      $region49: #{difrint_forward.1} parent=11 // pred_check
        %p768 = pneg %p429
      $region50: #{difrint_forward.1} parent=11 // pred_check_branch
        %770 = sbr.rel (%p768) target = $region52
      $region51: #{difrint_forward.1} parent=11 // pred_region
        _
      $region52: #{difrint_forward.1} parent=11 // pred_fallthru
        _
      // Predicated region
      $region53: #{difrint_forward.1} parent=11 // pred_check
        %p771 = pneg %p450
      $region54: #{difrint_forward.1} parent=11 // pred_check_branch
        %773 = sbr.rel (%p771) target = $region56
      $region55: #{difrint_forward.1} parent=11 // pred_region
        _
      $region56: #{difrint_forward.1} parent=11 // pred_fallthru
        _
      // Predicated region
      $region57: #{difrint_forward.1} parent=11 // pred_check
        %p774 = pneg %p471
      $region58: #{difrint_forward.1} parent=11 // pred_check_branch
        %776 = sbr.rel (%p774) target = $region60
      $region59: #{difrint_forward.1} parent=11 // pred_region
        _
      $region60: #{difrint_forward.1} parent=11 // pred_fallthru
        _
      // Predicated region
      $region61: #{difrint_forward.1} parent=11 // pred_check
        %p777 = pneg %p492
      $region62: #{difrint_forward.1} parent=11 // pred_check_branch
        %779 = sbr.rel (%p777) target = $region64
      $region63: #{difrint_forward.1} parent=11 // pred_region
        _
      $region64: #{difrint_forward.1} parent=11 // pred_fallthru
        _
      // Predicated region
      $region65: #{difrint_forward.1} parent=11 // pred_check
        %p780 = pneg %p513
      $region66: #{difrint_forward.1} parent=11 // pred_check_branch
        %782 = sbr.rel (%p780) target = $region68
      $region67: #{difrint_forward.1} parent=11 // pred_region
        _
      $region68: #{difrint_forward.1} parent=11 // pred_fallthru
        _
      // Predicated region
      $region69: #{difrint_forward.1} parent=11 // pred_check
        %p783 = pneg %p534
      $region70: #{difrint_forward.1} parent=11 // pred_check_branch
        %785 = sbr.rel (%p783) target = $region72
      $region71: #{difrint_forward.1} parent=11 // pred_region
        _
      $region72: #{difrint_forward.1} parent=11 // pred_fallthru
        _
      // Predicated region
      $region73: #{difrint_forward.1} parent=11 // pred_check
        %p786 = pneg %p555
      $region74: #{difrint_forward.1} parent=11 // pred_check_branch
        %788 = sbr.rel (%p786) target = $region76
      $region75: #{difrint_forward.1} parent=11 // pred_region
        _
      $region76: #{difrint_forward.1} parent=11 // pred_fallthru
        _
      // Predicated region
      $region77: #{difrint_forward.1} parent=11 // pred_check
        %p789 = pneg %p576
      $region78: #{difrint_forward.1} parent=11 // pred_check_branch
        %791 = sbr.rel (%p789) target = $region80
      $region79: #{difrint_forward.1} parent=11 // pred_region
        _
      $region80: #{difrint_forward.1} parent=11 // pred_fallthru
        _
      // Predicated region
      $region81: #{difrint_forward.1} parent=11 // pred_check
        %p792 = pneg %p597
      $region82: #{difrint_forward.1} parent=11 // pred_check_branch
        %794 = sbr.rel (%p792) target = $region84
      $region83: #{difrint_forward.1} parent=11 // pred_region
        _
      $region84: #{difrint_forward.1} parent=11 // pred_fallthru
        _
      // Predicated region
      $region85: #{difrint_forward.1} parent=11 // pred_check
        %p795 = pneg %p618
      $region86: #{difrint_forward.1} parent=11 // pred_check_branch
        %797 = sbr.rel (%p795) target = $region88
      $region87: #{difrint_forward.1} parent=11 // pred_region
        _
      $region88: #{difrint_forward.1} parent=11 // pred_fallthru
        _
      // Predicated region
      $region89: #{difrint_forward.1} parent=11 // pred_check
        %p798 = pneg %p639
      $region90: #{difrint_forward.1} parent=11 // pred_check_branch
        %800 = sbr.rel (%p798) target = $region92
      $region91: #{difrint_forward.1} parent=11 // pred_region
        _
      $region92: #{difrint_forward.1} parent=11 // pred_fallthru
        _
      // Predicated region
      $region93: #{difrint_forward.1} parent=11 // pred_check
        %p801 = pneg %p660
      $region94: #{difrint_forward.1} parent=11 // pred_check_branch
        %803 = sbr.rel (%p801) target = $region96
      $region95: #{difrint_forward.1} parent=11 // pred_region
        _
      $region96: #{difrint_forward.1} parent=11 // pred_fallthru
        _
    $region12: #{difrint_forward.1} parent=5 // pred_fallthru
      _
    %p804 = scmp.lt.s32.totalorder %s35, 2
    // Predicated region
    $region97: #{difrint_forward.1} parent=5 // pred_check
      %p805 = pneg %p804
    $region98: #{difrint_forward.1} parent=5 // pred_check_branch
      %807 = sbr.rel (%p805) target = $region100
    $region99: #{difrint_forward.1} parent=5 // pred_region
      // Predicated region
      $region101: #{difrint_forward.1} parent=99 // pred_check
        %p808 = pneg %p67
      $region102: #{difrint_forward.1} parent=99 // pred_check_branch
        %810 = sbr.rel (%p808) target = $region104
      $region103: #{difrint_forward.1} parent=99 // pred_region
        %p811 = scmp.lt.s32.totalorder %s42, 1
        %s812 = scalar_select %p811, %s42, 1
        %s813 = smul.addr %s812, 6
        %s814 = smul.addr %s813, 4
        %s815 = scalar_lea.vmem %s0, %s814
      $region104: #{difrint_forward.1} parent=99 // pred_fallthru
        _
      // Predicated region
      $region105: #{difrint_forward.1} parent=99 // pred_check
        %p816 = pneg %p93
      $region106: #{difrint_forward.1} parent=99 // pred_check_branch
        %818 = sbr.rel (%p816) target = $region108
      $region107: #{difrint_forward.1} parent=99 // pred_region
        %p819 = scmp.lt.s32.totalorder %s42, 1
        %s820 = scalar_select %p819, %s42, 1
        %s821 = smul.addr %s820, 6
        %s822 = smul.addr %s821, 4
        %s823 = scalar_lea.vmem %s1, %s822
      $region108: #{difrint_forward.1} parent=99 // pred_fallthru
        _
      // Predicated region
      $region109: #{difrint_forward.1} parent=99 // pred_check
        %p824 = pneg %p119
      $region110: #{difrint_forward.1} parent=99 // pred_check_branch
        %826 = sbr.rel (%p824) target = $region112
      $region111: #{difrint_forward.1} parent=99 // pred_region
        %p827 = scmp.lt.s32.totalorder %s42, 1
        %s828 = scalar_select %p827, %s42, 1
        %s829 = smul.addr %s828, 6
        %s830 = smul.addr %s829, 4
        %s831 = scalar_lea.vmem %s2, %s830
      $region112: #{difrint_forward.1} parent=99 // pred_fallthru
        _
      // Predicated region
      $region113: #{difrint_forward.1} parent=99 // pred_check
        %p832 = pneg %p147
      $region114: #{difrint_forward.1} parent=99 // pred_check_branch
        %834 = sbr.rel (%p832) target = $region116
      $region115: #{difrint_forward.1} parent=99 // pred_region
        %s835 = smul.u32 2, %s43
        %p836 = scmp.lt.s32.totalorder %s42, 1
        %s837 = scalar_select %p836, %s42, 1
        %p838 = scmp.lt.s32.totalorder %s835, 1
        %s839 = scalar_select %p838, %s835, 1
        %s840 = smul.addr %s837, 2
        %s841 = sadd.s32 %s839, %s840
        %s842 = smul.addr %s841, 2
        %s843 = scalar_lea.vmem %s3, %s842
        %s844 = smul.u32 2, %s43
      $region116: #{difrint_forward.1} parent=99 // pred_fallthru
        _
      // Predicated region
      $region117: #{difrint_forward.1} parent=99 // pred_check
        %p845 = pneg %p175
      $region118: #{difrint_forward.1} parent=99 // pred_check_branch
        %847 = sbr.rel (%p845) target = $region120
      $region119: #{difrint_forward.1} parent=99 // pred_region
        %s848 = smul.u32 2, %s43
        %p849 = scmp.lt.s32.totalorder %s42, 1
        %s850 = scalar_select %p849, %s42, 1
        %p851 = scmp.lt.s32.totalorder %s848, 1
        %s852 = scalar_select %p851, %s848, 1
        %s853 = smul.addr %s850, 2
        %s854 = sadd.s32 %s852, %s853
        %s855 = smul.addr %s854, 2
        %s856 = scalar_lea.vmem %s4, %s855
        %s857 = smul.u32 2, %s43
      $region120: #{difrint_forward.1} parent=99 // pred_fallthru
        _
      // Predicated region
      $region121: #{difrint_forward.1} parent=99 // pred_check
        %p858 = pneg %p203
      $region122: #{difrint_forward.1} parent=99 // pred_check_branch
        %860 = sbr.rel (%p858) target = $region124
      $region123: #{difrint_forward.1} parent=99 // pred_region
        %s861 = smul.u32 2, %s43
        %p862 = scmp.lt.s32.totalorder %s42, 1
        %s863 = scalar_select %p862, %s42, 1
        %p864 = scmp.lt.s32.totalorder %s861, 1
        %s865 = scalar_select %p864, %s861, 1
        %s866 = smul.addr %s863, 2
        %s867 = sadd.s32 %s865, %s866
        %s868 = smul.addr %s867, 2
        %s869 = scalar_lea.vmem %s5, %s868
        %s870 = smul.u32 2, %s43
      $region124: #{difrint_forward.1} parent=99 // pred_fallthru
        _
    $region100: #{difrint_forward.1} parent=5 // pred_fallthru
      _
    %p871 = scmp.le.s32.totalorder 1, %s35
    %p872 = scmp.lt.s32.totalorder %s35, 3
    %p873 = pnand %p871, %p872
    %p874 = pneg %p873
    // Predicated region
    $region125: #{difrint_forward.1} parent=5 // pred_check
      _
    $region126: #{difrint_forward.1} parent=5 // pred_check_branch
      %876 = sbr.rel (%p873) target = $region128
    $region127: #{difrint_forward.1} parent=5 // pred_region
      %s877 = ssub.s32 %s35, 1
      %p878 = scmp.lt.s32.totalorder %s44, 1
      %s879 = scalar_select %p878, %s44, 1
      %s880 = smul.addr %s879, 6
      %s881 = smul.addr %s880, 4
      %s882 = scalar_lea.vmem %s0, %s881
      %p883 = pneg %p73
      %p884 = pneg %p70
      %p885 = scmp.lt.s32.totalorder %s44, 1
      %s886 = scalar_select %p885, %s44, 1
      %s887 = smul.addr %s886, 6
      %s888 = smul.addr %s887, 4
      %s889 = scalar_lea.vmem %s1, %s888
      %p890 = pneg %p99
      %p891 = pneg %p96
      %p892 = scmp.lt.s32.totalorder %s44, 1
      %s893 = scalar_select %p892, %s44, 1
      %s894 = smul.addr %s893, 6
      %s895 = smul.addr %s894, 4
      %s896 = scalar_lea.vmem %s2, %s895
      %p897 = pneg %p125
      %p898 = pneg %p122
      %s899 = smul.u32 2, %s45
      %p900 = scmp.lt.s32.totalorder %s44, 1
      %s901 = scalar_select %p900, %s44, 1
      %p902 = scmp.lt.s32.totalorder %s899, 1
      %s903 = scalar_select %p902, %s899, 1
      %s904 = smul.addr %s901, 2
      %s905 = sadd.s32 %s903, %s904
      %s906 = smul.addr %s905, 2
      %s907 = scalar_lea.vmem %s3, %s906
      %p908 = pneg %p153
      %p909 = pneg %p150
      %s910 = smul.u32 2, %s45
      %p911 = scmp.lt.s32.totalorder %s44, 1
      %s912 = scalar_select %p911, %s44, 1
      %p913 = scmp.lt.s32.totalorder %s910, 1
      %s914 = scalar_select %p913, %s910, 1
      %s915 = smul.addr %s912, 2
      %s916 = sadd.s32 %s914, %s915
      %s917 = smul.addr %s916, 2
      %s918 = scalar_lea.vmem %s4, %s917
      %p919 = pneg %p181
      %p920 = pneg %p178
      %s921 = smul.u32 2, %s45
      %p922 = scmp.lt.s32.totalorder %s44, 1
      %s923 = scalar_select %p922, %s44, 1
      %p924 = scmp.lt.s32.totalorder %s921, 1
      %s925 = scalar_select %p924, %s921, 1
      %s926 = smul.addr %s923, 2
      %s927 = sadd.s32 %s925, %s926
      %s928 = smul.addr %s927, 2
      %s929 = scalar_lea.vmem %s5, %s928
      %p930 = pneg %p209
      %p931 = pneg %p206
      %s932 = smul.u32 2, %s45
      %p933 = scmp.lt.s32.totalorder %s932, 1
      %s934 = scalar_select %p933, %s932, 1
      %s935 = scalar_lea.vmem %s6, %s934
      %p936 = pneg %p235
      %p937 = pneg %p232
      %s938 = smul.u32 2, %s45
      %p939 = scmp.lt.s32.totalorder %s938, 1
      %s940 = scalar_select %p939, %s938, 1
      %s941 = scalar_lea.vmem %s7, %s940
      %p942 = pneg %p261
      %p943 = pneg %p258
      %p944 = pneg %p282
      %p945 = pneg %p279
      %p946 = pneg %p303
      %p947 = pneg %p300
      %p948 = pneg %p324
      %p949 = pneg %p321
      %p950 = pneg %p345
      %p951 = pneg %p342
      %p952 = pneg %p366
      %p953 = pneg %p363
      %p954 = pneg %p387
      %p955 = pneg %p384
      %p956 = pneg %p408
      %p957 = pneg %p405
      %p958 = pneg %p429
      %p959 = pneg %p426
      %p960 = pneg %p450
      %p961 = pneg %p447
      %p962 = pneg %p471
      %p963 = pneg %p468
      %p964 = pneg %p492
      %p965 = pneg %p489
      %p966 = pneg %p513
      %p967 = pneg %p510
      %p968 = pneg %p534
      %p969 = pneg %p531
      %p970 = pneg %p555
      %p971 = pneg %p552
      %p972 = pneg %p576
      %p973 = pneg %p573
      %p974 = pneg %p597
      %p975 = pneg %p594
      %p976 = pneg %p618
      %p977 = pneg %p615
      %p978 = pneg %p639
      %p979 = pneg %p636
      %p980 = pneg %p660
      %p981 = pneg %p657
      %p982 = pneg %p688
      %p983 = pneg %p685
      %s984 = smul.u32 2, %s45
      %p985 = scmp.lt.s32.totalorder %s44, 1
      %s986 = scalar_select %p985, %s44, 1
      %p987 = scmp.lt.s32.totalorder %s984, 1
      %s988 = scalar_select %p987, %s984, 1
      %s989 = smul.addr %s986, 2
      %s990 = sadd.s32 %s988, %s989
      %s991 = smul.addr %s990, 4
      %s992 = scalar_lea.vmem %s27, %s991
      %p993 = pneg %p716
      %p994 = pneg %p713
      %s995 = smul.u32 2, %s45
      %p996 = scmp.lt.s32.totalorder %s44, 1
      %s997 = scalar_select %p996, %s44, 1
      %p998 = scmp.lt.s32.totalorder %s995, 1
      %s999 = scalar_select %p998, %s995, 1
      %s1000 = smul.addr %s997, 2
      %s1001 = sadd.s32 %s999, %s1000
      %s1002 = smul.addr %s1001, 4
      %s1003 = scalar_lea.vmem %s28, %s1002
      %p1004 = scmp.lt.s32.totalorder %s44, 1
      %s1005 = scalar_select %p1004, %s44, 1
      %s1006 = smul.addr %s1005, 6
      %s1007 = smul.addr %s1006, 4
      %s1008 = scalar_lea.vmem %s0, %s1007
      %p1009 = scmp.lt.s32.totalorder %s44, 1
      %s1010 = scalar_select %p1009, %s44, 1
      %s1011 = smul.addr %s1010, 6
      %s1012 = smul.addr %s1011, 4
      %s1013 = scalar_lea.vmem %s1, %s1012
      %p1014 = scmp.lt.s32.totalorder %s44, 1
      %s1015 = scalar_select %p1014, %s44, 1
      %s1016 = smul.addr %s1015, 6
      %s1017 = smul.addr %s1016, 4
      %s1018 = scalar_lea.vmem %s2, %s1017
      %s1019 = smul.u32 2, %s45
      %p1020 = scmp.lt.s32.totalorder %s44, 1
      %s1021 = scalar_select %p1020, %s44, 1
      %p1022 = scmp.lt.s32.totalorder %s1019, 1
      %s1023 = scalar_select %p1022, %s1019, 1
      %s1024 = smul.addr %s1021, 2
      %s1025 = sadd.s32 %s1023, %s1024
      %s1026 = smul.addr %s1025, 2
      %s1027 = scalar_lea.vmem %s3, %s1026
      %s1028 = smul.u32 2, %s45
      %s1029 = smul.u32 2, %s45
      %p1030 = scmp.lt.s32.totalorder %s44, 1
      %s1031 = scalar_select %p1030, %s44, 1
      %p1032 = scmp.lt.s32.totalorder %s1029, 1
      %s1033 = scalar_select %p1032, %s1029, 1
      %s1034 = smul.addr %s1031, 2
      %s1035 = sadd.s32 %s1033, %s1034
      %s1036 = smul.addr %s1035, 2
      %s1037 = scalar_lea.vmem %s4, %s1036
      %s1038 = smul.u32 2, %s45
      %s1039 = smul.u32 2, %s45
      %p1040 = scmp.lt.s32.totalorder %s44, 1
      %s1041 = scalar_select %p1040, %s44, 1
      %p1042 = scmp.lt.s32.totalorder %s1039, 1
      %s1043 = scalar_select %p1042, %s1039, 1
      %s1044 = smul.addr %s1041, 2
      %s1045 = sadd.s32 %s1043, %s1044
      %s1046 = smul.addr %s1045, 2
      %s1047 = scalar_lea.vmem %s5, %s1046
      %s1048 = smul.u32 2, %s45
      %s1049 = smul.u32 2, %s45
      %p1050 = scmp.lt.s32.totalorder %s1049, 1
      %s1051 = scalar_select %p1050, %s1049, 1
      %s1052 = scalar_lea.vmem %s6, %s1051
      %s1053 = smul.u32 2, %s45
      %s1054 = smul.u32 2, %s45
      %p1055 = scmp.lt.s32.totalorder %s1054, 1
      %s1056 = scalar_select %p1055, %s1054, 1
      %s1057 = scalar_lea.vmem %s7, %s1056
      %s1058 = smul.u32 2, %s45
      %s1059 = smul.u32 2, %s45
      %p1060 = scmp.lt.s32.totalorder %s44, 1
      %s1061 = scalar_select %p1060, %s44, 1
      %p1062 = scmp.lt.s32.totalorder %s1059, 1
      %s1063 = scalar_select %p1062, %s1059, 1
      %s1064 = smul.addr %s1061, 2
      %s1065 = sadd.s32 %s1063, %s1064
      %s1066 = smul.addr %s1065, 4
      %s1067 = scalar_lea.vmem %s27, %s1066
      %s1068 = smul.u32 2, %s45
      %s1069 = smul.u32 2, %s45
      %p1070 = scmp.lt.s32.totalorder %s44, 1
      %s1071 = scalar_select %p1070, %s44, 1
      %p1072 = scmp.lt.s32.totalorder %s1069, 1
      %s1073 = scalar_select %p1072, %s1069, 1
      %s1074 = smul.addr %s1071, 2
      %s1075 = sadd.s32 %s1073, %s1074
      %s1076 = smul.addr %s1075, 4
      %s1077 = scalar_lea.vmem %s28, %s1076
      %s1078 = smul.u32 2, %s45
      %v1082 = vld [vmem:[%s1052] sm:$0x3]
      %v1083 = vld [vmem:[%s1057] sm:$0x3]
      %v1084 = vld [vmem:[%s1027] sm:$0xf]
      %v1085 = vld [vmem:[%s1037] sm:$0xf]
      %v1086 = vld [vmem:[%s1047] sm:$0xf]
      %v1087 = vld [vmem:[%s1008] sm:$0xf]
      %v1088 = vld [vmem:[%s1008 + $0x4] sm:$0xf]
      %v1089 = vld [vmem:[%s1008 + $0x8] sm:$0xf]
      %v1090 = vld [vmem:[%s1008 + $0xc] sm:$0xf]
      %v1091 = vld [vmem:[%s1008 + $0x10] sm:$0xf]
      %v1092 = vld [vmem:[%s1008 + $0x14] sm:$0xf]
      %v1093 = vld [vmem:[%s1013] sm:$0xf]
      %v1094 = vld [vmem:[%s1013 + $0x4] sm:$0xf]
      %v1095 = vld [vmem:[%s1013 + $0x8] sm:$0xf]
      %v1096 = vld [vmem:[%s1013 + $0xc] sm:$0xf]
      %v1097 = vld [vmem:[%s1013 + $0x10] sm:$0xf]
      %v1098 = vld [vmem:[%s1013 + $0x14] sm:$0xf]
      %v1099 = vld [vmem:[%s1018] sm:$0xf]
      %v1100 = vld [vmem:[%s1018 + $0x4] sm:$0xf]
      %v1101 = vld [vmem:[%s1018 + $0x8] sm:$0xf]
      %v1102 = vld [vmem:[%s1018 + $0xc] sm:$0xf]
      %v1103 = vld [vmem:[%s1018 + $0x10] sm:$0xf]
      %v1104 = vld [vmem:[%s1018 + $0x14] sm:$0xf]
      %v1105 = vlaneseq
      %v1106 = vshrl.u32 %v1105, 7
      %v1107 = vadd.s32 %v1106, 8
      %v1108 = vadd.bf16 %v1084, 1065369472
      %v1109 = vmul.bf16 %v1108, 1056980736
      %v1110 = vadd.bf16 %v1085, 1065369472
      %v1111 = vmul.bf16 %v1110, 1056980736
      %v1112 = vld [vmem:[%s8] sm:$0xf]
      %v1113 = vld [vmem:[%s8 + $0x4] sm:$0xf]
      %v1114 = vld [vmem:[%s8 + $0x8] sm:$0xf]
      %v1115 = vld [vmem:[%s8 + $0xc] sm:$0xf]
      %v1116 = vld [vmem:[%s9] sm:$0xf]
      %v1117 = vld [vmem:[%s9 + $0x4] sm:$0xf]
      %v1118 = vld [vmem:[%s9 + $0x8] sm:$0xf]
      %v1119 = vld [vmem:[%s9 + $0xc] sm:$0xf]
      %v1124 = vunpack.c.l.b16 %v1116
      %v1125 = vunpack.c.l.b16 %v1117
      %v1126 = vunpack.c.l.b16 %v1118
      %v1127 = vunpack.c.l.b16 %v1119
      %v1128 = vpack.c.b16 %v1125, %v1124
      %v1129 = vpack.c.b16 %v1127, %v1126
      %v1132 = vunpack.c.l.s4 1983009808
      %v1133 = vunpack.c.0.s8 %v1132
      %v1134 = vlaneseq
      %v1135 = vshrl.u32 %v1134, 7
      %v1136 = vsub.s32 %v1133, %v1135
      %v1137 = vrot.slane %v1111, %v1136
      %v1138 = vcombine.high %v1137, %v1137
      %vm1139 = vcmask 23552
      %v1141 = vsel %vm1139, %v1128, 0
      %v1144 = vsel %vm1139, %v1129, 0
      %vm1146 = vcmask 1040384
      %vm1147 = vcmask 1041408
      %v1148 = vsel %vm1146, 4294967295, 65535
      %v1149 = vsel %vm1147, %v1148, 0
      %v1151 = vand.u32 %v1137, %v1149
      %v1154 = vand.u32 %v1138, %v1149
      %1156 = vmatprep.subr.bf16.mxu0 %v1154
      %1157 = vmatpush1.bf16.msra.mxu0 %v1151
      %1158 = vmatprep.subr.bf16.mxu0 0
      %1159 = vmatpush1.bf16.msra.mxu0 0
      %1160 = vmatprep.subr.bf16.mxu0 0
      %1161 = vmatpush1.bf16.msra.mxu0 0
      %1162 = vmatprep.subr.bf16.mxu0 0
      %1163 = vmatpush1.bf16.msra.mxu0 0
      %1164 = vmatprep.subr.bf16.mxu0 0
      %1165 = vmatpush1.bf16.msra.mxu0 0
      %1166 = vmatprep.subr.bf16.mxu0 0
      %1167 = vmatpush1.bf16.msra.mxu0 0
      %1168 = vmatprep.subr.bf16.mxu0 0
      %1169 = vmatpush1.bf16.msra.mxu0 0
      %1170 = vmatprep.subr.bf16.mxu0 0
      %1171 = vmatpush1.bf16.msra.mxu0 0
      %1172 = vmatprep.subr.bf16.mxu0 0
      %1173 = vmatpush1.bf16.msra.mxu0 0
      %1174 = vmatprep.subr.bf16.mxu0 0
      %1175 = vmatpush1.bf16.msra.mxu0 0
      %1176 = vmatprep.subr.bf16.mxu0 0
      %1177 = vmatpush1.bf16.msra.mxu0 0
      %1178 = vmatprep.subr.bf16.mxu0 0
      %1179 = vmatpush1.bf16.msra.mxu0 0
      %1180 = vmatprep.subr.bf16.mxu0 0
      %1181 = vmatpush1.bf16.msra.mxu0 0
      %1182 = vmatprep.subr.bf16.mxu0 0
      %1183 = vmatpush1.bf16.msra.mxu0 0
      %1184 = vmatprep.subr.bf16.mxu0 0
      %1185 = vmatpush1.bf16.msra.mxu0 0
      %1186 = vmatprep.subr.bf16.mxu0 0
      %1187 = vmatpush1.bf16.msra.mxu0 0
      %1188 = vmatprep.mubr.bf16.mxu0 0
      %1189 = vmatmul.mubr.bf16.gmra.mrb[0].mxu0 %v1141
      %v1190 = vpop.f32.mrb[0].mxu0
      %v1191 = vadd.f32 0.0, %v1190
      %v1192 = vpop.f32.mrb[0].mxu0
      %v1193 = vadd.f32 0.0, %v1192
      %v1194 = vpop.f32.mrb[0].mxu0
      %v1195 = vadd.f32 0.0, %v1194
      %v1196 = vpop.f32.mrb[0].mxu0
      %v1197 = vadd.f32 0.0, %v1196
      %1198 = vmatprep.mubr.bf16.mxu0 0
      %1199 = vmatmul.mubr.bf16.gmra.mrb[0].mxu0 %v1144
      %v1200 = vpop.f32.mrb[0].mxu0
      %v1201 = vadd.f32 0.0, %v1200
      %v1202 = vpop.f32.mrb[0].mxu0
      %v1203 = vadd.f32 0.0, %v1202
      %v1204 = vpop.f32.mrb[0].mxu0
      %v1205 = vadd.f32 0.0, %v1204
      %v1206 = vpop.f32.mrb[0].mxu0
      %v1207 = vadd.f32 0.0, %v1206
      %1208 = vdwg.mxu0
      %v1213 = vunpack.c.l.b16 %v1112
      %v1214 = vunpack.c.l.b16 %v1113
      %v1215 = vunpack.c.l.b16 %v1114
      %v1216 = vunpack.c.l.b16 %v1115
      %v1217 = vpack.c.b16 %v1214, %v1213
      %v1218 = vpack.c.b16 %v1216, %v1215
      %v1221 = vunpack.c.l.s4 1983009808
      %v1222 = vunpack.c.0.s8 %v1221
      %v1223 = vlaneseq
      %v1224 = vshrl.u32 %v1223, 7
      %v1225 = vsub.s32 %v1222, %v1224
      %v1226 = vrot.slane %v1109, %v1225
      %v1227 = vcombine.high %v1226, %v1226
      %v1229 = vsel %vm1139, %v1217, 0
      %v1232 = vsel %vm1139, %v1218, 0
      %v1235 = vand.u32 %v1226, %v1149
      %v1238 = vand.u32 %v1227, %v1149
      %1240 = vmatprep.subr.bf16.mxu0 %v1238
      %1241 = vmatpush1.bf16.msra.mxu0 %v1235
      %1242 = vmatprep.subr.bf16.mxu0 0
      %1243 = vmatpush1.bf16.msra.mxu0 0
      %1244 = vmatprep.subr.bf16.mxu0 0
      %1245 = vmatpush1.bf16.msra.mxu0 0
      %1246 = vmatprep.subr.bf16.mxu0 0
      %1247 = vmatpush1.bf16.msra.mxu0 0
      %1248 = vmatprep.subr.bf16.mxu0 0
      %1249 = vmatpush1.bf16.msra.mxu0 0
      %1250 = vmatprep.subr.bf16.mxu0 0
      %1251 = vmatpush1.bf16.msra.mxu0 0
      %1252 = vmatprep.subr.bf16.mxu0 0
      %1253 = vmatpush1.bf16.msra.mxu0 0
      %1254 = vmatprep.subr.bf16.mxu0 0
      %1255 = vmatpush1.bf16.msra.mxu0 0
      %1256 = vmatprep.subr.bf16.mxu0 0
      %1257 = vmatpush1.bf16.msra.mxu0 0
      %1258 = vmatprep.subr.bf16.mxu0 0
      %1259 = vmatpush1.bf16.msra.mxu0 0
      %1260 = vmatprep.subr.bf16.mxu0 0
      %1261 = vmatpush1.bf16.msra.mxu0 0
      %1262 = vmatprep.subr.bf16.mxu0 0
      %1263 = vmatpush1.bf16.msra.mxu0 0
      %1264 = vmatprep.subr.bf16.mxu0 0
      %1265 = vmatpush1.bf16.msra.mxu0 0
      %1266 = vmatprep.subr.bf16.mxu0 0
      %1267 = vmatpush1.bf16.msra.mxu0 0
      %1268 = vmatprep.subr.bf16.mxu0 0
      %1269 = vmatpush1.bf16.msra.mxu0 0
      %1270 = vmatprep.subr.bf16.mxu0 0
      %1271 = vmatpush1.bf16.msra.mxu0 0
      %1272 = vmatprep.mubr.bf16.mxu0 0
      %1273 = vmatmul.mubr.bf16.gmra.mrb[0].mxu0 %v1229
      %v1274 = vpop.f32.mrb[0].mxu0
      %v1275 = vadd.f32 %v1191, %v1274
      %v1276 = vpop.f32.mrb[0].mxu0
      %v1277 = vadd.f32 %v1193, %v1276
      %v1278 = vpop.f32.mrb[0].mxu0
      %v1279 = vadd.f32 %v1195, %v1278
      %v1280 = vpop.f32.mrb[0].mxu0
      %v1281 = vadd.f32 %v1197, %v1280
      %1282 = vmatprep.mubr.bf16.mxu0 0
      %1283 = vmatmul.mubr.bf16.gmra.mrb[0].mxu0 %v1232
      %v1284 = vpop.f32.mrb[0].mxu0
      %v1285 = vadd.f32 %v1201, %v1284
      %v1286 = vpop.f32.mrb[0].mxu0
      %v1287 = vadd.f32 %v1203, %v1286
      %v1288 = vpop.f32.mrb[0].mxu0
      %v1289 = vadd.f32 %v1205, %v1288
      %v1290 = vpop.f32.mrb[0].mxu0
      %v1291 = vadd.f32 %v1207, %v1290
      %1292 = vdwg.mxu0
      %v1293 = vld [vmem:[%s10] sm:$0xff]
      %v1294 = vld [vmem:[%s10 + $0x8] sm:$0xff]
      %v1295 = vld [vmem:[%s10 + $0x10] sm:$0xff]
      %v1296 = vld [vmem:[%s10 + $0x18] sm:$0xff]
      %1298 = vset.pattern.permute.xlu0 0
      %1299 = vperm.xlu0 %1298, %v1293
      %v1300 = vpop.permute.xlu0 %1299
      %1303 = vset.pattern.permute.xlu0 0
      %1304 = vperm.xlu0 %1303, %v1294
      %v1305 = vpop.permute.xlu0 %1304
      %1308 = vset.pattern.permute.xlu0 0
      %1309 = vperm.xlu0 %1308, %v1295
      %v1310 = vpop.permute.xlu0 %1309
      %1313 = vset.pattern.permute.xlu0 0
      %1314 = vperm.xlu0 %1313, %v1296
      %v1315 = vpop.permute.xlu0 %1314
      %v1317 = vadd.f32 %v1275, %v1300
      %v1318 = vadd.f32 %v1277, %v1300
      %v1319 = vadd.f32 %v1279, %v1305
      %v1320 = vadd.f32 %v1281, %v1305
      %v1321 = vadd.f32 %v1285, %v1310
      %v1322 = vadd.f32 %v1287, %v1310
      %v1323 = vadd.f32 %v1289, %v1315
      %v1324 = vadd.f32 %v1291, %v1315
      %v1325 = vmax.f32 %v1317, 0.0
      %v1326 = vmax.f32 %v1318, 0.0
      %v1327 = vmax.f32 %v1319, 0.0
      %v1328 = vmax.f32 %v1320, 0.0
      %v1329 = vmax.f32 %v1321, 0.0
      %v1330 = vmax.f32 %v1322, 0.0
      %v1331 = vmax.f32 %v1323, 0.0
      %v1332 = vmax.f32 %v1324, 0.0
      %v1333 = vld [vmem:[%s11] sm:$0x1]
      %v1334 = vpack.c.bf16 %v1327, %v1325
      %v1335 = vpack.c.bf16 %v1328, %v1326
      %v1336 = vpack.c.bf16 %v1331, %v1329
      %v1337 = vpack.c.bf16 %v1332, %v1330
      %v1338 = vld [vmem:[%s12] sm:$0x3]
      %1340 = vset.pattern.permute.xlu0 0
      %1341 = vperm.xlu0 %1340, %v1338
      %v1342 = vpop.permute.xlu0 %1341
      %vm1344 = vcmask 261120
      %v1346 = vsel %vm1344, %v1333, 0
      %1348 = vmatprep.subr.bf16.mxu0 %v1335
      %1349 = vmatpush1.bf16.msra.mxu0 %v1334
      %1350 = vmatprep.subr.bf16.mxu0 %v1337
      %1351 = vmatpush1.bf16.msra.mxu0 %v1336
      %1352 = vmatprep.subr.bf16.mxu0 0
      %1353 = vmatpush1.bf16.msra.mxu0 0
      %1354 = vmatprep.subr.bf16.mxu0 0
      %1355 = vmatpush1.bf16.msra.mxu0 0
      %1356 = vmatprep.subr.bf16.mxu0 0
      %1357 = vmatpush1.bf16.msra.mxu0 0
      %1358 = vmatprep.subr.bf16.mxu0 0
      %1359 = vmatpush1.bf16.msra.mxu0 0
      %1360 = vmatprep.subr.bf16.mxu0 0
      %1361 = vmatpush1.bf16.msra.mxu0 0
      %1362 = vmatprep.subr.bf16.mxu0 0
      %1363 = vmatpush1.bf16.msra.mxu0 0
      %1364 = vmatprep.subr.bf16.mxu0 0
      %1365 = vmatpush1.bf16.msra.mxu0 0
      %1366 = vmatprep.subr.bf16.mxu0 0
      %1367 = vmatpush1.bf16.msra.mxu0 0
      %1368 = vmatprep.subr.bf16.mxu0 0
      %1369 = vmatpush1.bf16.msra.mxu0 0
      %1370 = vmatprep.subr.bf16.mxu0 0
      %1371 = vmatpush1.bf16.msra.mxu0 0
      %1372 = vmatprep.subr.bf16.mxu0 0
      %1373 = vmatpush1.bf16.msra.mxu0 0
      %1374 = vmatprep.subr.bf16.mxu0 0
      %1375 = vmatpush1.bf16.msra.mxu0 0
      %1376 = vmatprep.subr.bf16.mxu0 0
      %1377 = vmatpush1.bf16.msra.mxu0 0
      %1378 = vmatprep.subr.bf16.mxu0 0
      %1379 = vmatpush1.bf16.msra.mxu0 0
      %1380 = vmatprep.mubr.bf16.mxu0 0
      %1381 = vmatmul.mubr.bf16.gmra.mrb[0].mxu0 %v1346
      %v1382 = vpop.f32.mrb[0].mxu0
      %v1383 = vadd.f32 %v1342, %v1382
      %v1384 = vpop.f32.mrb[0].mxu0
      %v1385 = vadd.f32 %v1342, %v1384
      %v1386 = vpop.f32.mrb[0].mxu0
      %v1387 = vpop.f32.mrb[0].mxu0
      %1388 = vdwg.mxu0
      %v1389 = vtanh.pop %v1383
      %v1390 = vtanh.pop %v1385
      %v1391 = vmul.f32 %v1389, 2.0
      %v1392 = vmul.f32 %v1390, 2.0
      %v1393 = vadd.bf16 %v1086, 1065369472
      %v1394 = vmul.bf16 %v1393, 1056980736
      %v1397 = vunpack.c.l.s4 1983009808
      %v1398 = vunpack.c.0.s8 %v1397
      %v1399 = vlaneseq
      %v1400 = vshrl.u32 %v1399, 7
      %v1401 = vsub.s32 %v1398, %v1400
      %v1402 = vrot.slane %v1394, %v1401
      %v1403 = vcombine.high %v1402, %v1402
      %v1405 = vand.u32 %v1402, %v1149
      %v1408 = vand.u32 %v1403, %v1149
      %1410 = vmatprep.subr.bf16.mxu0 %v1408
      %1411 = vmatpush1.bf16.msra.mxu0 %v1405
      %1412 = vmatprep.subr.bf16.mxu0 0
      %1413 = vmatpush1.bf16.msra.mxu0 0
      %1414 = vmatprep.subr.bf16.mxu0 0
      %1415 = vmatpush1.bf16.msra.mxu0 0
      %1416 = vmatprep.subr.bf16.mxu0 0
      %1417 = vmatpush1.bf16.msra.mxu0 0
      %1418 = vmatprep.subr.bf16.mxu0 0
      %1419 = vmatpush1.bf16.msra.mxu0 0
      %1420 = vmatprep.subr.bf16.mxu0 0
      %1421 = vmatpush1.bf16.msra.mxu0 0
      %1422 = vmatprep.subr.bf16.mxu0 0
      %1423 = vmatpush1.bf16.msra.mxu0 0
      %1424 = vmatprep.subr.bf16.mxu0 0
      %1425 = vmatpush1.bf16.msra.mxu0 0
      %1426 = vmatprep.subr.bf16.mxu0 0
      %1427 = vmatpush1.bf16.msra.mxu0 0
      %1428 = vmatprep.subr.bf16.mxu0 0
      %1429 = vmatpush1.bf16.msra.mxu0 0
      %1430 = vmatprep.subr.bf16.mxu0 0
      %1431 = vmatpush1.bf16.msra.mxu0 0
      %1432 = vmatprep.subr.bf16.mxu0 0
      %1433 = vmatpush1.bf16.msra.mxu0 0
      %1434 = vmatprep.subr.bf16.mxu0 0
      %1435 = vmatpush1.bf16.msra.mxu0 0
      %1436 = vmatprep.subr.bf16.mxu0 0
      %1437 = vmatpush1.bf16.msra.mxu0 0
      %1438 = vmatprep.subr.bf16.mxu0 0
      %1439 = vmatpush1.bf16.msra.mxu0 0
      %1440 = vmatprep.subr.bf16.mxu0 0
      %1441 = vmatpush1.bf16.msra.mxu0 0
      %1442 = vmatprep.mubr.bf16.mxu0 0
      %1443 = vmatmul.mubr.bf16.gmra.mrb[0].mxu0 %v1229
      %v1444 = vpop.f32.mrb[0].mxu0
      %v1445 = vadd.f32 %v1191, %v1444
      %v1446 = vpop.f32.mrb[0].mxu0
      %v1447 = vadd.f32 %v1193, %v1446
      %v1448 = vpop.f32.mrb[0].mxu0
      %v1449 = vadd.f32 %v1195, %v1448
      %v1450 = vpop.f32.mrb[0].mxu0
      %v1451 = vadd.f32 %v1197, %v1450
      %1452 = vmatprep.mubr.bf16.mxu0 0
      %1453 = vmatmul.mubr.bf16.gmra.mrb[0].mxu0 %v1232
      %v1454 = vpop.f32.mrb[0].mxu0
      %v1455 = vadd.f32 %v1201, %v1454
      %v1456 = vpop.f32.mrb[0].mxu0
      %v1457 = vadd.f32 %v1203, %v1456
      %v1458 = vpop.f32.mrb[0].mxu0
      %v1459 = vadd.f32 %v1205, %v1458
      %v1460 = vpop.f32.mrb[0].mxu0
      %v1461 = vadd.f32 %v1207, %v1460
      %1462 = vdwg.mxu0
      %v1463 = vadd.f32 %v1445, %v1300
      %v1464 = vadd.f32 %v1447, %v1300
      %v1465 = vadd.f32 %v1449, %v1305
      %v1466 = vadd.f32 %v1451, %v1305
      %v1467 = vadd.f32 %v1455, %v1310
      %v1468 = vadd.f32 %v1457, %v1310
      %v1469 = vadd.f32 %v1459, %v1315
      %v1470 = vadd.f32 %v1461, %v1315
      %v1471 = vmax.f32 %v1463, 0.0
      %v1472 = vmax.f32 %v1464, 0.0
      %v1473 = vmax.f32 %v1465, 0.0
      %v1474 = vmax.f32 %v1466, 0.0
      %v1475 = vmax.f32 %v1467, 0.0
      %v1476 = vmax.f32 %v1468, 0.0
      %v1477 = vmax.f32 %v1469, 0.0
      %v1478 = vmax.f32 %v1470, 0.0
      %v1479 = vpack.c.bf16 %v1473, %v1471
      %v1480 = vpack.c.bf16 %v1474, %v1472
      %v1481 = vpack.c.bf16 %v1477, %v1475
      %v1482 = vpack.c.bf16 %v1478, %v1476
      %1483 = vmatprep.subr.bf16.mxu0 %v1480
      %1484 = vmatpush1.bf16.msra.mxu0 %v1479
      %1485 = vmatprep.subr.bf16.mxu0 %v1482
      %1486 = vmatpush1.bf16.msra.mxu0 %v1481
      %1487 = vmatprep.subr.bf16.mxu0 0
      %1488 = vmatpush1.bf16.msra.mxu0 0
      %1489 = vmatprep.subr.bf16.mxu0 0
      %1490 = vmatpush1.bf16.msra.mxu0 0
      %1491 = vmatprep.subr.bf16.mxu0 0
      %1492 = vmatpush1.bf16.msra.mxu0 0
      %1493 = vmatprep.subr.bf16.mxu0 0
      %1494 = vmatpush1.bf16.msra.mxu0 0
      %1495 = vmatprep.subr.bf16.mxu0 0
      %1496 = vmatpush1.bf16.msra.mxu0 0
      %1497 = vmatprep.subr.bf16.mxu0 0
      %1498 = vmatpush1.bf16.msra.mxu0 0
      %1499 = vmatprep.subr.bf16.mxu0 0
      %1500 = vmatpush1.bf16.msra.mxu0 0
      %1501 = vmatprep.subr.bf16.mxu0 0
      %1502 = vmatpush1.bf16.msra.mxu0 0
      %1503 = vmatprep.subr.bf16.mxu0 0
      %1504 = vmatpush1.bf16.msra.mxu0 0
      %1505 = vmatprep.subr.bf16.mxu0 0
      %1506 = vmatpush1.bf16.msra.mxu0 0
      %1507 = vmatprep.subr.bf16.mxu0 0
      %1508 = vmatpush1.bf16.msra.mxu0 0
      %1509 = vmatprep.subr.bf16.mxu0 0
      %1510 = vmatpush1.bf16.msra.mxu0 0
      %1511 = vmatprep.subr.bf16.mxu0 0
      %1512 = vmatpush1.bf16.msra.mxu0 0
      %1513 = vmatprep.subr.bf16.mxu0 0
      %1514 = vmatpush1.bf16.msra.mxu0 0
      %1515 = vmatprep.mubr.bf16.mxu0 0
      %1516 = vmatmul.mubr.bf16.gmra.mrb[0].mxu0 %v1346
      %v1517 = vpop.f32.mrb[0].mxu0
      %v1518 = vadd.f32 %v1342, %v1517
      %v1519 = vpop.f32.mrb[0].mxu0
      %v1520 = vadd.f32 %v1342, %v1519
      %v1521 = vpop.f32.mrb[0].mxu0
      %v1522 = vpop.f32.mrb[0].mxu0
      %1523 = vdwg.mxu0
      %v1524 = vtanh.pop %v1518
      %v1525 = vtanh.pop %v1520
      %v1526 = vmul.f32 %v1524, 2.0
      %v1527 = vmul.f32 %v1525, 2.0
      %v1528 = vmul.f32 %v1391, 0.5
      %v1529 = vmul.f32 %v1392, 0.5
      %v1532 = vcombine.low %v1528, %v1529
      %v1534 = vunpack.c.l.s4 1966171168
      %v1535 = vunpack.c.0.s8 %v1534
      %v1536 = vlaneseq
      %v1537 = vshrl.u32 %v1536, 7
      %v1538 = vsub.s32 %v1535, %v1537
      %v1539 = vrot.slane %v1532, %v1538
      %v1541 = vunpack.c.l.s4 1966171168
      %v1542 = vunpack.c.0.s8 %v1541
      %v1543 = vlaneseq
      %v1544 = vshrl.u32 %v1543, 7
      %v1545 = vsub.s32 %v1542, %v1544
      %v1546 = vrot.slane %v1539, %v1545
      %v1548 = vadd.f32 %v1082, %v1546
      %v1549 = vrcp.pop 15.0
      %v1550 = vmul.f32 %v1548, %v1549
      %v1551 = vmul.f32 %v1550, 2.0
      %v1552 = vsub.f32 %v1551, 1.0
      %v1553 = vcombine.high %v1539, %v1539
      %v1555 = vunpack.c.l.s4 1966171168
      %v1556 = vunpack.c.0.s8 %v1555
      %v1557 = vlaneseq
      %v1558 = vshrl.u32 %v1557, 7
      %v1559 = vsub.s32 %v1556, %v1558
      %v1560 = vrot.slane %v1553, %v1559
      %v1562 = vadd.f32 %v1083, %v1560
      %v1563 = vmul.f32 %v1562, %v1549
      %v1564 = vmul.f32 %v1563, 2.0
      %v1565 = vsub.f32 %v1564, 1.0
      %v1566 = vadd.f32 %v1552, 1.0
      %v1567 = vmul.f32 %v1566, 16.0
      %v1568 = vsub.f32 %v1567, 1.0
      %v1569 = vmul.f32 %v1568, 0.5
      %v1570 = vadd.f32 %v1565, 1.0
      %v1571 = vmul.f32 %v1570, 16.0
      %v1572 = vsub.f32 %v1571, 1.0
      %v1573 = vmul.f32 %v1572, 0.5
      %v1574 = vfloor.f32 %v1569
      %v1575 = vfloor.f32 %v1573
      %v1576 = vsub.f32 %v1569, %v1574
      %v1577 = vsub.f32 1.0, %v1576
      %v1578 = vsub.f32 %v1573, %v1575
      %v1579 = vsub.f32 1.0, %v1578
      %vm1580 = vcmp.ge.f32.partialorder %v1574, 0.0
      %vm1581 = vcmp.le.f32.partialorder %v1574, 15.0
      %vm1582 = vmand %vm1580, %vm1581
      %v1583 = vmax.f32 %v1574, 0.0
      %v1584 = vmin.f32 %v1583, 15.0
      %v1585 = vcvt.f32.s32.to.zero.pseudo %v1584
      %v1586 = vsel %vm1582, %v1577, 0.0
      %v1587 = vlaneseq
      %v1588 = vshrl.u32 %v1587, 7
      %v1589 = vsub.s32 0, %v1588
      %v1590 = vrot.slane %v1585, %v1589
      %v1591 = vlaneseq
      %v1592 = vshrl.u32 %v1591, 7
      %v1593 = vsub.s32 1, %v1592
      %v1594 = vrot.slane %v1585, %v1593
      %vm1595 = vcmp.eq.s32.totalorder %v1106, %v1590
      %vm1596 = vcmp.eq.s32.totalorder %v1106, %v1594
      %vm1597 = vcmp.eq.s32.totalorder %v1107, %v1590
      %vm1598 = vcmp.eq.s32.totalorder %v1107, %v1594
      %v1600 = vlaneseq
      %v1601 = vshrl.u32 %v1600, 7
      %v1602 = vsub.s32 0, %v1601
      %v1603 = vrot.slane %v1586, %v1602
      %v1604 = vlaneseq
      %v1605 = vshrl.u32 %v1604, 7
      %v1606 = vsub.s32 1, %v1605
      %v1607 = vrot.slane %v1586, %v1606
      %v1610 = vsel %vm1595, %v1603, 0.0
      %v1611 = vsel %vm1596, %v1607, 0.0
      %v1612 = vsel %vm1597, %v1603, 0.0
      %v1613 = vsel %vm1598, %v1607, 0.0
      %v1614 = vadd.f32 %v1574, 1.0
      %vm1615 = vcmp.ge.f32.partialorder %v1614, 0.0
      %vm1616 = vcmp.le.f32.partialorder %v1614, 15.0
      %vm1617 = vmand %vm1615, %vm1616
      %v1618 = vmax.f32 %v1614, 0.0
      %v1619 = vmin.f32 %v1618, 15.0
      %v1620 = vcvt.f32.s32.to.zero.pseudo %v1619
      %v1621 = vsel %vm1617, %v1576, 0.0
      %v1622 = vlaneseq
      %v1623 = vshrl.u32 %v1622, 7
      %v1624 = vsub.s32 0, %v1623
      %v1625 = vrot.slane %v1620, %v1624
      %v1626 = vlaneseq
      %v1627 = vshrl.u32 %v1626, 7
      %v1628 = vsub.s32 1, %v1627
      %v1629 = vrot.slane %v1620, %v1628
      %vm1630 = vcmp.eq.s32.totalorder %v1106, %v1625
      %vm1631 = vcmp.eq.s32.totalorder %v1106, %v1629
      %vm1632 = vcmp.eq.s32.totalorder %v1107, %v1625
      %vm1633 = vcmp.eq.s32.totalorder %v1107, %v1629
      %v1635 = vlaneseq
      %v1636 = vshrl.u32 %v1635, 7
      %v1637 = vsub.s32 0, %v1636
      %v1638 = vrot.slane %v1621, %v1637
      %v1639 = vlaneseq
      %v1640 = vshrl.u32 %v1639, 7
      %v1641 = vsub.s32 1, %v1640
      %v1642 = vrot.slane %v1621, %v1641
      %v1645 = vsel %vm1630, %v1638, 0.0
      %v1646 = vsel %vm1631, %v1642, 0.0
      %v1647 = vsel %vm1632, %v1638, 0.0
      %v1648 = vsel %vm1633, %v1642, 0.0
      %v1649 = vadd.f32 %v1610, %v1645
      %v1650 = vadd.f32 %v1611, %v1646
      %v1651 = vadd.f32 %v1612, %v1647
      %v1652 = vadd.f32 %v1613, %v1648
      %vm1653 = vcmp.ge.f32.partialorder %v1575, 0.0
      %vm1654 = vcmp.le.f32.partialorder %v1575, 15.0
      %vm1655 = vmand %vm1653, %vm1654
      %v1656 = vmax.f32 %v1575, 0.0
      %v1657 = vmin.f32 %v1656, 15.0
      %v1658 = vcvt.f32.s32.to.zero.pseudo %v1657
      %v1659 = vsel %vm1655, %v1579, 0.0
      %v1660 = vlaneseq
      %v1661 = vshrl.u32 %v1660, 7
      %v1662 = vsub.s32 0, %v1661
      %v1663 = vrot.slane %v1658, %v1662
      %v1664 = vlaneseq
      %v1665 = vshrl.u32 %v1664, 7
      %v1666 = vsub.s32 1, %v1665
      %v1667 = vrot.slane %v1658, %v1666
      %vm1668 = vcmp.eq.s32.totalorder %v1106, %v1663
      %vm1669 = vcmp.eq.s32.totalorder %v1106, %v1667
      %vm1670 = vcmp.eq.s32.totalorder %v1107, %v1663
      %vm1671 = vcmp.eq.s32.totalorder %v1107, %v1667
      %v1673 = vlaneseq
      %v1674 = vshrl.u32 %v1673, 7
      %v1675 = vsub.s32 0, %v1674
      %v1676 = vrot.slane %v1659, %v1675
      %v1677 = vlaneseq
      %v1678 = vshrl.u32 %v1677, 7
      %v1679 = vsub.s32 1, %v1678
      %v1680 = vrot.slane %v1659, %v1679
      %v1683 = vsel %vm1668, %v1676, 0.0
      %v1684 = vsel %vm1669, %v1680, 0.0
      %v1685 = vsel %vm1670, %v1676, 0.0
      %v1686 = vsel %vm1671, %v1680, 0.0
      %v1687 = vadd.f32 %v1575, 1.0
      %vm1688 = vcmp.ge.f32.partialorder %v1687, 0.0
      %vm1689 = vcmp.le.f32.partialorder %v1687, 15.0
      %vm1690 = vmand %vm1688, %vm1689
      %v1691 = vmax.f32 %v1687, 0.0
      %v1692 = vmin.f32 %v1691, 15.0
      %v1693 = vcvt.f32.s32.to.zero.pseudo %v1692
      %v1694 = vsel %vm1690, %v1578, 0.0
      %v1695 = vlaneseq
      %v1696 = vshrl.u32 %v1695, 7
      %v1697 = vsub.s32 0, %v1696
      %v1698 = vrot.slane %v1693, %v1697
      %v1699 = vlaneseq
      %v1700 = vshrl.u32 %v1699, 7
      %v1701 = vsub.s32 1, %v1700
      %v1702 = vrot.slane %v1693, %v1701
      %vm1703 = vcmp.eq.s32.totalorder %v1106, %v1698
      %vm1704 = vcmp.eq.s32.totalorder %v1106, %v1702
      %vm1705 = vcmp.eq.s32.totalorder %v1107, %v1698
      %vm1706 = vcmp.eq.s32.totalorder %v1107, %v1702
      %v1708 = vlaneseq
      %v1709 = vshrl.u32 %v1708, 7
      %v1710 = vsub.s32 0, %v1709
      %v1711 = vrot.slane %v1694, %v1710
      %v1712 = vlaneseq
      %v1713 = vshrl.u32 %v1712, 7
      %v1714 = vsub.s32 1, %v1713
      %v1715 = vrot.slane %v1694, %v1714
      %v1718 = vsel %vm1703, %v1711, 0.0
      %v1719 = vsel %vm1704, %v1715, 0.0
      %v1720 = vsel %vm1705, %v1711, 0.0
      %v1721 = vsel %vm1706, %v1715, 0.0
      %v1722 = vadd.f32 %v1683, %v1718
      %v1723 = vadd.f32 %v1684, %v1719
      %v1724 = vadd.f32 %v1685, %v1720
      %v1725 = vadd.f32 %v1686, %v1721
      %v1726 = vpack.c.bf16 %v1651, %v1649
      %v1727 = vpack.c.bf16 %v1652, %v1650
      %v1734 = vunpack.c.l.b16 %v1087
      %v1735 = vunpack.c.l.b16 %v1088
      %v1736 = vunpack.c.l.b16 %v1089
      %v1737 = vunpack.c.l.b16 %v1090
      %v1738 = vunpack.c.l.b16 %v1091
      %v1739 = vunpack.c.l.b16 %v1092
      %v1740 = vpack.c.b16 %v1735, %v1734
      %v1741 = vpack.c.b16 %v1737, %v1736
      %v1742 = vpack.c.b16 %v1739, %v1738
      %vm1743 = vcmask 130048
      %v1745 = vsel %vm1743, %v1740, 0
      %v1748 = vsel %vm1743, %v1741, 0
      %v1751 = vsel %vm1743, %v1742, 0
      %1753 = vmatprep.subr.bf16.mxu0 %v1727
      %1754 = vmatpush1.bf16.msra.mxu0 %v1726
      %1755 = vmatprep.subr.bf16.mxu0 0
      %1756 = vmatpush1.bf16.msra.mxu0 0
      %1757 = vmatprep.subr.bf16.mxu0 0
      %1758 = vmatpush1.bf16.msra.mxu0 0
      %1759 = vmatprep.subr.bf16.mxu0 0
      %1760 = vmatpush1.bf16.msra.mxu0 0
      %1761 = vmatprep.subr.bf16.mxu0 0
      %1762 = vmatpush1.bf16.msra.mxu0 0
      %1763 = vmatprep.subr.bf16.mxu0 0
      %1764 = vmatpush1.bf16.msra.mxu0 0
      %1765 = vmatprep.subr.bf16.mxu0 0
      %1766 = vmatpush1.bf16.msra.mxu0 0
      %1767 = vmatprep.subr.bf16.mxu0 0
      %1768 = vmatpush1.bf16.msra.mxu0 0
      %1769 = vmatprep.subr.bf16.mxu0 0
      %1770 = vmatpush1.bf16.msra.mxu0 0
      %1771 = vmatprep.subr.bf16.mxu0 0
      %1772 = vmatpush1.bf16.msra.mxu0 0
      %1773 = vmatprep.subr.bf16.mxu0 0
      %1774 = vmatpush1.bf16.msra.mxu0 0
      %1775 = vmatprep.subr.bf16.mxu0 0
      %1776 = vmatpush1.bf16.msra.mxu0 0
      %1777 = vmatprep.subr.bf16.mxu0 0
      %1778 = vmatpush1.bf16.msra.mxu0 0
      %1779 = vmatprep.subr.bf16.mxu0 0
      %1780 = vmatpush1.bf16.msra.mxu0 0
      %1781 = vmatprep.subr.bf16.mxu0 0
      %1782 = vmatpush1.bf16.msra.mxu0 0
      %1783 = vmatprep.subr.bf16.mxu0 0
      %1784 = vmatpush1.bf16.msra.mxu0 0
      %1785 = vmatprep.mubr.bf16.mxu0 0
      %1786 = vmatmul.mubr.bf16.gmra.mrb[0].mxu0 %v1745
      %v1787 = vpop.f32.mrb[0].mxu0
      %v1788 = vadd.f32 0.0, %v1787
      %v1789 = vpop.f32.mrb[0].mxu0
      %v1790 = vadd.f32 0.0, %v1789
      %v1791 = vpop.f32.mrb[0].mxu0
      %v1792 = vadd.f32 0.0, %v1791
      %v1793 = vpop.f32.mrb[0].mxu0
      %v1794 = vadd.f32 0.0, %v1793
      %1795 = vmatprep.mubr.bf16.mxu0 0
      %1796 = vmatmul.mubr.bf16.gmra.mrb[0].mxu0 %v1748
      %v1797 = vpop.f32.mrb[0].mxu0
      %v1798 = vadd.f32 0.0, %v1797
      %v1799 = vpop.f32.mrb[0].mxu0
      %v1800 = vadd.f32 0.0, %v1799
      %v1801 = vpop.f32.mrb[0].mxu0
      %v1802 = vadd.f32 0.0, %v1801
      %v1803 = vpop.f32.mrb[0].mxu0
      %v1804 = vadd.f32 0.0, %v1803
      %1805 = vmatprep.mubr.bf16.mxu0 0
      %1806 = vmatmul.mubr.bf16.gmra.mrb[0].mxu0 %v1751
      %v1807 = vpop.f32.mrb[0].mxu0
      %v1808 = vadd.f32 0.0, %v1807
      %v1809 = vpop.f32.mrb[0].mxu0
      %v1810 = vadd.f32 0.0, %v1809
      %v1811 = vpop.f32.mrb[0].mxu0
      %v1812 = vadd.f32 0.0, %v1811
      %v1813 = vpop.f32.mrb[0].mxu0
      %v1814 = vadd.f32 0.0, %v1813
      %1815 = vdwg.mxu0
      %v1816 = vmul.f32 %v1788, %v1722
      %v1817 = vmul.f32 %v1790, %v1723
      %v1818 = vmul.f32 %v1792, %v1724
      %v1819 = vmul.f32 %v1794, %v1725
      %v1820 = vadd.f32 %v1816, %v1818
      %v1821 = vrot.slane %v1820, 4
      %v1822 = vadd.f32 %v1820, %v1821
      %v1823 = vrot.slane %v1822, 2
      %v1824 = vadd.f32 %v1822, %v1823
      %v1825 = vrot.slane %v1824, 1
      %v1826 = vadd.f32 %v1824, %v1825
      %v1827 = vadd.f32 %v1817, %v1819
      %v1828 = vrot.slane %v1827, 4
      %v1829 = vadd.f32 %v1827, %v1828
      %v1830 = vrot.slane %v1829, 2
      %v1831 = vadd.f32 %v1829, %v1830
      %v1832 = vrot.slane %v1831, 1
      %v1833 = vadd.f32 %v1831, %v1832
      %v1834 = vmul.f32 %v1798, %v1722
      %v1835 = vmul.f32 %v1800, %v1723
      %v1836 = vmul.f32 %v1802, %v1724
      %v1837 = vmul.f32 %v1804, %v1725
      %v1838 = vadd.f32 %v1834, %v1836
      %v1839 = vrot.slane %v1838, 4
      %v1840 = vadd.f32 %v1838, %v1839
      %v1841 = vrot.slane %v1840, 2
      %v1842 = vadd.f32 %v1840, %v1841
      %v1843 = vrot.slane %v1842, 1
      %v1844 = vadd.f32 %v1842, %v1843
      %v1845 = vadd.f32 %v1835, %v1837
      %v1846 = vrot.slane %v1845, 4
      %v1847 = vadd.f32 %v1845, %v1846
      %v1848 = vrot.slane %v1847, 2
      %v1849 = vadd.f32 %v1847, %v1848
      %v1850 = vrot.slane %v1849, 1
      %v1851 = vadd.f32 %v1849, %v1850
      %v1852 = vmul.f32 %v1808, %v1722
      %v1853 = vmul.f32 %v1810, %v1723
      %v1854 = vmul.f32 %v1812, %v1724
      %v1855 = vmul.f32 %v1814, %v1725
      %v1856 = vadd.f32 %v1852, %v1854
      %v1857 = vrot.slane %v1856, 4
      %v1858 = vadd.f32 %v1856, %v1857
      %v1859 = vrot.slane %v1858, 2
      %v1860 = vadd.f32 %v1858, %v1859
      %v1861 = vrot.slane %v1860, 1
      %v1862 = vadd.f32 %v1860, %v1861
      %v1863 = vadd.f32 %v1853, %v1855
      %v1864 = vrot.slane %v1863, 4
      %v1865 = vadd.f32 %v1863, %v1864
      %v1866 = vrot.slane %v1865, 2
      %v1867 = vadd.f32 %v1865, %v1866
      %v1868 = vrot.slane %v1867, 1
      %v1869 = vadd.f32 %v1867, %v1868
      %v1870 = vsel %vm1146, %v1826, %v1844
      %v1871 = vsel %vm1146, %v1833, %v1851
      %v1872 = vsel %vm1147, %v1870, %v1862
      %v1873 = vsel %vm1147, %v1871, %v1869
      %v1874 = vmul.f32 %v1526, 0.5
      %v1875 = vmul.f32 %v1527, 0.5
      %v1878 = vcombine.low %v1874, %v1875
      %v1880 = vunpack.c.l.s4 1966171168
      %v1881 = vunpack.c.0.s8 %v1880
      %v1882 = vlaneseq
      %v1883 = vshrl.u32 %v1882, 7
      %v1884 = vsub.s32 %v1881, %v1883
      %v1885 = vrot.slane %v1878, %v1884
      %v1887 = vunpack.c.l.s4 1966171168
      %v1888 = vunpack.c.0.s8 %v1887
      %v1889 = vlaneseq
      %v1890 = vshrl.u32 %v1889, 7
      %v1891 = vsub.s32 %v1888, %v1890
      %v1892 = vrot.slane %v1885, %v1891
      %v1894 = vadd.f32 %v1082, %v1892
      %v1895 = vmul.f32 %v1894, %v1549
      %v1896 = vmul.f32 %v1895, 2.0
      %v1897 = vsub.f32 %v1896, 1.0
      %v1898 = vcombine.high %v1885, %v1885
      %v1900 = vunpack.c.l.s4 1966171168
      %v1901 = vunpack.c.0.s8 %v1900
      %v1902 = vlaneseq
      %v1903 = vshrl.u32 %v1902, 7
      %v1904 = vsub.s32 %v1901, %v1903
      %v1905 = vrot.slane %v1898, %v1904
      %v1907 = vadd.f32 %v1083, %v1905
      %v1908 = vmul.f32 %v1907, %v1549
      %v1909 = vmul.f32 %v1908, 2.0
      %v1910 = vsub.f32 %v1909, 1.0
      %v1911 = vadd.f32 %v1897, 1.0
      %v1912 = vmul.f32 %v1911, 16.0
      %v1913 = vsub.f32 %v1912, 1.0
      %v1914 = vmul.f32 %v1913, 0.5
      %v1915 = vadd.f32 %v1910, 1.0
      %v1916 = vmul.f32 %v1915, 16.0
      %v1917 = vsub.f32 %v1916, 1.0
      %v1918 = vmul.f32 %v1917, 0.5
      %v1919 = vfloor.f32 %v1914
      %v1920 = vfloor.f32 %v1918
      %v1921 = vsub.f32 %v1914, %v1919
      %v1922 = vsub.f32 1.0, %v1921
      %v1923 = vsub.f32 %v1918, %v1920
      %v1924 = vsub.f32 1.0, %v1923
      %vm1925 = vcmp.ge.f32.partialorder %v1919, 0.0
      %vm1926 = vcmp.le.f32.partialorder %v1919, 15.0
      %vm1927 = vmand %vm1925, %vm1926
      %v1928 = vmax.f32 %v1919, 0.0
      %v1929 = vmin.f32 %v1928, 15.0
      %v1930 = vcvt.f32.s32.to.zero.pseudo %v1929
      %v1931 = vsel %vm1927, %v1922, 0.0
      %v1932 = vlaneseq
      %v1933 = vshrl.u32 %v1932, 7
      %v1934 = vsub.s32 0, %v1933
      %v1935 = vrot.slane %v1930, %v1934
      %v1936 = vlaneseq
      %v1937 = vshrl.u32 %v1936, 7
      %v1938 = vsub.s32 1, %v1937
      %v1939 = vrot.slane %v1930, %v1938
      %vm1940 = vcmp.eq.s32.totalorder %v1106, %v1935
      %vm1941 = vcmp.eq.s32.totalorder %v1106, %v1939
      %vm1942 = vcmp.eq.s32.totalorder %v1107, %v1935
      %vm1943 = vcmp.eq.s32.totalorder %v1107, %v1939
      %v1945 = vlaneseq
      %v1946 = vshrl.u32 %v1945, 7
      %v1947 = vsub.s32 0, %v1946
      %v1948 = vrot.slane %v1931, %v1947
      %v1949 = vlaneseq
      %v1950 = vshrl.u32 %v1949, 7
      %v1951 = vsub.s32 1, %v1950
      %v1952 = vrot.slane %v1931, %v1951
      %v1955 = vsel %vm1940, %v1948, 0.0
      %v1956 = vsel %vm1941, %v1952, 0.0
      %v1957 = vsel %vm1942, %v1948, 0.0
      %v1958 = vsel %vm1943, %v1952, 0.0
      %v1959 = vadd.f32 %v1919, 1.0
      %vm1960 = vcmp.ge.f32.partialorder %v1959, 0.0
      %vm1961 = vcmp.le.f32.partialorder %v1959, 15.0
      %vm1962 = vmand %vm1960, %vm1961
      %v1963 = vmax.f32 %v1959, 0.0
      %v1964 = vmin.f32 %v1963, 15.0
      %v1965 = vcvt.f32.s32.to.zero.pseudo %v1964
      %v1966 = vsel %vm1962, %v1921, 0.0
      %v1967 = vlaneseq
      %v1968 = vshrl.u32 %v1967, 7
      %v1969 = vsub.s32 0, %v1968
      %v1970 = vrot.slane %v1965, %v1969
      %v1971 = vlaneseq
      %v1972 = vshrl.u32 %v1971, 7
      %v1973 = vsub.s32 1, %v1972
      %v1974 = vrot.slane %v1965, %v1973
      %vm1975 = vcmp.eq.s32.totalorder %v1106, %v1970
      %vm1976 = vcmp.eq.s32.totalorder %v1106, %v1974
      %vm1977 = vcmp.eq.s32.totalorder %v1107, %v1970
      %vm1978 = vcmp.eq.s32.totalorder %v1107, %v1974
      %v1980 = vlaneseq
      %v1981 = vshrl.u32 %v1980, 7
      %v1982 = vsub.s32 0, %v1981
      %v1983 = vrot.slane %v1966, %v1982
      %v1984 = vlaneseq
      %v1985 = vshrl.u32 %v1984, 7
      %v1986 = vsub.s32 1, %v1985
      %v1987 = vrot.slane %v1966, %v1986
      %v1990 = vsel %vm1975, %v1983, 0.0
      %v1991 = vsel %vm1976, %v1987, 0.0
      %v1992 = vsel %vm1977, %v1983, 0.0
      %v1993 = vsel %vm1978, %v1987, 0.0
      %v1994 = vadd.f32 %v1955, %v1990
      %v1995 = vadd.f32 %v1956, %v1991
      %v1996 = vadd.f32 %v1957, %v1992
      %v1997 = vadd.f32 %v1958, %v1993
      %vm1998 = vcmp.ge.f32.partialorder %v1920, 0.0
      %vm1999 = vcmp.le.f32.partialorder %v1920, 15.0
      %vm2000 = vmand %vm1998, %vm1999
      %v2001 = vmax.f32 %v1920, 0.0
      %v2002 = vmin.f32 %v2001, 15.0
      %v2003 = vcvt.f32.s32.to.zero.pseudo %v2002
      %v2004 = vsel %vm2000, %v1924, 0.0
      %v2005 = vlaneseq
      %v2006 = vshrl.u32 %v2005, 7
      %v2007 = vsub.s32 0, %v2006
      %v2008 = vrot.slane %v2003, %v2007
      %v2009 = vlaneseq
      %v2010 = vshrl.u32 %v2009, 7
      %v2011 = vsub.s32 1, %v2010
      %v2012 = vrot.slane %v2003, %v2011
      %vm2013 = vcmp.eq.s32.totalorder %v1106, %v2008
      %vm2014 = vcmp.eq.s32.totalorder %v1106, %v2012
      %vm2015 = vcmp.eq.s32.totalorder %v1107, %v2008
      %vm2016 = vcmp.eq.s32.totalorder %v1107, %v2012
      %v2018 = vlaneseq
      %v2019 = vshrl.u32 %v2018, 7
      %v2020 = vsub.s32 0, %v2019
      %v2021 = vrot.slane %v2004, %v2020
      %v2022 = vlaneseq
      %v2023 = vshrl.u32 %v2022, 7
      %v2024 = vsub.s32 1, %v2023
      %v2025 = vrot.slane %v2004, %v2024
      %v2028 = vsel %vm2013, %v2021, 0.0
      %v2029 = vsel %vm2014, %v2025, 0.0
      %v2030 = vsel %vm2015, %v2021, 0.0
      %v2031 = vsel %vm2016, %v2025, 0.0
      %v2032 = vadd.f32 %v1920, 1.0
      %vm2033 = vcmp.ge.f32.partialorder %v2032, 0.0
      %vm2034 = vcmp.le.f32.partialorder %v2032, 15.0
      %vm2035 = vmand %vm2033, %vm2034
      %v2036 = vmax.f32 %v2032, 0.0
      %v2037 = vmin.f32 %v2036, 15.0
      %v2038 = vcvt.f32.s32.to.zero.pseudo %v2037
      %v2039 = vsel %vm2035, %v1923, 0.0
      %v2040 = vlaneseq
      %v2041 = vshrl.u32 %v2040, 7
      %v2042 = vsub.s32 0, %v2041
      %v2043 = vrot.slane %v2038, %v2042
      %v2044 = vlaneseq
      %v2045 = vshrl.u32 %v2044, 7
      %v2046 = vsub.s32 1, %v2045
      %v2047 = vrot.slane %v2038, %v2046
      %vm2048 = vcmp.eq.s32.totalorder %v1106, %v2043
      %vm2049 = vcmp.eq.s32.totalorder %v1106, %v2047
      %vm2050 = vcmp.eq.s32.totalorder %v1107, %v2043
      %vm2051 = vcmp.eq.s32.totalorder %v1107, %v2047
      %v2053 = vlaneseq
      %v2054 = vshrl.u32 %v2053, 7
      %v2055 = vsub.s32 0, %v2054
      %v2056 = vrot.slane %v2039, %v2055
      %v2057 = vlaneseq
      %v2058 = vshrl.u32 %v2057, 7
      %v2059 = vsub.s32 1, %v2058
      %v2060 = vrot.slane %v2039, %v2059
      %v2063 = vsel %vm2048, %v2056, 0.0
      %v2064 = vsel %vm2049, %v2060, 0.0
      %v2065 = vsel %vm2050, %v2056, 0.0
      %v2066 = vsel %vm2051, %v2060, 0.0
      %v2067 = vadd.f32 %v2028, %v2063
      %v2068 = vadd.f32 %v2029, %v2064
      %v2069 = vadd.f32 %v2030, %v2065
      %v2070 = vadd.f32 %v2031, %v2066
      %v2071 = vpack.c.bf16 %v1996, %v1994
      %v2072 = vpack.c.bf16 %v1997, %v1995
      %v2079 = vunpack.c.l.b16 %v1099
      %v2080 = vunpack.c.l.b16 %v1100
      %v2081 = vunpack.c.l.b16 %v1101
      %v2082 = vunpack.c.l.b16 %v1102
      %v2083 = vunpack.c.l.b16 %v1103
      %v2084 = vunpack.c.l.b16 %v1104
      %v2085 = vpack.c.b16 %v2080, %v2079
      %v2086 = vpack.c.b16 %v2082, %v2081
      %v2087 = vpack.c.b16 %v2084, %v2083
      %v2089 = vsel %vm1743, %v2085, 0
      %v2092 = vsel %vm1743, %v2086, 0
      %v2095 = vsel %vm1743, %v2087, 0
      %2097 = vmatprep.subr.bf16.mxu0 %v2072
      %2098 = vmatpush1.bf16.msra.mxu0 %v2071
      %2099 = vmatprep.subr.bf16.mxu0 0
      %2100 = vmatpush1.bf16.msra.mxu0 0
      %2101 = vmatprep.subr.bf16.mxu0 0
      %2102 = vmatpush1.bf16.msra.mxu0 0
      %2103 = vmatprep.subr.bf16.mxu0 0
      %2104 = vmatpush1.bf16.msra.mxu0 0
      %2105 = vmatprep.subr.bf16.mxu0 0
      %2106 = vmatpush1.bf16.msra.mxu0 0
      %2107 = vmatprep.subr.bf16.mxu0 0
      %2108 = vmatpush1.bf16.msra.mxu0 0
      %2109 = vmatprep.subr.bf16.mxu0 0
      %2110 = vmatpush1.bf16.msra.mxu0 0
      %2111 = vmatprep.subr.bf16.mxu0 0
      %2112 = vmatpush1.bf16.msra.mxu0 0
      %2113 = vmatprep.subr.bf16.mxu0 0
      %2114 = vmatpush1.bf16.msra.mxu0 0
      %2115 = vmatprep.subr.bf16.mxu0 0
      %2116 = vmatpush1.bf16.msra.mxu0 0
      %2117 = vmatprep.subr.bf16.mxu0 0
      %2118 = vmatpush1.bf16.msra.mxu0 0
      %2119 = vmatprep.subr.bf16.mxu0 0
      %2120 = vmatpush1.bf16.msra.mxu0 0
      %2121 = vmatprep.subr.bf16.mxu0 0
      %2122 = vmatpush1.bf16.msra.mxu0 0
      %2123 = vmatprep.subr.bf16.mxu0 0
      %2124 = vmatpush1.bf16.msra.mxu0 0
      %2125 = vmatprep.subr.bf16.mxu0 0
      %2126 = vmatpush1.bf16.msra.mxu0 0
      %2127 = vmatprep.subr.bf16.mxu0 0
      %2128 = vmatpush1.bf16.msra.mxu0 0
      %2129 = vmatprep.mubr.bf16.mxu0 0
      %2130 = vmatmul.mubr.bf16.gmra.mrb[0].mxu0 %v2089
      %v2131 = vpop.f32.mrb[0].mxu0
      %v2132 = vadd.f32 0.0, %v2131
      %v2133 = vpop.f32.mrb[0].mxu0
      %v2134 = vadd.f32 0.0, %v2133
      %v2135 = vpop.f32.mrb[0].mxu0
      %v2136 = vadd.f32 0.0, %v2135
      %v2137 = vpop.f32.mrb[0].mxu0
      %v2138 = vadd.f32 0.0, %v2137
      %2139 = vmatprep.mubr.bf16.mxu0 0
      %2140 = vmatmul.mubr.bf16.gmra.mrb[0].mxu0 %v2092
      %v2141 = vpop.f32.mrb[0].mxu0
      %v2142 = vadd.f32 0.0, %v2141
      %v2143 = vpop.f32.mrb[0].mxu0
      %v2144 = vadd.f32 0.0, %v2143
      %v2145 = vpop.f32.mrb[0].mxu0
      %v2146 = vadd.f32 0.0, %v2145
      %v2147 = vpop.f32.mrb[0].mxu0
      %v2148 = vadd.f32 0.0, %v2147
      %2149 = vmatprep.mubr.bf16.mxu0 0
      %2150 = vmatmul.mubr.bf16.gmra.mrb[0].mxu0 %v2095
      %v2151 = vpop.f32.mrb[0].mxu0
      %v2152 = vadd.f32 0.0, %v2151
      %v2153 = vpop.f32.mrb[0].mxu0
      %v2154 = vadd.f32 0.0, %v2153
      %v2155 = vpop.f32.mrb[0].mxu0
      %v2156 = vadd.f32 0.0, %v2155
      %v2157 = vpop.f32.mrb[0].mxu0
      %v2158 = vadd.f32 0.0, %v2157
      %2159 = vdwg.mxu0
      %v2160 = vmul.f32 %v2132, %v2067
      %v2161 = vmul.f32 %v2134, %v2068
      %v2162 = vmul.f32 %v2136, %v2069
      %v2163 = vmul.f32 %v2138, %v2070
      %v2164 = vadd.f32 %v2160, %v2162
      %v2165 = vrot.slane %v2164, 4
      %v2166 = vadd.f32 %v2164, %v2165
      %v2167 = vrot.slane %v2166, 2
      %v2168 = vadd.f32 %v2166, %v2167
      %v2169 = vrot.slane %v2168, 1
      %v2170 = vadd.f32 %v2168, %v2169
      %v2171 = vadd.f32 %v2161, %v2163
      %v2172 = vrot.slane %v2171, 4
      %v2173 = vadd.f32 %v2171, %v2172
      %v2174 = vrot.slane %v2173, 2
      %v2175 = vadd.f32 %v2173, %v2174
      %v2176 = vrot.slane %v2175, 1
      %v2177 = vadd.f32 %v2175, %v2176
      %v2178 = vmul.f32 %v2142, %v2067
      %v2179 = vmul.f32 %v2144, %v2068
      %v2180 = vmul.f32 %v2146, %v2069
      %v2181 = vmul.f32 %v2148, %v2070
      %v2182 = vadd.f32 %v2178, %v2180
      %v2183 = vrot.slane %v2182, 4
      %v2184 = vadd.f32 %v2182, %v2183
      %v2185 = vrot.slane %v2184, 2
      %v2186 = vadd.f32 %v2184, %v2185
      %v2187 = vrot.slane %v2186, 1
      %v2188 = vadd.f32 %v2186, %v2187
      %v2189 = vadd.f32 %v2179, %v2181
      %v2190 = vrot.slane %v2189, 4
      %v2191 = vadd.f32 %v2189, %v2190
      %v2192 = vrot.slane %v2191, 2
      %v2193 = vadd.f32 %v2191, %v2192
      %v2194 = vrot.slane %v2193, 1
      %v2195 = vadd.f32 %v2193, %v2194
      %v2196 = vmul.f32 %v2152, %v2067
      %v2197 = vmul.f32 %v2154, %v2068
      %v2198 = vmul.f32 %v2156, %v2069
      %v2199 = vmul.f32 %v2158, %v2070
      %v2200 = vadd.f32 %v2196, %v2198
      %v2201 = vrot.slane %v2200, 4
      %v2202 = vadd.f32 %v2200, %v2201
      %v2203 = vrot.slane %v2202, 2
      %v2204 = vadd.f32 %v2202, %v2203
      %v2205 = vrot.slane %v2204, 1
      %v2206 = vadd.f32 %v2204, %v2205
      %v2207 = vadd.f32 %v2197, %v2199
      %v2208 = vrot.slane %v2207, 4
      %v2209 = vadd.f32 %v2207, %v2208
      %v2210 = vrot.slane %v2209, 2
      %v2211 = vadd.f32 %v2209, %v2210
      %v2212 = vrot.slane %v2211, 1
      %v2213 = vadd.f32 %v2211, %v2212
      %v2214 = vsel %vm1146, %v2170, %v2188
      %v2215 = vsel %vm1146, %v2177, %v2195
      %v2216 = vsel %vm1147, %v2214, %v2206
      %v2217 = vsel %vm1147, %v2215, %v2213
      %v2218 = vld [vmem:[%s13] sm:$0xf]
      %v2219 = vld [vmem:[%s13 + $0x4] sm:$0xf]
      %v2220 = vld [vmem:[%s13 + $0x8] sm:$0xf]
      %v2221 = vld [vmem:[%s13 + $0xc] sm:$0xf]
      %v2222 = vld [vmem:[%s13 + $0x10] sm:$0xf]
      %v2223 = vld [vmem:[%s13 + $0x14] sm:$0xf]
      %v2224 = vld [vmem:[%s13 + $0x18] sm:$0xf]
      %v2225 = vld [vmem:[%s13 + $0x1c] sm:$0xf]
      %v2226 = vpack.c.bf16 %v1872, %v1872
      %v2227 = vpack.c.bf16 %v1873, %v1873
      %v2228 = vld [vmem:[%s14] sm:$0xf]
      %v2229 = vld [vmem:[%s14 + $0x4] sm:$0xf]
      %v2230 = vld [vmem:[%s14 + $0x8] sm:$0xf]
      %v2231 = vld [vmem:[%s14 + $0xc] sm:$0xf]
      %v2232 = vld [vmem:[%s14 + $0x10] sm:$0xf]
      %v2233 = vld [vmem:[%s14 + $0x14] sm:$0xf]
      %v2234 = vld [vmem:[%s14 + $0x18] sm:$0xf]
      %v2235 = vld [vmem:[%s14 + $0x1c] sm:$0xf]
      %v2236 = vpack.c.bf16 %v2216, %v2216
      %v2237 = vpack.c.bf16 %v2217, %v2217
      %v2246 = vunpack.c.l.b16 %v2228
      %v2247 = vunpack.c.l.b16 %v2229
      %v2248 = vunpack.c.l.b16 %v2230
      %v2249 = vunpack.c.l.b16 %v2231
      %v2250 = vunpack.c.l.b16 %v2232
      %v2251 = vunpack.c.l.b16 %v2233
      %v2252 = vunpack.c.l.b16 %v2234
      %v2253 = vunpack.c.l.b16 %v2235
      %v2254 = vpack.c.b16 %v2247, %v2246
      %v2255 = vpack.c.b16 %v2249, %v2248
      %v2256 = vpack.c.b16 %v2251, %v2250
      %v2257 = vpack.c.b16 %v2253, %v2252
      %v2259 = vsel %vm1139, %v2254, 0
      %v2262 = vsel %vm1139, %v2255, 0
      %v2265 = vsel %vm1139, %v2256, 0
      %v2268 = vsel %vm1139, %v2257, 0
      %v2271 = vand.u32 %v2236, %v1149
      %v2274 = vand.u32 %v2237, %v1149
      %2276 = vmatprep.subr.bf16.mxu0 %v2274
      %2277 = vmatpush1.bf16.msra.mxu0 %v2271
      %2278 = vmatprep.subr.bf16.mxu0 0
      %2279 = vmatpush1.bf16.msra.mxu0 0
      %2280 = vmatprep.subr.bf16.mxu0 0
      %2281 = vmatpush1.bf16.msra.mxu0 0
      %2282 = vmatprep.subr.bf16.mxu0 0
      %2283 = vmatpush1.bf16.msra.mxu0 0
      %2284 = vmatprep.subr.bf16.mxu0 0
      %2285 = vmatpush1.bf16.msra.mxu0 0
      %2286 = vmatprep.subr.bf16.mxu0 0
      %2287 = vmatpush1.bf16.msra.mxu0 0
      %2288 = vmatprep.subr.bf16.mxu0 0
      %2289 = vmatpush1.bf16.msra.mxu0 0
      %2290 = vmatprep.subr.bf16.mxu0 0
      %2291 = vmatpush1.bf16.msra.mxu0 0
      %2292 = vmatprep.subr.bf16.mxu0 0
      %2293 = vmatpush1.bf16.msra.mxu0 0
      %2294 = vmatprep.subr.bf16.mxu0 0
      %2295 = vmatpush1.bf16.msra.mxu0 0
      %2296 = vmatprep.subr.bf16.mxu0 0
      %2297 = vmatpush1.bf16.msra.mxu0 0
      %2298 = vmatprep.subr.bf16.mxu0 0
      %2299 = vmatpush1.bf16.msra.mxu0 0
      %2300 = vmatprep.subr.bf16.mxu0 0
      %2301 = vmatpush1.bf16.msra.mxu0 0
      %2302 = vmatprep.subr.bf16.mxu0 0
      %2303 = vmatpush1.bf16.msra.mxu0 0
      %2304 = vmatprep.subr.bf16.mxu0 0
      %2305 = vmatpush1.bf16.msra.mxu0 0
      %2306 = vmatprep.subr.bf16.mxu0 0
      %2307 = vmatpush1.bf16.msra.mxu0 0
      %2308 = vmatprep.mubr.bf16.mxu0 0
      %2309 = vmatmul.mubr.bf16.gmra.mrb[0].mxu0 %v2259
      %v2310 = vpop.f32.mrb[0].mxu0
      %v2311 = vadd.f32 0.0, %v2310
      %v2312 = vpop.f32.mrb[0].mxu0
      %v2313 = vadd.f32 0.0, %v2312
      %v2314 = vpop.f32.mrb[0].mxu0
      %v2315 = vadd.f32 0.0, %v2314
      %v2316 = vpop.f32.mrb[0].mxu0
      %v2317 = vadd.f32 0.0, %v2316
      %2318 = vmatprep.mubr.bf16.mxu0 0
      %2319 = vmatmul.mubr.bf16.gmra.mrb[0].mxu0 %v2262
      %v2320 = vpop.f32.mrb[0].mxu0
      %v2321 = vadd.f32 0.0, %v2320
      %v2322 = vpop.f32.mrb[0].mxu0
      %v2323 = vadd.f32 0.0, %v2322
      %v2324 = vpop.f32.mrb[0].mxu0
      %v2325 = vadd.f32 0.0, %v2324
      %v2326 = vpop.f32.mrb[0].mxu0
      %v2327 = vadd.f32 0.0, %v2326
      %2328 = vmatprep.mubr.bf16.mxu0 0
      %2329 = vmatmul.mubr.bf16.gmra.mrb[0].mxu0 %v2265
      %v2330 = vpop.f32.mrb[0].mxu0
      %v2331 = vadd.f32 0.0, %v2330
      %v2332 = vpop.f32.mrb[0].mxu0
      %v2333 = vadd.f32 0.0, %v2332
      %v2334 = vpop.f32.mrb[0].mxu0
      %v2335 = vadd.f32 0.0, %v2334
      %v2336 = vpop.f32.mrb[0].mxu0
      %v2337 = vadd.f32 0.0, %v2336
      %2338 = vmatprep.mubr.bf16.mxu0 0
      %2339 = vmatmul.mubr.bf16.gmra.mrb[0].mxu0 %v2268
      %v2340 = vpop.f32.mrb[0].mxu0
      %v2341 = vadd.f32 0.0, %v2340
      %v2342 = vpop.f32.mrb[0].mxu0
      %v2343 = vadd.f32 0.0, %v2342
      %v2344 = vpop.f32.mrb[0].mxu0
      %v2345 = vadd.f32 0.0, %v2344
      %v2346 = vpop.f32.mrb[0].mxu0
      %v2347 = vadd.f32 0.0, %v2346
      %2348 = vdwg.mxu0
      %v2357 = vunpack.c.l.b16 %v2218
      %v2358 = vunpack.c.l.b16 %v2219
      %v2359 = vunpack.c.l.b16 %v2220
      %v2360 = vunpack.c.l.b16 %v2221
      %v2361 = vunpack.c.l.b16 %v2222
      %v2362 = vunpack.c.l.b16 %v2223
      %v2363 = vunpack.c.l.b16 %v2224
      %v2364 = vunpack.c.l.b16 %v2225
      %v2365 = vpack.c.b16 %v2358, %v2357
      %v2366 = vpack.c.b16 %v2360, %v2359
      %v2367 = vpack.c.b16 %v2362, %v2361
      %v2368 = vpack.c.b16 %v2364, %v2363
      %v2370 = vsel %vm1139, %v2365, 0
      %v2373 = vsel %vm1139, %v2366, 0
      %v2376 = vsel %vm1139, %v2367, 0
      %v2379 = vsel %vm1139, %v2368, 0
      %v2382 = vand.u32 %v2226, %v1149
      %v2385 = vand.u32 %v2227, %v1149
      %2387 = vmatprep.subr.bf16.mxu0 %v2385
      %2388 = vmatpush1.bf16.msra.mxu0 %v2382
      %2389 = vmatprep.subr.bf16.mxu0 0
      %2390 = vmatpush1.bf16.msra.mxu0 0
      %2391 = vmatprep.subr.bf16.mxu0 0
      %2392 = vmatpush1.bf16.msra.mxu0 0
      %2393 = vmatprep.subr.bf16.mxu0 0
      %2394 = vmatpush1.bf16.msra.mxu0 0
      %2395 = vmatprep.subr.bf16.mxu0 0
      %2396 = vmatpush1.bf16.msra.mxu0 0
      %2397 = vmatprep.subr.bf16.mxu0 0
      %2398 = vmatpush1.bf16.msra.mxu0 0
      %2399 = vmatprep.subr.bf16.mxu0 0
      %2400 = vmatpush1.bf16.msra.mxu0 0
      %2401 = vmatprep.subr.bf16.mxu0 0
      %2402 = vmatpush1.bf16.msra.mxu0 0
      %2403 = vmatprep.subr.bf16.mxu0 0
      %2404 = vmatpush1.bf16.msra.mxu0 0
      %2405 = vmatprep.subr.bf16.mxu0 0
      %2406 = vmatpush1.bf16.msra.mxu0 0
      %2407 = vmatprep.subr.bf16.mxu0 0
      %2408 = vmatpush1.bf16.msra.mxu0 0
      %2409 = vmatprep.subr.bf16.mxu0 0
      %2410 = vmatpush1.bf16.msra.mxu0 0
      %2411 = vmatprep.subr.bf16.mxu0 0
      %2412 = vmatpush1.bf16.msra.mxu0 0
      %2413 = vmatprep.subr.bf16.mxu0 0
      %2414 = vmatpush1.bf16.msra.mxu0 0
      %2415 = vmatprep.subr.bf16.mxu0 0
      %2416 = vmatpush1.bf16.msra.mxu0 0
      %2417 = vmatprep.subr.bf16.mxu0 0
      %2418 = vmatpush1.bf16.msra.mxu0 0
      %2419 = vmatprep.mubr.bf16.mxu0 0
      %2420 = vmatmul.mubr.bf16.gmra.mrb[0].mxu0 %v2370
      %v2421 = vpop.f32.mrb[0].mxu0
      %v2422 = vadd.f32 %v2311, %v2421
      %v2423 = vpop.f32.mrb[0].mxu0
      %v2424 = vadd.f32 %v2313, %v2423
      %v2425 = vpop.f32.mrb[0].mxu0
      %v2426 = vadd.f32 %v2315, %v2425
      %v2427 = vpop.f32.mrb[0].mxu0
      %v2428 = vadd.f32 %v2317, %v2427
      %2429 = vmatprep.mubr.bf16.mxu0 0
      %2430 = vmatmul.mubr.bf16.gmra.mrb[0].mxu0 %v2373
      %v2431 = vpop.f32.mrb[0].mxu0
      %v2432 = vadd.f32 %v2321, %v2431
      %v2433 = vpop.f32.mrb[0].mxu0
      %v2434 = vadd.f32 %v2323, %v2433
      %v2435 = vpop.f32.mrb[0].mxu0
      %v2436 = vadd.f32 %v2325, %v2435
      %v2437 = vpop.f32.mrb[0].mxu0
      %v2438 = vadd.f32 %v2327, %v2437
      %2439 = vmatprep.mubr.bf16.mxu0 0
      %2440 = vmatmul.mubr.bf16.gmra.mrb[0].mxu0 %v2376
      %v2441 = vpop.f32.mrb[0].mxu0
      %v2442 = vadd.f32 %v2331, %v2441
      %v2443 = vpop.f32.mrb[0].mxu0
      %v2444 = vadd.f32 %v2333, %v2443
      %v2445 = vpop.f32.mrb[0].mxu0
      %v2446 = vadd.f32 %v2335, %v2445
      %v2447 = vpop.f32.mrb[0].mxu0
      %v2448 = vadd.f32 %v2337, %v2447
      %2449 = vmatprep.mubr.bf16.mxu0 0
      %2450 = vmatmul.mubr.bf16.gmra.mrb[0].mxu0 %v2379
      %v2451 = vpop.f32.mrb[0].mxu0
      %v2452 = vadd.f32 %v2341, %v2451
      %v2453 = vpop.f32.mrb[0].mxu0
      %v2454 = vadd.f32 %v2343, %v2453
      %v2455 = vpop.f32.mrb[0].mxu0
      %v2456 = vadd.f32 %v2345, %v2455
      %v2457 = vpop.f32.mrb[0].mxu0
      %v2458 = vadd.f32 %v2347, %v2457
      %2459 = vdwg.mxu0
      %v2460 = vld [vmem:[%s15] sm:$0xf]
      %v2461 = vld [vmem:[%s15 + $0x4] sm:$0xf]
      %v2462 = vld [vmem:[%s15 + $0x8] sm:$0xf]
      %v2463 = vld [vmem:[%s15 + $0xc] sm:$0xf]
      %v2464 = vld [vmem:[%s15 + $0x10] sm:$0xf]
      %v2465 = vld [vmem:[%s15 + $0x14] sm:$0xf]
      %v2466 = vld [vmem:[%s15 + $0x18] sm:$0xf]
      %v2467 = vld [vmem:[%s15 + $0x1c] sm:$0xf]
      %v2468 = vpack.c.bf16 %v1391, %v1391
      %v2469 = vpack.c.bf16 %v1392, %v1392
      %v2478 = vunpack.c.l.b16 %v2460
      %v2479 = vunpack.c.l.b16 %v2461
      %v2480 = vunpack.c.l.b16 %v2462
      %v2481 = vunpack.c.l.b16 %v2463
      %v2482 = vunpack.c.l.b16 %v2464
      %v2483 = vunpack.c.l.b16 %v2465
      %v2484 = vunpack.c.l.b16 %v2466
      %v2485 = vunpack.c.l.b16 %v2467
      %v2486 = vpack.c.b16 %v2479, %v2478
      %v2487 = vpack.c.b16 %v2481, %v2480
      %v2488 = vpack.c.b16 %v2483, %v2482
      %v2489 = vpack.c.b16 %v2485, %v2484
      %vm2490 = vcmask 15360
      %v2492 = vsel %vm2490, %v2486, 0
      %v2495 = vsel %vm2490, %v2487, 0
      %v2498 = vsel %vm2490, %v2488, 0
      %v2501 = vsel %vm2490, %v2489, 0
      %v2504 = vsel %vm1146, %v2468, 0
      %v2507 = vsel %vm1146, %v2469, 0
      %2509 = vmatprep.subr.bf16.mxu0 %v2507
      %2510 = vmatpush1.bf16.msra.mxu0 %v2504
      %2511 = vmatprep.subr.bf16.mxu0 0
      %2512 = vmatpush1.bf16.msra.mxu0 0
      %2513 = vmatprep.subr.bf16.mxu0 0
      %2514 = vmatpush1.bf16.msra.mxu0 0
      %2515 = vmatprep.subr.bf16.mxu0 0
      %2516 = vmatpush1.bf16.msra.mxu0 0
      %2517 = vmatprep.subr.bf16.mxu0 0
      %2518 = vmatpush1.bf16.msra.mxu0 0
      %2519 = vmatprep.subr.bf16.mxu0 0
      %2520 = vmatpush1.bf16.msra.mxu0 0
      %2521 = vmatprep.subr.bf16.mxu0 0
      %2522 = vmatpush1.bf16.msra.mxu0 0
      %2523 = vmatprep.subr.bf16.mxu0 0
      %2524 = vmatpush1.bf16.msra.mxu0 0
      %2525 = vmatprep.subr.bf16.mxu0 0
      %2526 = vmatpush1.bf16.msra.mxu0 0
      %2527 = vmatprep.subr.bf16.mxu0 0
      %2528 = vmatpush1.bf16.msra.mxu0 0
      %2529 = vmatprep.subr.bf16.mxu0 0
      %2530 = vmatpush1.bf16.msra.mxu0 0
      %2531 = vmatprep.subr.bf16.mxu0 0
      %2532 = vmatpush1.bf16.msra.mxu0 0
      %2533 = vmatprep.subr.bf16.mxu0 0
      %2534 = vmatpush1.bf16.msra.mxu0 0
      %2535 = vmatprep.subr.bf16.mxu0 0
      %2536 = vmatpush1.bf16.msra.mxu0 0
      %2537 = vmatprep.subr.bf16.mxu0 0
      %2538 = vmatpush1.bf16.msra.mxu0 0
      %2539 = vmatprep.subr.bf16.mxu0 0
      %2540 = vmatpush1.bf16.msra.mxu0 0
      %2541 = vmatprep.mubr.bf16.mxu0 0
      %2542 = vmatmul.mubr.bf16.gmra.mrb[0].mxu0 %v2492
      %v2543 = vpop.f32.mrb[0].mxu0
      %v2544 = vadd.f32 0.0, %v2543
      %v2545 = vpop.f32.mrb[0].mxu0
      %v2546 = vadd.f32 0.0, %v2545
      %v2547 = vpop.f32.mrb[0].mxu0
      %v2548 = vadd.f32 0.0, %v2547
      %v2549 = vpop.f32.mrb[0].mxu0
      %v2550 = vadd.f32 0.0, %v2549
      %2551 = vmatprep.mubr.bf16.mxu0 0
      %2552 = vmatmul.mubr.bf16.gmra.mrb[0].mxu0 %v2495
      %v2553 = vpop.f32.mrb[0].mxu0
      %v2554 = vadd.f32 0.0, %v2553
      %v2555 = vpop.f32.mrb[0].mxu0
      %v2556 = vadd.f32 0.0, %v2555
      %v2557 = vpop.f32.mrb[0].mxu0
      %v2558 = vadd.f32 0.0, %v2557
      %v2559 = vpop.f32.mrb[0].mxu0
      %v2560 = vadd.f32 0.0, %v2559
      %2561 = vmatprep.mubr.bf16.mxu0 0
      %2562 = vmatmul.mubr.bf16.gmra.mrb[0].mxu0 %v2498
      %v2563 = vpop.f32.mrb[0].mxu0
      %v2564 = vadd.f32 0.0, %v2563
      %v2565 = vpop.f32.mrb[0].mxu0
      %v2566 = vadd.f32 0.0, %v2565
      %v2567 = vpop.f32.mrb[0].mxu0
      %v2568 = vadd.f32 0.0, %v2567
      %v2569 = vpop.f32.mrb[0].mxu0
      %v2570 = vadd.f32 0.0, %v2569
      %2571 = vmatprep.mubr.bf16.mxu0 0
      %2572 = vmatmul.mubr.bf16.gmra.mrb[0].mxu0 %v2501
      %v2573 = vpop.f32.mrb[0].mxu0
      %v2574 = vadd.f32 0.0, %v2573
      %v2575 = vpop.f32.mrb[0].mxu0
      %v2576 = vadd.f32 0.0, %v2575
      %v2577 = vpop.f32.mrb[0].mxu0
      %v2578 = vadd.f32 0.0, %v2577
      %v2579 = vpop.f32.mrb[0].mxu0
      %v2580 = vadd.f32 0.0, %v2579
      %2581 = vdwg.mxu0
      %v2582 = vadd.f32 %v2422, %v2544
      %v2583 = vadd.f32 %v2424, %v2546
      %v2584 = vadd.f32 %v2426, %v2548
      %v2585 = vadd.f32 %v2428, %v2550
      %v2586 = vadd.f32 %v2432, %v2554
      %v2587 = vadd.f32 %v2434, %v2556
      %v2588 = vadd.f32 %v2436, %v2558
      %v2589 = vadd.f32 %v2438, %v2560
      %v2590 = vadd.f32 %v2442, %v2564
      %v2591 = vadd.f32 %v2444, %v2566
      %v2592 = vadd.f32 %v2446, %v2568
      %v2593 = vadd.f32 %v2448, %v2570
      %v2594 = vadd.f32 %v2452, %v2574
      %v2595 = vadd.f32 %v2454, %v2576
      %v2596 = vadd.f32 %v2456, %v2578
      %v2597 = vadd.f32 %v2458, %v2580
      %v2598 = vld [vmem:[%s16] sm:$0xf]
      %v2599 = vld [vmem:[%s16 + $0x4] sm:$0xf]
      %v2600 = vld [vmem:[%s16 + $0x8] sm:$0xf]
      %v2601 = vld [vmem:[%s16 + $0xc] sm:$0xf]
      %v2602 = vld [vmem:[%s16 + $0x10] sm:$0xf]
      %v2603 = vld [vmem:[%s16 + $0x14] sm:$0xf]
      %v2604 = vld [vmem:[%s16 + $0x18] sm:$0xf]
      %v2605 = vld [vmem:[%s16 + $0x1c] sm:$0xf]
      %v2606 = vpack.c.bf16 %v1526, %v1526
      %v2607 = vpack.c.bf16 %v1527, %v1527
      %v2616 = vunpack.c.l.b16 %v2598
      %v2617 = vunpack.c.l.b16 %v2599
      %v2618 = vunpack.c.l.b16 %v2600
      %v2619 = vunpack.c.l.b16 %v2601
      %v2620 = vunpack.c.l.b16 %v2602
      %v2621 = vunpack.c.l.b16 %v2603
      %v2622 = vunpack.c.l.b16 %v2604
      %v2623 = vunpack.c.l.b16 %v2605
      %v2624 = vpack.c.b16 %v2617, %v2616
      %v2625 = vpack.c.b16 %v2619, %v2618
      %v2626 = vpack.c.b16 %v2621, %v2620
      %v2627 = vpack.c.b16 %v2623, %v2622
      %v2629 = vsel %vm2490, %v2624, 0
      %v2632 = vsel %vm2490, %v2625, 0
      %v2635 = vsel %vm2490, %v2626, 0
      %v2638 = vsel %vm2490, %v2627, 0
      %v2641 = vsel %vm1146, %v2606, 0
      %v2644 = vsel %vm1146, %v2607, 0
      %2646 = vmatprep.subr.bf16.mxu0 %v2644
      %2647 = vmatpush1.bf16.msra.mxu0 %v2641
      %2648 = vmatprep.subr.bf16.mxu0 0
      %2649 = vmatpush1.bf16.msra.mxu0 0
      %2650 = vmatprep.subr.bf16.mxu0 0
      %2651 = vmatpush1.bf16.msra.mxu0 0
      %2652 = vmatprep.subr.bf16.mxu0 0
      %2653 = vmatpush1.bf16.msra.mxu0 0
      %2654 = vmatprep.subr.bf16.mxu0 0
      %2655 = vmatpush1.bf16.msra.mxu0 0
      %2656 = vmatprep.subr.bf16.mxu0 0
      %2657 = vmatpush1.bf16.msra.mxu0 0
      %2658 = vmatprep.subr.bf16.mxu0 0
      %2659 = vmatpush1.bf16.msra.mxu0 0
      %2660 = vmatprep.subr.bf16.mxu0 0
      %2661 = vmatpush1.bf16.msra.mxu0 0
      %2662 = vmatprep.subr.bf16.mxu0 0
      %2663 = vmatpush1.bf16.msra.mxu0 0
      %2664 = vmatprep.subr.bf16.mxu0 0
      %2665 = vmatpush1.bf16.msra.mxu0 0
      %2666 = vmatprep.subr.bf16.mxu0 0
      %2667 = vmatpush1.bf16.msra.mxu0 0
      %2668 = vmatprep.subr.bf16.mxu0 0
      %2669 = vmatpush1.bf16.msra.mxu0 0
      %2670 = vmatprep.subr.bf16.mxu0 0
      %2671 = vmatpush1.bf16.msra.mxu0 0
      %2672 = vmatprep.subr.bf16.mxu0 0
      %2673 = vmatpush1.bf16.msra.mxu0 0
      %2674 = vmatprep.subr.bf16.mxu0 0
      %2675 = vmatpush1.bf16.msra.mxu0 0
      %2676 = vmatprep.subr.bf16.mxu0 0
      %2677 = vmatpush1.bf16.msra.mxu0 0
      %2678 = vmatprep.mubr.bf16.mxu0 0
      %2679 = vmatmul.mubr.bf16.gmra.mrb[0].mxu0 %v2629
      %v2680 = vpop.f32.mrb[0].mxu0
      %v2681 = vadd.f32 0.0, %v2680
      %v2682 = vpop.f32.mrb[0].mxu0
      %v2683 = vadd.f32 0.0, %v2682
      %v2684 = vpop.f32.mrb[0].mxu0
      %v2685 = vadd.f32 0.0, %v2684
      %v2686 = vpop.f32.mrb[0].mxu0
      %v2687 = vadd.f32 0.0, %v2686
      %2688 = vmatprep.mubr.bf16.mxu0 0
      %2689 = vmatmul.mubr.bf16.gmra.mrb[0].mxu0 %v2632
      %v2690 = vpop.f32.mrb[0].mxu0
      %v2691 = vadd.f32 0.0, %v2690
      %v2692 = vpop.f32.mrb[0].mxu0
      %v2693 = vadd.f32 0.0, %v2692
      %v2694 = vpop.f32.mrb[0].mxu0
      %v2695 = vadd.f32 0.0, %v2694
      %v2696 = vpop.f32.mrb[0].mxu0
      %v2697 = vadd.f32 0.0, %v2696
      %2698 = vmatprep.mubr.bf16.mxu0 0
      %2699 = vmatmul.mubr.bf16.gmra.mrb[0].mxu0 %v2635
      %v2700 = vpop.f32.mrb[0].mxu0
      %v2701 = vadd.f32 0.0, %v2700
      %v2702 = vpop.f32.mrb[0].mxu0
      %v2703 = vadd.f32 0.0, %v2702
      %v2704 = vpop.f32.mrb[0].mxu0
      %v2705 = vadd.f32 0.0, %v2704
      %v2706 = vpop.f32.mrb[0].mxu0
      %v2707 = vadd.f32 0.0, %v2706
      %2708 = vmatprep.mubr.bf16.mxu0 0
      %2709 = vmatmul.mubr.bf16.gmra.mrb[0].mxu0 %v2638
      %v2710 = vpop.f32.mrb[0].mxu0
      %v2711 = vadd.f32 0.0, %v2710
      %v2712 = vpop.f32.mrb[0].mxu0
      %v2713 = vadd.f32 0.0, %v2712
      %v2714 = vpop.f32.mrb[0].mxu0
      %v2715 = vadd.f32 0.0, %v2714
      %v2716 = vpop.f32.mrb[0].mxu0
      %v2717 = vadd.f32 0.0, %v2716
      %2718 = vdwg.mxu0
      %v2719 = vadd.f32 %v2582, %v2681
      %v2720 = vadd.f32 %v2583, %v2683
      %v2721 = vadd.f32 %v2584, %v2685
      %v2722 = vadd.f32 %v2585, %v2687
      %v2723 = vadd.f32 %v2586, %v2691
      %v2724 = vadd.f32 %v2587, %v2693
      %v2725 = vadd.f32 %v2588, %v2695
      %v2726 = vadd.f32 %v2589, %v2697
      %v2727 = vadd.f32 %v2590, %v2701
      %v2728 = vadd.f32 %v2591, %v2703
      %v2729 = vadd.f32 %v2592, %v2705
      %v2730 = vadd.f32 %v2593, %v2707
      %v2731 = vadd.f32 %v2594, %v2711
      %v2732 = vadd.f32 %v2595, %v2713
      %v2733 = vadd.f32 %v2596, %v2715
      %v2734 = vadd.f32 %v2597, %v2717
      %v2735 = vld [vmem:[%s17] sm:$0xf]
      %v2736 = vld [vmem:[%s17 + $0x4] sm:$0xf]
      %v2737 = vld [vmem:[%s17 + $0x8] sm:$0xf]
      %v2738 = vld [vmem:[%s17 + $0xc] sm:$0xf]
      %v2739 = vld [vmem:[%s17 + $0x10] sm:$0xf]
      %v2740 = vld [vmem:[%s17 + $0x14] sm:$0xf]
      %v2741 = vld [vmem:[%s17 + $0x18] sm:$0xf]
      %v2742 = vld [vmem:[%s17 + $0x1c] sm:$0xf]
      %v2751 = vunpack.c.l.b16 %v2735
      %v2752 = vunpack.c.l.b16 %v2736
      %v2753 = vunpack.c.l.b16 %v2737
      %v2754 = vunpack.c.l.b16 %v2738
      %v2755 = vunpack.c.l.b16 %v2739
      %v2756 = vunpack.c.l.b16 %v2740
      %v2757 = vunpack.c.l.b16 %v2741
      %v2758 = vunpack.c.l.b16 %v2742
      %v2759 = vpack.c.b16 %v2752, %v2751
      %v2760 = vpack.c.b16 %v2754, %v2753
      %v2761 = vpack.c.b16 %v2756, %v2755
      %v2762 = vpack.c.b16 %v2758, %v2757
      %v2765 = vunpack.c.l.s4 1983009808
      %v2766 = vunpack.c.0.s8 %v2765
      %v2767 = vlaneseq
      %v2768 = vshrl.u32 %v2767, 7
      %v2769 = vsub.s32 %v2766, %v2768
      %v2770 = vrot.slane %v1084, %v2769
      %v2771 = vcombine.high %v2770, %v2770
      %v2773 = vsel %vm1139, %v2759, 0
      %v2776 = vsel %vm1139, %v2760, 0
      %v2779 = vsel %vm1139, %v2761, 0
      %v2782 = vsel %vm1139, %v2762, 0
      %v2785 = vand.u32 %v2770, %v1149
      %v2788 = vand.u32 %v2771, %v1149
      %2790 = vmatprep.subr.bf16.mxu0 %v2788
      %2791 = vmatpush1.bf16.msra.mxu0 %v2785
      %2792 = vmatprep.subr.bf16.mxu0 0
      %2793 = vmatpush1.bf16.msra.mxu0 0
      %2794 = vmatprep.subr.bf16.mxu0 0
      %2795 = vmatpush1.bf16.msra.mxu0 0
      %2796 = vmatprep.subr.bf16.mxu0 0
      %2797 = vmatpush1.bf16.msra.mxu0 0
      %2798 = vmatprep.subr.bf16.mxu0 0
      %2799 = vmatpush1.bf16.msra.mxu0 0
      %2800 = vmatprep.subr.bf16.mxu0 0
      %2801 = vmatpush1.bf16.msra.mxu0 0
      %2802 = vmatprep.subr.bf16.mxu0 0
      %2803 = vmatpush1.bf16.msra.mxu0 0
      %2804 = vmatprep.subr.bf16.mxu0 0
      %2805 = vmatpush1.bf16.msra.mxu0 0
      %2806 = vmatprep.subr.bf16.mxu0 0
      %2807 = vmatpush1.bf16.msra.mxu0 0
      %2808 = vmatprep.subr.bf16.mxu0 0
      %2809 = vmatpush1.bf16.msra.mxu0 0
      %2810 = vmatprep.subr.bf16.mxu0 0
      %2811 = vmatpush1.bf16.msra.mxu0 0
      %2812 = vmatprep.subr.bf16.mxu0 0
      %2813 = vmatpush1.bf16.msra.mxu0 0
      %2814 = vmatprep.subr.bf16.mxu0 0
      %2815 = vmatpush1.bf16.msra.mxu0 0
      %2816 = vmatprep.subr.bf16.mxu0 0
      %2817 = vmatpush1.bf16.msra.mxu0 0
      %2818 = vmatprep.subr.bf16.mxu0 0
      %2819 = vmatpush1.bf16.msra.mxu0 0
      %2820 = vmatprep.subr.bf16.mxu0 0
      %2821 = vmatpush1.bf16.msra.mxu0 0
      %2822 = vmatprep.mubr.bf16.mxu0 0
      %2823 = vmatmul.mubr.bf16.gmra.mrb[0].mxu0 %v2773
      %v2824 = vpop.f32.mrb[0].mxu0
      %v2825 = vadd.f32 0.0, %v2824
      %v2826 = vpop.f32.mrb[0].mxu0
      %v2827 = vadd.f32 0.0, %v2826
      %v2828 = vpop.f32.mrb[0].mxu0
      %v2829 = vadd.f32 0.0, %v2828
      %v2830 = vpop.f32.mrb[0].mxu0
      %v2831 = vadd.f32 0.0, %v2830
      %2832 = vmatprep.mubr.bf16.mxu0 0
      %2833 = vmatmul.mubr.bf16.gmra.mrb[0].mxu0 %v2776
      %v2834 = vpop.f32.mrb[0].mxu0
      %v2835 = vadd.f32 0.0, %v2834
      %v2836 = vpop.f32.mrb[0].mxu0
      %v2837 = vadd.f32 0.0, %v2836
      %v2838 = vpop.f32.mrb[0].mxu0
      %v2839 = vadd.f32 0.0, %v2838
      %v2840 = vpop.f32.mrb[0].mxu0
      %v2841 = vadd.f32 0.0, %v2840
      %2842 = vmatprep.mubr.bf16.mxu0 0
      %2843 = vmatmul.mubr.bf16.gmra.mrb[0].mxu0 %v2779
      %v2844 = vpop.f32.mrb[0].mxu0
      %v2845 = vadd.f32 0.0, %v2844
      %v2846 = vpop.f32.mrb[0].mxu0
      %v2847 = vadd.f32 0.0, %v2846
      %v2848 = vpop.f32.mrb[0].mxu0
      %v2849 = vadd.f32 0.0, %v2848
      %v2850 = vpop.f32.mrb[0].mxu0
      %v2851 = vadd.f32 0.0, %v2850
      %2852 = vmatprep.mubr.bf16.mxu0 0
      %2853 = vmatmul.mubr.bf16.gmra.mrb[0].mxu0 %v2782
      %v2854 = vpop.f32.mrb[0].mxu0
      %v2855 = vadd.f32 0.0, %v2854
      %v2856 = vpop.f32.mrb[0].mxu0
      %v2857 = vadd.f32 0.0, %v2856
      %v2858 = vpop.f32.mrb[0].mxu0
      %v2859 = vadd.f32 0.0, %v2858
      %v2860 = vpop.f32.mrb[0].mxu0
      %v2861 = vadd.f32 0.0, %v2860
      %2862 = vdwg.mxu0
      %v2863 = vadd.f32 %v2719, %v2825
      %v2864 = vadd.f32 %v2720, %v2827
      %v2865 = vadd.f32 %v2721, %v2829
      %v2866 = vadd.f32 %v2722, %v2831
      %v2867 = vadd.f32 %v2723, %v2835
      %v2868 = vadd.f32 %v2724, %v2837
      %v2869 = vadd.f32 %v2725, %v2839
      %v2870 = vadd.f32 %v2726, %v2841
      %v2871 = vadd.f32 %v2727, %v2845
      %v2872 = vadd.f32 %v2728, %v2847
      %v2873 = vadd.f32 %v2729, %v2849
      %v2874 = vadd.f32 %v2730, %v2851
      %v2875 = vadd.f32 %v2731, %v2855
      %v2876 = vadd.f32 %v2732, %v2857
      %v2877 = vadd.f32 %v2733, %v2859
      %v2878 = vadd.f32 %v2734, %v2861
      %v2879 = vld [vmem:[%s18] sm:$0xf]
      %v2880 = vld [vmem:[%s18 + $0x4] sm:$0xf]
      %v2881 = vld [vmem:[%s18 + $0x8] sm:$0xf]
      %v2882 = vld [vmem:[%s18 + $0xc] sm:$0xf]
      %v2883 = vld [vmem:[%s18 + $0x10] sm:$0xf]
      %v2884 = vld [vmem:[%s18 + $0x14] sm:$0xf]
      %v2885 = vld [vmem:[%s18 + $0x18] sm:$0xf]
      %v2886 = vld [vmem:[%s18 + $0x1c] sm:$0xf]
      %v2895 = vunpack.c.l.b16 %v2879
      %v2896 = vunpack.c.l.b16 %v2880
      %v2897 = vunpack.c.l.b16 %v2881
      %v2898 = vunpack.c.l.b16 %v2882
      %v2899 = vunpack.c.l.b16 %v2883
      %v2900 = vunpack.c.l.b16 %v2884
      %v2901 = vunpack.c.l.b16 %v2885
      %v2902 = vunpack.c.l.b16 %v2886
      %v2903 = vpack.c.b16 %v2896, %v2895
      %v2904 = vpack.c.b16 %v2898, %v2897
      %v2905 = vpack.c.b16 %v2900, %v2899
      %v2906 = vpack.c.b16 %v2902, %v2901
      %v2909 = vunpack.c.l.s4 1983009808
      %v2910 = vunpack.c.0.s8 %v2909
      %v2911 = vlaneseq
      %v2912 = vshrl.u32 %v2911, 7
      %v2913 = vsub.s32 %v2910, %v2912
      %v2914 = vrot.slane %v1086, %v2913
      %v2915 = vcombine.high %v2914, %v2914
      %v2917 = vsel %vm1139, %v2903, 0
      %v2920 = vsel %vm1139, %v2904, 0
      %v2923 = vsel %vm1139, %v2905, 0
      %v2926 = vsel %vm1139, %v2906, 0
      %v2929 = vand.u32 %v2914, %v1149
      %v2932 = vand.u32 %v2915, %v1149
      %2934 = vmatprep.subr.bf16.mxu0 %v2932
      %2935 = vmatpush1.bf16.msra.mxu0 %v2929
      %2936 = vmatprep.subr.bf16.mxu0 0
      %2937 = vmatpush1.bf16.msra.mxu0 0
      %2938 = vmatprep.subr.bf16.mxu0 0
      %2939 = vmatpush1.bf16.msra.mxu0 0
      %2940 = vmatprep.subr.bf16.mxu0 0
      %2941 = vmatpush1.bf16.msra.mxu0 0
      %2942 = vmatprep.subr.bf16.mxu0 0
      %2943 = vmatpush1.bf16.msra.mxu0 0
      %2944 = vmatprep.subr.bf16.mxu0 0
      %2945 = vmatpush1.bf16.msra.mxu0 0
      %2946 = vmatprep.subr.bf16.mxu0 0
      %2947 = vmatpush1.bf16.msra.mxu0 0
      %2948 = vmatprep.subr.bf16.mxu0 0
      %2949 = vmatpush1.bf16.msra.mxu0 0
      %2950 = vmatprep.subr.bf16.mxu0 0
      %2951 = vmatpush1.bf16.msra.mxu0 0
      %2952 = vmatprep.subr.bf16.mxu0 0
      %2953 = vmatpush1.bf16.msra.mxu0 0
      %2954 = vmatprep.subr.bf16.mxu0 0
      %2955 = vmatpush1.bf16.msra.mxu0 0
      %2956 = vmatprep.subr.bf16.mxu0 0
      %2957 = vmatpush1.bf16.msra.mxu0 0
      %2958 = vmatprep.subr.bf16.mxu0 0
      %2959 = vmatpush1.bf16.msra.mxu0 0
      %2960 = vmatprep.subr.bf16.mxu0 0
      %2961 = vmatpush1.bf16.msra.mxu0 0
      %2962 = vmatprep.subr.bf16.mxu0 0
      %2963 = vmatpush1.bf16.msra.mxu0 0
      %2964 = vmatprep.subr.bf16.mxu0 0
      %2965 = vmatpush1.bf16.msra.mxu0 0
      %2966 = vmatprep.mubr.bf16.mxu0 0
      %2967 = vmatmul.mubr.bf16.gmra.mrb[0].mxu0 %v2917
      %v2968 = vpop.f32.mrb[0].mxu0
      %v2969 = vadd.f32 0.0, %v2968
      %v2970 = vpop.f32.mrb[0].mxu0
      %v2971 = vadd.f32 0.0, %v2970
      %v2972 = vpop.f32.mrb[0].mxu0
      %v2973 = vadd.f32 0.0, %v2972
      %v2974 = vpop.f32.mrb[0].mxu0
      %v2975 = vadd.f32 0.0, %v2974
      %2976 = vmatprep.mubr.bf16.mxu0 0
      %2977 = vmatmul.mubr.bf16.gmra.mrb[0].mxu0 %v2920
      %v2978 = vpop.f32.mrb[0].mxu0
      %v2979 = vadd.f32 0.0, %v2978
      %v2980 = vpop.f32.mrb[0].mxu0
      %v2981 = vadd.f32 0.0, %v2980
      %v2982 = vpop.f32.mrb[0].mxu0
      %v2983 = vadd.f32 0.0, %v2982
      %v2984 = vpop.f32.mrb[0].mxu0
      %v2985 = vadd.f32 0.0, %v2984
      %2986 = vmatprep.mubr.bf16.mxu0 0
      %2987 = vmatmul.mubr.bf16.gmra.mrb[0].mxu0 %v2923
      %v2988 = vpop.f32.mrb[0].mxu0
      %v2989 = vadd.f32 0.0, %v2988
      %v2990 = vpop.f32.mrb[0].mxu0
      %v2991 = vadd.f32 0.0, %v2990
      %v2992 = vpop.f32.mrb[0].mxu0
      %v2993 = vadd.f32 0.0, %v2992
      %v2994 = vpop.f32.mrb[0].mxu0
      %v2995 = vadd.f32 0.0, %v2994
      %2996 = vmatprep.mubr.bf16.mxu0 0
      %2997 = vmatmul.mubr.bf16.gmra.mrb[0].mxu0 %v2926
      %v2998 = vpop.f32.mrb[0].mxu0
      %v2999 = vadd.f32 0.0, %v2998
      %v3000 = vpop.f32.mrb[0].mxu0
      %v3001 = vadd.f32 0.0, %v3000
      %v3002 = vpop.f32.mrb[0].mxu0
      %v3003 = vadd.f32 0.0, %v3002
      %v3004 = vpop.f32.mrb[0].mxu0
      %v3005 = vadd.f32 0.0, %v3004
      %3006 = vdwg.mxu0
      %v3007 = vadd.f32 %v2863, %v2969
      %v3008 = vadd.f32 %v2864, %v2971
      %v3009 = vadd.f32 %v2865, %v2973
      %v3010 = vadd.f32 %v2866, %v2975
      %v3011 = vadd.f32 %v2867, %v2979
      %v3012 = vadd.f32 %v2868, %v2981
      %v3013 = vadd.f32 %v2869, %v2983
      %v3014 = vadd.f32 %v2870, %v2985
      %v3015 = vadd.f32 %v2871, %v2989
      %v3016 = vadd.f32 %v2872, %v2991
      %v3017 = vadd.f32 %v2873, %v2993
      %v3018 = vadd.f32 %v2874, %v2995
      %v3019 = vadd.f32 %v2875, %v2999
      %v3020 = vadd.f32 %v2876, %v3001
      %v3021 = vadd.f32 %v2877, %v3003
      %v3022 = vadd.f32 %v2878, %v3005
      %v3023 = vld [vmem:[%s19] sm:$0xff]
      %v3024 = vld [vmem:[%s19 + $0x8] sm:$0xff]
      %v3025 = vld [vmem:[%s19 + $0x10] sm:$0xff]
      %v3026 = vld [vmem:[%s19 + $0x18] sm:$0xff]
      %v3027 = vld [vmem:[%s19 + $0x20] sm:$0xff]
      %v3028 = vld [vmem:[%s19 + $0x28] sm:$0xff]
      %v3029 = vld [vmem:[%s19 + $0x30] sm:$0xff]
      %v3030 = vld [vmem:[%s19 + $0x38] sm:$0xff]
      %3032 = vset.pattern.permute.xlu0 0
      %3033 = vperm.xlu0 %3032, %v3023
      %v3034 = vpop.permute.xlu0 %3033
      %3037 = vset.pattern.permute.xlu0 0
      %3038 = vperm.xlu0 %3037, %v3024
      %v3039 = vpop.permute.xlu0 %3038
      %3042 = vset.pattern.permute.xlu0 0
      %3043 = vperm.xlu0 %3042, %v3025
      %v3044 = vpop.permute.xlu0 %3043
      %3047 = vset.pattern.permute.xlu0 0
      %3048 = vperm.xlu0 %3047, %v3026
      %v3049 = vpop.permute.xlu0 %3048
      %3052 = vset.pattern.permute.xlu0 0
      %3053 = vperm.xlu0 %3052, %v3027
      %v3054 = vpop.permute.xlu0 %3053
      %3057 = vset.pattern.permute.xlu0 0
      %3058 = vperm.xlu0 %3057, %v3028
      %v3059 = vpop.permute.xlu0 %3058
      %3062 = vset.pattern.permute.xlu0 0
      %3063 = vperm.xlu0 %3062, %v3029
      %v3064 = vpop.permute.xlu0 %3063
      %3067 = vset.pattern.permute.xlu0 0
      %3068 = vperm.xlu0 %3067, %v3030
      %v3069 = vpop.permute.xlu0 %3068
      %v3071 = vadd.f32 %v3007, %v3034
      %v3072 = vadd.f32 %v3008, %v3034
      %v3073 = vadd.f32 %v3009, %v3039
      %v3074 = vadd.f32 %v3010, %v3039
      %v3075 = vadd.f32 %v3011, %v3044
      %v3076 = vadd.f32 %v3012, %v3044
      %v3077 = vadd.f32 %v3013, %v3049
      %v3078 = vadd.f32 %v3014, %v3049
      %v3079 = vadd.f32 %v3015, %v3054
      %v3080 = vadd.f32 %v3016, %v3054
      %v3081 = vadd.f32 %v3017, %v3059
      %v3082 = vadd.f32 %v3018, %v3059
      %v3083 = vadd.f32 %v3019, %v3064
      %v3084 = vadd.f32 %v3020, %v3064
      %v3085 = vadd.f32 %v3021, %v3069
      %v3086 = vadd.f32 %v3022, %v3069
      %v3087 = vmax.f32 %v3071, 0.0
      %v3088 = vmax.f32 %v3072, 0.0
      %v3089 = vmax.f32 %v3073, 0.0
      %v3090 = vmax.f32 %v3074, 0.0
      %v3091 = vmax.f32 %v3075, 0.0
      %v3092 = vmax.f32 %v3076, 0.0
      %v3093 = vmax.f32 %v3077, 0.0
      %v3094 = vmax.f32 %v3078, 0.0
      %v3095 = vmax.f32 %v3079, 0.0
      %v3096 = vmax.f32 %v3080, 0.0
      %v3097 = vmax.f32 %v3081, 0.0
      %v3098 = vmax.f32 %v3082, 0.0
      %v3099 = vmax.f32 %v3083, 0.0
      %v3100 = vmax.f32 %v3084, 0.0
      %v3101 = vmax.f32 %v3085, 0.0
      %v3102 = vmax.f32 %v3086, 0.0
      %v3103 = vld [vmem:[%s20] sm:$0x3]
      %v3104 = vpack.c.bf16 %v3089, %v3087
      %v3105 = vpack.c.bf16 %v3090, %v3088
      %v3106 = vpack.c.bf16 %v3093, %v3091
      %v3107 = vpack.c.bf16 %v3094, %v3092
      %v3108 = vpack.c.bf16 %v3097, %v3095
      %v3109 = vpack.c.bf16 %v3098, %v3096
      %v3110 = vpack.c.bf16 %v3101, %v3099
      %v3111 = vpack.c.bf16 %v3102, %v3100
      %v3112 = vld [vmem:[%s21] sm:$0x7]
      %3114 = vset.pattern.permute.xlu0 0
      %3115 = vperm.xlu0 %3114, %v3112
      %v3116 = vpop.permute.xlu0 %3115
      %vm3118 = vcmask 523264
      %v3120 = vsel %vm3118, %v3103, 0
      %3122 = vmatprep.subr.bf16.mxu0 %v3105
      %3123 = vmatpush1.bf16.msra.mxu0 %v3104
      %3124 = vmatprep.subr.bf16.mxu0 %v3107
      %3125 = vmatpush1.bf16.msra.mxu0 %v3106
      %3126 = vmatprep.subr.bf16.mxu0 %v3109
      %3127 = vmatpush1.bf16.msra.mxu0 %v3108
      %3128 = vmatprep.subr.bf16.mxu0 %v3111
      %3129 = vmatpush1.bf16.msra.mxu0 %v3110
      %3130 = vmatprep.subr.bf16.mxu0 0
      %3131 = vmatpush1.bf16.msra.mxu0 0
      %3132 = vmatprep.subr.bf16.mxu0 0
      %3133 = vmatpush1.bf16.msra.mxu0 0
      %3134 = vmatprep.subr.bf16.mxu0 0
      %3135 = vmatpush1.bf16.msra.mxu0 0
      %3136 = vmatprep.subr.bf16.mxu0 0
      %3137 = vmatpush1.bf16.msra.mxu0 0
      %3138 = vmatprep.subr.bf16.mxu0 0
      %3139 = vmatpush1.bf16.msra.mxu0 0
      %3140 = vmatprep.subr.bf16.mxu0 0
      %3141 = vmatpush1.bf16.msra.mxu0 0
      %3142 = vmatprep.subr.bf16.mxu0 0
      %3143 = vmatpush1.bf16.msra.mxu0 0
      %3144 = vmatprep.subr.bf16.mxu0 0
      %3145 = vmatpush1.bf16.msra.mxu0 0
      %3146 = vmatprep.subr.bf16.mxu0 0
      %3147 = vmatpush1.bf16.msra.mxu0 0
      %3148 = vmatprep.subr.bf16.mxu0 0
      %3149 = vmatpush1.bf16.msra.mxu0 0
      %3150 = vmatprep.subr.bf16.mxu0 0
      %3151 = vmatpush1.bf16.msra.mxu0 0
      %3152 = vmatprep.subr.bf16.mxu0 0
      %3153 = vmatpush1.bf16.msra.mxu0 0
      %3154 = vmatprep.mubr.bf16.mxu0 0
      %3155 = vmatmul.mubr.bf16.gmra.mrb[0].mxu0 %v3120
      %v3156 = vpop.f32.mrb[0].mxu0
      %v3157 = vadd.f32 %v3116, %v3156
      %v3158 = vpop.f32.mrb[0].mxu0
      %v3159 = vadd.f32 %v3116, %v3158
      %v3160 = vpop.f32.mrb[0].mxu0
      %v3161 = vpop.f32.mrb[0].mxu0
      %3162 = vdwg.mxu0
      %v3163 = vtanh.pop %v3157
      %v3164 = vtanh.pop %v3159
      %v3165 = vadd.f32 %v3163, 1.0
      %v3166 = vadd.f32 %v3164, 1.0
      %v3167 = vmul.f32 %v3165, 0.5
      %v3168 = vmul.f32 %v3166, 0.5
      %v3169 = vpack.c.bf16 %v3167, %v3167
      %v3170 = vpack.c.bf16 %v3168, %v3168
      %v3172 = vand.u32 %v3169, %v1149
      %v3175 = vand.u32 %v3170, %v1149
      %3177 = vmatprep.subr.bf16.mxu0 %v3175
      %3178 = vmatpush1.bf16.msra.mxu0 %v3172
      %3179 = vmatprep.subr.bf16.mxu0 0
      %3180 = vmatpush1.bf16.msra.mxu0 0
      %3181 = vmatprep.subr.bf16.mxu0 0
      %3182 = vmatpush1.bf16.msra.mxu0 0
      %3183 = vmatprep.subr.bf16.mxu0 0
      %3184 = vmatpush1.bf16.msra.mxu0 0
      %3185 = vmatprep.subr.bf16.mxu0 0
      %3186 = vmatpush1.bf16.msra.mxu0 0
      %3187 = vmatprep.subr.bf16.mxu0 0
      %3188 = vmatpush1.bf16.msra.mxu0 0
      %3189 = vmatprep.subr.bf16.mxu0 0
      %3190 = vmatpush1.bf16.msra.mxu0 0
      %3191 = vmatprep.subr.bf16.mxu0 0
      %3192 = vmatpush1.bf16.msra.mxu0 0
      %3193 = vmatprep.subr.bf16.mxu0 0
      %3194 = vmatpush1.bf16.msra.mxu0 0
      %3195 = vmatprep.subr.bf16.mxu0 0
      %3196 = vmatpush1.bf16.msra.mxu0 0
      %3197 = vmatprep.subr.bf16.mxu0 0
      %3198 = vmatpush1.bf16.msra.mxu0 0
      %3199 = vmatprep.subr.bf16.mxu0 0
      %3200 = vmatpush1.bf16.msra.mxu0 0
      %3201 = vmatprep.subr.bf16.mxu0 0
      %3202 = vmatpush1.bf16.msra.mxu0 0
      %3203 = vmatprep.subr.bf16.mxu0 0
      %3204 = vmatpush1.bf16.msra.mxu0 0
      %3205 = vmatprep.subr.bf16.mxu0 0
      %3206 = vmatpush1.bf16.msra.mxu0 0
      %3207 = vmatprep.subr.bf16.mxu0 0
      %3208 = vmatpush1.bf16.msra.mxu0 0
      %3209 = vmatprep.mubr.bf16.mxu0 0
      %3210 = vmatmul.mubr.bf16.gmra.mrb[0].mxu0 %v1141
      %v3211 = vpop.f32.mrb[0].mxu0
      %v3212 = vadd.f32 0.0, %v3211
      %v3213 = vpop.f32.mrb[0].mxu0
      %v3214 = vadd.f32 0.0, %v3213
      %v3215 = vpop.f32.mrb[0].mxu0
      %v3216 = vadd.f32 0.0, %v3215
      %v3217 = vpop.f32.mrb[0].mxu0
      %v3218 = vadd.f32 0.0, %v3217
      %3219 = vmatprep.mubr.bf16.mxu0 0
      %3220 = vmatmul.mubr.bf16.gmra.mrb[0].mxu0 %v1144
      %v3221 = vpop.f32.mrb[0].mxu0
      %v3222 = vadd.f32 0.0, %v3221
      %v3223 = vpop.f32.mrb[0].mxu0
      %v3224 = vadd.f32 0.0, %v3223
      %v3225 = vpop.f32.mrb[0].mxu0
      %v3226 = vadd.f32 0.0, %v3225
      %v3227 = vpop.f32.mrb[0].mxu0
      %v3228 = vadd.f32 0.0, %v3227
      %3229 = vdwg.mxu0
      %3230 = vmatprep.subr.bf16.mxu0 %v1154
      %3231 = vmatpush1.bf16.msra.mxu0 %v1151
      %3232 = vmatprep.subr.bf16.mxu0 0
      %3233 = vmatpush1.bf16.msra.mxu0 0
      %3234 = vmatprep.subr.bf16.mxu0 0
      %3235 = vmatpush1.bf16.msra.mxu0 0
      %3236 = vmatprep.subr.bf16.mxu0 0
      %3237 = vmatpush1.bf16.msra.mxu0 0
      %3238 = vmatprep.subr.bf16.mxu0 0
      %3239 = vmatpush1.bf16.msra.mxu0 0
      %3240 = vmatprep.subr.bf16.mxu0 0
      %3241 = vmatpush1.bf16.msra.mxu0 0
      %3242 = vmatprep.subr.bf16.mxu0 0
      %3243 = vmatpush1.bf16.msra.mxu0 0
      %3244 = vmatprep.subr.bf16.mxu0 0
      %3245 = vmatpush1.bf16.msra.mxu0 0
      %3246 = vmatprep.subr.bf16.mxu0 0
      %3247 = vmatpush1.bf16.msra.mxu0 0
      %3248 = vmatprep.subr.bf16.mxu0 0
      %3249 = vmatpush1.bf16.msra.mxu0 0
      %3250 = vmatprep.subr.bf16.mxu0 0
      %3251 = vmatpush1.bf16.msra.mxu0 0
      %3252 = vmatprep.subr.bf16.mxu0 0
      %3253 = vmatpush1.bf16.msra.mxu0 0
      %3254 = vmatprep.subr.bf16.mxu0 0
      %3255 = vmatpush1.bf16.msra.mxu0 0
      %3256 = vmatprep.subr.bf16.mxu0 0
      %3257 = vmatpush1.bf16.msra.mxu0 0
      %3258 = vmatprep.subr.bf16.mxu0 0
      %3259 = vmatpush1.bf16.msra.mxu0 0
      %3260 = vmatprep.subr.bf16.mxu0 0
      %3261 = vmatpush1.bf16.msra.mxu0 0
      %3262 = vmatprep.mubr.bf16.mxu0 0
      %3263 = vmatmul.mubr.bf16.gmra.mrb[0].mxu0 %v1229
      %v3264 = vpop.f32.mrb[0].mxu0
      %v3265 = vadd.f32 %v3212, %v3264
      %v3266 = vpop.f32.mrb[0].mxu0
      %v3267 = vadd.f32 %v3214, %v3266
      %v3268 = vpop.f32.mrb[0].mxu0
      %v3269 = vadd.f32 %v3216, %v3268
      %v3270 = vpop.f32.mrb[0].mxu0
      %v3271 = vadd.f32 %v3218, %v3270
      %3272 = vmatprep.mubr.bf16.mxu0 0
      %3273 = vmatmul.mubr.bf16.gmra.mrb[0].mxu0 %v1232
      %v3274 = vpop.f32.mrb[0].mxu0
      %v3275 = vadd.f32 %v3222, %v3274
      %v3276 = vpop.f32.mrb[0].mxu0
      %v3277 = vadd.f32 %v3224, %v3276
      %v3278 = vpop.f32.mrb[0].mxu0
      %v3279 = vadd.f32 %v3226, %v3278
      %v3280 = vpop.f32.mrb[0].mxu0
      %v3281 = vadd.f32 %v3228, %v3280
      %3282 = vdwg.mxu0
      %v3283 = vadd.f32 %v3265, %v1300
      %v3284 = vadd.f32 %v3267, %v1300
      %v3285 = vadd.f32 %v3269, %v1305
      %v3286 = vadd.f32 %v3271, %v1305
      %v3287 = vadd.f32 %v3275, %v1310
      %v3288 = vadd.f32 %v3277, %v1310
      %v3289 = vadd.f32 %v3279, %v1315
      %v3290 = vadd.f32 %v3281, %v1315
      %v3291 = vmax.f32 %v3283, 0.0
      %v3292 = vmax.f32 %v3284, 0.0
      %v3293 = vmax.f32 %v3285, 0.0
      %v3294 = vmax.f32 %v3286, 0.0
      %v3295 = vmax.f32 %v3287, 0.0
      %v3296 = vmax.f32 %v3288, 0.0
      %v3297 = vmax.f32 %v3289, 0.0
      %v3298 = vmax.f32 %v3290, 0.0
      %v3299 = vpack.c.bf16 %v3293, %v3291
      %v3300 = vpack.c.bf16 %v3294, %v3292
      %v3301 = vpack.c.bf16 %v3297, %v3295
      %v3302 = vpack.c.bf16 %v3298, %v3296
      %3303 = vmatprep.subr.bf16.mxu0 %v3300
      %3304 = vmatpush1.bf16.msra.mxu0 %v3299
      %3305 = vmatprep.subr.bf16.mxu0 %v3302
      %3306 = vmatpush1.bf16.msra.mxu0 %v3301
      %3307 = vmatprep.subr.bf16.mxu0 0
      %3308 = vmatpush1.bf16.msra.mxu0 0
      %3309 = vmatprep.subr.bf16.mxu0 0
      %3310 = vmatpush1.bf16.msra.mxu0 0
      %3311 = vmatprep.subr.bf16.mxu0 0
      %3312 = vmatpush1.bf16.msra.mxu0 0
      %3313 = vmatprep.subr.bf16.mxu0 0
      %3314 = vmatpush1.bf16.msra.mxu0 0
      %3315 = vmatprep.subr.bf16.mxu0 0
      %3316 = vmatpush1.bf16.msra.mxu0 0
      %3317 = vmatprep.subr.bf16.mxu0 0
      %3318 = vmatpush1.bf16.msra.mxu0 0
      %3319 = vmatprep.subr.bf16.mxu0 0
      %3320 = vmatpush1.bf16.msra.mxu0 0
      %3321 = vmatprep.subr.bf16.mxu0 0
      %3322 = vmatpush1.bf16.msra.mxu0 0
      %3323 = vmatprep.subr.bf16.mxu0 0
      %3324 = vmatpush1.bf16.msra.mxu0 0
      %3325 = vmatprep.subr.bf16.mxu0 0
      %3326 = vmatpush1.bf16.msra.mxu0 0
      %3327 = vmatprep.subr.bf16.mxu0 0
      %3328 = vmatpush1.bf16.msra.mxu0 0
      %3329 = vmatprep.subr.bf16.mxu0 0
      %3330 = vmatpush1.bf16.msra.mxu0 0
      %3331 = vmatprep.subr.bf16.mxu0 0
      %3332 = vmatpush1.bf16.msra.mxu0 0
      %3333 = vmatprep.subr.bf16.mxu0 0
      %3334 = vmatpush1.bf16.msra.mxu0 0
      %3335 = vmatprep.mubr.bf16.mxu0 0
      %3336 = vmatmul.mubr.bf16.gmra.mrb[0].mxu0 %v1346
      %v3337 = vpop.f32.mrb[0].mxu0
      %v3338 = vadd.f32 %v1342, %v3337
      %v3339 = vpop.f32.mrb[0].mxu0
      %v3340 = vadd.f32 %v1342, %v3339
      %v3341 = vpop.f32.mrb[0].mxu0
      %v3342 = vpop.f32.mrb[0].mxu0
      %3343 = vdwg.mxu0
      %v3344 = vtanh.pop %v3338
      %v3345 = vtanh.pop %v3340
      %v3346 = vmul.f32 %v3344, 2.0
      %v3347 = vmul.f32 %v3345, 2.0
      %v3350 = vcombine.low %v3346, %v3347
      %v3352 = vunpack.c.l.s4 1966171168
      %v3353 = vunpack.c.0.s8 %v3352
      %v3354 = vlaneseq
      %v3355 = vshrl.u32 %v3354, 7
      %v3356 = vsub.s32 %v3353, %v3355
      %v3357 = vrot.slane %v3350, %v3356
      %v3359 = vunpack.c.l.s4 1966171168
      %v3360 = vunpack.c.0.s8 %v3359
      %v3361 = vlaneseq
      %v3362 = vshrl.u32 %v3361, 7
      %v3363 = vsub.s32 %v3360, %v3362
      %v3364 = vrot.slane %v3357, %v3363
      %v3366 = vadd.f32 %v1082, %v3364
      %v3367 = vmul.f32 %v3366, %v1549
      %v3368 = vmul.f32 %v3367, 2.0
      %v3369 = vsub.f32 %v3368, 1.0
      %v3370 = vcombine.high %v3357, %v3357
      %v3372 = vunpack.c.l.s4 1966171168
      %v3373 = vunpack.c.0.s8 %v3372
      %v3374 = vlaneseq
      %v3375 = vshrl.u32 %v3374, 7
      %v3376 = vsub.s32 %v3373, %v3375
      %v3377 = vrot.slane %v3370, %v3376
      %v3379 = vadd.f32 %v1083, %v3377
      %v3380 = vmul.f32 %v3379, %v1549
      %v3381 = vmul.f32 %v3380, 2.0
      %v3382 = vsub.f32 %v3381, 1.0
      %v3383 = vadd.f32 %v3369, 1.0
      %v3384 = vmul.f32 %v3383, 16.0
      %v3385 = vsub.f32 %v3384, 1.0
      %v3386 = vmul.f32 %v3385, 0.5
      %v3387 = vadd.f32 %v3382, 1.0
      %v3388 = vmul.f32 %v3387, 16.0
      %v3389 = vsub.f32 %v3388, 1.0
      %v3390 = vmul.f32 %v3389, 0.5
      %v3391 = vfloor.f32 %v3386
      %v3392 = vfloor.f32 %v3390
      %v3393 = vsub.f32 %v3386, %v3391
      %v3394 = vsub.f32 1.0, %v3393
      %v3395 = vsub.f32 %v3390, %v3392
      %v3396 = vsub.f32 1.0, %v3395
      %vm3397 = vcmp.ge.f32.partialorder %v3391, 0.0
      %vm3398 = vcmp.le.f32.partialorder %v3391, 15.0
      %vm3399 = vmand %vm3397, %vm3398
      %v3400 = vmax.f32 %v3391, 0.0
      %v3401 = vmin.f32 %v3400, 15.0
      %v3402 = vcvt.f32.s32.to.zero.pseudo %v3401
      %v3403 = vsel %vm3399, %v3394, 0.0
      %v3404 = vlaneseq
      %v3405 = vshrl.u32 %v3404, 7
      %v3406 = vsub.s32 0, %v3405
      %v3407 = vrot.slane %v3402, %v3406
      %v3408 = vlaneseq
      %v3409 = vshrl.u32 %v3408, 7
      %v3410 = vsub.s32 1, %v3409
      %v3411 = vrot.slane %v3402, %v3410
      %vm3412 = vcmp.eq.s32.totalorder %v1106, %v3407
      %vm3413 = vcmp.eq.s32.totalorder %v1106, %v3411
      %vm3414 = vcmp.eq.s32.totalorder %v1107, %v3407
      %vm3415 = vcmp.eq.s32.totalorder %v1107, %v3411
      %v3417 = vlaneseq
      %v3418 = vshrl.u32 %v3417, 7
      %v3419 = vsub.s32 0, %v3418
      %v3420 = vrot.slane %v3403, %v3419
      %v3421 = vlaneseq
      %v3422 = vshrl.u32 %v3421, 7
      %v3423 = vsub.s32 1, %v3422
      %v3424 = vrot.slane %v3403, %v3423
      %v3427 = vsel %vm3412, %v3420, 0.0
      %v3428 = vsel %vm3413, %v3424, 0.0
      %v3429 = vsel %vm3414, %v3420, 0.0
      %v3430 = vsel %vm3415, %v3424, 0.0
      %v3431 = vadd.f32 %v3391, 1.0
      %vm3432 = vcmp.ge.f32.partialorder %v3431, 0.0
      %vm3433 = vcmp.le.f32.partialorder %v3431, 15.0
      %vm3434 = vmand %vm3432, %vm3433
      %v3435 = vmax.f32 %v3431, 0.0
      %v3436 = vmin.f32 %v3435, 15.0
      %v3437 = vcvt.f32.s32.to.zero.pseudo %v3436
      %v3438 = vsel %vm3434, %v3393, 0.0
      %v3439 = vlaneseq
      %v3440 = vshrl.u32 %v3439, 7
      %v3441 = vsub.s32 0, %v3440
      %v3442 = vrot.slane %v3437, %v3441
      %v3443 = vlaneseq
      %v3444 = vshrl.u32 %v3443, 7
      %v3445 = vsub.s32 1, %v3444
      %v3446 = vrot.slane %v3437, %v3445
      %vm3447 = vcmp.eq.s32.totalorder %v1106, %v3442
      %vm3448 = vcmp.eq.s32.totalorder %v1106, %v3446
      %vm3449 = vcmp.eq.s32.totalorder %v1107, %v3442
      %vm3450 = vcmp.eq.s32.totalorder %v1107, %v3446
      %v3452 = vlaneseq
      %v3453 = vshrl.u32 %v3452, 7
      %v3454 = vsub.s32 0, %v3453
      %v3455 = vrot.slane %v3438, %v3454
      %v3456 = vlaneseq
      %v3457 = vshrl.u32 %v3456, 7
      %v3458 = vsub.s32 1, %v3457
      %v3459 = vrot.slane %v3438, %v3458
      %v3462 = vsel %vm3447, %v3455, 0.0
      %v3463 = vsel %vm3448, %v3459, 0.0
      %v3464 = vsel %vm3449, %v3455, 0.0
      %v3465 = vsel %vm3450, %v3459, 0.0
      %v3466 = vadd.f32 %v3427, %v3462
      %v3467 = vadd.f32 %v3428, %v3463
      %v3468 = vadd.f32 %v3429, %v3464
      %v3469 = vadd.f32 %v3430, %v3465
      %vm3470 = vcmp.ge.f32.partialorder %v3392, 0.0
      %vm3471 = vcmp.le.f32.partialorder %v3392, 15.0
      %vm3472 = vmand %vm3470, %vm3471
      %v3473 = vmax.f32 %v3392, 0.0
      %v3474 = vmin.f32 %v3473, 15.0
      %v3475 = vcvt.f32.s32.to.zero.pseudo %v3474
      %v3476 = vsel %vm3472, %v3396, 0.0
      %v3477 = vlaneseq
      %v3478 = vshrl.u32 %v3477, 7
      %v3479 = vsub.s32 0, %v3478
      %v3480 = vrot.slane %v3475, %v3479
      %v3481 = vlaneseq
      %v3482 = vshrl.u32 %v3481, 7
      %v3483 = vsub.s32 1, %v3482
      %v3484 = vrot.slane %v3475, %v3483
      %vm3485 = vcmp.eq.s32.totalorder %v1106, %v3480
      %vm3486 = vcmp.eq.s32.totalorder %v1106, %v3484
      %vm3487 = vcmp.eq.s32.totalorder %v1107, %v3480
      %vm3488 = vcmp.eq.s32.totalorder %v1107, %v3484
      %v3490 = vlaneseq
      %v3491 = vshrl.u32 %v3490, 7
      %v3492 = vsub.s32 0, %v3491
      %v3493 = vrot.slane %v3476, %v3492
      %v3494 = vlaneseq
      %v3495 = vshrl.u32 %v3494, 7
      %v3496 = vsub.s32 1, %v3495
      %v3497 = vrot.slane %v3476, %v3496
      %v3500 = vsel %vm3485, %v3493, 0.0
      %v3501 = vsel %vm3486, %v3497, 0.0
      %v3502 = vsel %vm3487, %v3493, 0.0
      %v3503 = vsel %vm3488, %v3497, 0.0
      %v3504 = vadd.f32 %v3392, 1.0
      %vm3505 = vcmp.ge.f32.partialorder %v3504, 0.0
      %vm3506 = vcmp.le.f32.partialorder %v3504, 15.0
      %vm3507 = vmand %vm3505, %vm3506
      %v3508 = vmax.f32 %v3504, 0.0
      %v3509 = vmin.f32 %v3508, 15.0
      %v3510 = vcvt.f32.s32.to.zero.pseudo %v3509
      %v3511 = vsel %vm3507, %v3395, 0.0
      %v3512 = vlaneseq
      %v3513 = vshrl.u32 %v3512, 7
      %v3514 = vsub.s32 0, %v3513
      %v3515 = vrot.slane %v3510, %v3514
      %v3516 = vlaneseq
      %v3517 = vshrl.u32 %v3516, 7
      %v3518 = vsub.s32 1, %v3517
      %v3519 = vrot.slane %v3510, %v3518
      %vm3520 = vcmp.eq.s32.totalorder %v1106, %v3515
      %vm3521 = vcmp.eq.s32.totalorder %v1106, %v3519
      %vm3522 = vcmp.eq.s32.totalorder %v1107, %v3515
      %vm3523 = vcmp.eq.s32.totalorder %v1107, %v3519
      %v3525 = vlaneseq
      %v3526 = vshrl.u32 %v3525, 7
      %v3527 = vsub.s32 0, %v3526
      %v3528 = vrot.slane %v3511, %v3527
      %v3529 = vlaneseq
      %v3530 = vshrl.u32 %v3529, 7
      %v3531 = vsub.s32 1, %v3530
      %v3532 = vrot.slane %v3511, %v3531
      %v3535 = vsel %vm3520, %v3528, 0.0
      %v3536 = vsel %vm3521, %v3532, 0.0
      %v3537 = vsel %vm3522, %v3528, 0.0
      %v3538 = vsel %vm3523, %v3532, 0.0
      %v3539 = vadd.f32 %v3500, %v3535
      %v3540 = vadd.f32 %v3501, %v3536
      %v3541 = vadd.f32 %v3502, %v3537
      %v3542 = vadd.f32 %v3503, %v3538
      %v3543 = vpack.c.bf16 %v3468, %v3466
      %v3544 = vpack.c.bf16 %v3469, %v3467
      %v3551 = vunpack.c.l.b16 %v1093
      %v3552 = vunpack.c.l.b16 %v1094
      %v3553 = vunpack.c.l.b16 %v1095
      %v3554 = vunpack.c.l.b16 %v1096
      %v3555 = vunpack.c.l.b16 %v1097
      %v3556 = vunpack.c.l.b16 %v1098
      %v3557 = vpack.c.b16 %v3552, %v3551
      %v3558 = vpack.c.b16 %v3554, %v3553
      %v3559 = vpack.c.b16 %v3556, %v3555
      %v3561 = vsel %vm1743, %v3557, 0
      %v3564 = vsel %vm1743, %v3558, 0
      %v3567 = vsel %vm1743, %v3559, 0
      %3569 = vmatprep.subr.bf16.mxu0 %v3544
      %3570 = vmatpush1.bf16.msra.mxu0 %v3543
      %3571 = vmatprep.subr.bf16.mxu0 0
      %3572 = vmatpush1.bf16.msra.mxu0 0
      %3573 = vmatprep.subr.bf16.mxu0 0
      %3574 = vmatpush1.bf16.msra.mxu0 0
      %3575 = vmatprep.subr.bf16.mxu0 0
      %3576 = vmatpush1.bf16.msra.mxu0 0
      %3577 = vmatprep.subr.bf16.mxu0 0
      %3578 = vmatpush1.bf16.msra.mxu0 0
      %3579 = vmatprep.subr.bf16.mxu0 0
      %3580 = vmatpush1.bf16.msra.mxu0 0
      %3581 = vmatprep.subr.bf16.mxu0 0
      %3582 = vmatpush1.bf16.msra.mxu0 0
      %3583 = vmatprep.subr.bf16.mxu0 0
      %3584 = vmatpush1.bf16.msra.mxu0 0
      %3585 = vmatprep.subr.bf16.mxu0 0
      %3586 = vmatpush1.bf16.msra.mxu0 0
      %3587 = vmatprep.subr.bf16.mxu0 0
      %3588 = vmatpush1.bf16.msra.mxu0 0
      %3589 = vmatprep.subr.bf16.mxu0 0
      %3590 = vmatpush1.bf16.msra.mxu0 0
      %3591 = vmatprep.subr.bf16.mxu0 0
      %3592 = vmatpush1.bf16.msra.mxu0 0
      %3593 = vmatprep.subr.bf16.mxu0 0
      %3594 = vmatpush1.bf16.msra.mxu0 0
      %3595 = vmatprep.subr.bf16.mxu0 0
      %3596 = vmatpush1.bf16.msra.mxu0 0
      %3597 = vmatprep.subr.bf16.mxu0 0
      %3598 = vmatpush1.bf16.msra.mxu0 0
      %3599 = vmatprep.subr.bf16.mxu0 0
      %3600 = vmatpush1.bf16.msra.mxu0 0
      %3601 = vmatprep.mubr.bf16.mxu0 0
      %3602 = vmatmul.mubr.bf16.gmra.mrb[0].mxu0 %v3561
      %v3603 = vpop.f32.mrb[0].mxu0
      %v3604 = vadd.f32 0.0, %v3603
      %v3605 = vpop.f32.mrb[0].mxu0
      %v3606 = vadd.f32 0.0, %v3605
      %v3607 = vpop.f32.mrb[0].mxu0
      %v3608 = vadd.f32 0.0, %v3607
      %v3609 = vpop.f32.mrb[0].mxu0
      %v3610 = vadd.f32 0.0, %v3609
      %3611 = vmatprep.mubr.bf16.mxu0 0
      %3612 = vmatmul.mubr.bf16.gmra.mrb[0].mxu0 %v3564
      %v3613 = vpop.f32.mrb[0].mxu0
      %v3614 = vadd.f32 0.0, %v3613
      %v3615 = vpop.f32.mrb[0].mxu0
      %v3616 = vadd.f32 0.0, %v3615
      %v3617 = vpop.f32.mrb[0].mxu0
      %v3618 = vadd.f32 0.0, %v3617
      %v3619 = vpop.f32.mrb[0].mxu0
      %v3620 = vadd.f32 0.0, %v3619
      %3621 = vmatprep.mubr.bf16.mxu0 0
      %3622 = vmatmul.mubr.bf16.gmra.mrb[0].mxu0 %v3567
      %v3623 = vpop.f32.mrb[0].mxu0
      %v3624 = vadd.f32 0.0, %v3623
      %v3625 = vpop.f32.mrb[0].mxu0
      %v3626 = vadd.f32 0.0, %v3625
      %v3627 = vpop.f32.mrb[0].mxu0
      %v3628 = vadd.f32 0.0, %v3627
      %v3629 = vpop.f32.mrb[0].mxu0
      %v3630 = vadd.f32 0.0, %v3629
      %3631 = vdwg.mxu0
      %v3632 = vmul.f32 %v3604, %v3539
      %v3633 = vmul.f32 %v3606, %v3540
      %v3634 = vmul.f32 %v3608, %v3541
      %v3635 = vmul.f32 %v3610, %v3542
      %v3636 = vadd.f32 %v3632, %v3634
      %v3637 = vrot.slane %v3636, 4
      %v3638 = vadd.f32 %v3636, %v3637
      %v3639 = vrot.slane %v3638, 2
      %v3640 = vadd.f32 %v3638, %v3639
      %v3641 = vrot.slane %v3640, 1
      %v3642 = vadd.f32 %v3640, %v3641
      %v3643 = vadd.f32 %v3633, %v3635
      %v3644 = vrot.slane %v3643, 4
      %v3645 = vadd.f32 %v3643, %v3644
      %v3646 = vrot.slane %v3645, 2
      %v3647 = vadd.f32 %v3645, %v3646
      %v3648 = vrot.slane %v3647, 1
      %v3649 = vadd.f32 %v3647, %v3648
      %v3650 = vmul.f32 %v3614, %v3539
      %v3651 = vmul.f32 %v3616, %v3540
      %v3652 = vmul.f32 %v3618, %v3541
      %v3653 = vmul.f32 %v3620, %v3542
      %v3654 = vadd.f32 %v3650, %v3652
      %v3655 = vrot.slane %v3654, 4
      %v3656 = vadd.f32 %v3654, %v3655
      %v3657 = vrot.slane %v3656, 2
      %v3658 = vadd.f32 %v3656, %v3657
      %v3659 = vrot.slane %v3658, 1
      %v3660 = vadd.f32 %v3658, %v3659
      %v3661 = vadd.f32 %v3651, %v3653
      %v3662 = vrot.slane %v3661, 4
      %v3663 = vadd.f32 %v3661, %v3662
      %v3664 = vrot.slane %v3663, 2
      %v3665 = vadd.f32 %v3663, %v3664
      %v3666 = vrot.slane %v3665, 1
      %v3667 = vadd.f32 %v3665, %v3666
      %v3668 = vmul.f32 %v3624, %v3539
      %v3669 = vmul.f32 %v3626, %v3540
      %v3670 = vmul.f32 %v3628, %v3541
      %v3671 = vmul.f32 %v3630, %v3542
      %v3672 = vadd.f32 %v3668, %v3670
      %v3673 = vrot.slane %v3672, 4
      %v3674 = vadd.f32 %v3672, %v3673
      %v3675 = vrot.slane %v3674, 2
      %v3676 = vadd.f32 %v3674, %v3675
      %v3677 = vrot.slane %v3676, 1
      %v3678 = vadd.f32 %v3676, %v3677
      %v3679 = vadd.f32 %v3669, %v3671
      %v3680 = vrot.slane %v3679, 4
      %v3681 = vadd.f32 %v3679, %v3680
      %v3682 = vrot.slane %v3681, 2
      %v3683 = vadd.f32 %v3681, %v3682
      %v3684 = vrot.slane %v3683, 1
      %v3685 = vadd.f32 %v3683, %v3684
      %v3686 = vsel %vm1146, %v3642, %v3660
      %v3687 = vsel %vm1146, %v3649, %v3667
      %v3688 = vsel %vm1147, %v3686, %v3678
      %v3689 = vsel %vm1147, %v3687, %v3685
      %v3690 = vld [vmem:[%s22] sm:$0xf]
      %v3691 = vld [vmem:[%s22 + $0x4] sm:$0xf]
      %v3692 = vld [vmem:[%s22 + $0x8] sm:$0xf]
      %v3693 = vld [vmem:[%s22 + $0xc] sm:$0xf]
      %v3694 = vld [vmem:[%s22 + $0x10] sm:$0xf]
      %v3695 = vld [vmem:[%s22 + $0x14] sm:$0xf]
      %v3696 = vld [vmem:[%s22 + $0x18] sm:$0xf]
      %v3697 = vld [vmem:[%s22 + $0x1c] sm:$0xf]
      %v3698 = vpack.c.bf16 %v3163, %v3163
      %v3699 = vpack.c.bf16 %v3164, %v3164
      %v3700 = vld [vmem:[%s23] sm:$0xf]
      %v3701 = vld [vmem:[%s23 + $0x4] sm:$0xf]
      %v3702 = vld [vmem:[%s23 + $0x8] sm:$0xf]
      %v3703 = vld [vmem:[%s23 + $0xc] sm:$0xf]
      %v3704 = vld [vmem:[%s23 + $0x10] sm:$0xf]
      %v3705 = vld [vmem:[%s23 + $0x14] sm:$0xf]
      %v3706 = vld [vmem:[%s23 + $0x18] sm:$0xf]
      %v3707 = vld [vmem:[%s23 + $0x1c] sm:$0xf]
      %v3708 = vpack.c.bf16 %v3688, %v3688
      %v3709 = vpack.c.bf16 %v3689, %v3689
      %v3718 = vunpack.c.l.b16 %v3700
      %v3719 = vunpack.c.l.b16 %v3701
      %v3720 = vunpack.c.l.b16 %v3702
      %v3721 = vunpack.c.l.b16 %v3703
      %v3722 = vunpack.c.l.b16 %v3704
      %v3723 = vunpack.c.l.b16 %v3705
      %v3724 = vunpack.c.l.b16 %v3706
      %v3725 = vunpack.c.l.b16 %v3707
      %v3726 = vpack.c.b16 %v3719, %v3718
      %v3727 = vpack.c.b16 %v3721, %v3720
      %v3728 = vpack.c.b16 %v3723, %v3722
      %v3729 = vpack.c.b16 %v3725, %v3724
      %v3731 = vsel %vm1139, %v3726, 0
      %v3734 = vsel %vm1139, %v3727, 0
      %v3737 = vsel %vm1139, %v3728, 0
      %v3740 = vsel %vm1139, %v3729, 0
      %v3743 = vand.u32 %v3708, %v1149
      %v3746 = vand.u32 %v3709, %v1149
      %3748 = vmatprep.subr.bf16.mxu0 %v3746
      %3749 = vmatpush1.bf16.msra.mxu0 %v3743
      %3750 = vmatprep.subr.bf16.mxu0 0
      %3751 = vmatpush1.bf16.msra.mxu0 0
      %3752 = vmatprep.subr.bf16.mxu0 0
      %3753 = vmatpush1.bf16.msra.mxu0 0
      %3754 = vmatprep.subr.bf16.mxu0 0
      %3755 = vmatpush1.bf16.msra.mxu0 0
      %3756 = vmatprep.subr.bf16.mxu0 0
      %3757 = vmatpush1.bf16.msra.mxu0 0
      %3758 = vmatprep.subr.bf16.mxu0 0
      %3759 = vmatpush1.bf16.msra.mxu0 0
      %3760 = vmatprep.subr.bf16.mxu0 0
      %3761 = vmatpush1.bf16.msra.mxu0 0
      %3762 = vmatprep.subr.bf16.mxu0 0
      %3763 = vmatpush1.bf16.msra.mxu0 0
      %3764 = vmatprep.subr.bf16.mxu0 0
      %3765 = vmatpush1.bf16.msra.mxu0 0
      %3766 = vmatprep.subr.bf16.mxu0 0
      %3767 = vmatpush1.bf16.msra.mxu0 0
      %3768 = vmatprep.subr.bf16.mxu0 0
      %3769 = vmatpush1.bf16.msra.mxu0 0
      %3770 = vmatprep.subr.bf16.mxu0 0
      %3771 = vmatpush1.bf16.msra.mxu0 0
      %3772 = vmatprep.subr.bf16.mxu0 0
      %3773 = vmatpush1.bf16.msra.mxu0 0
      %3774 = vmatprep.subr.bf16.mxu0 0
      %3775 = vmatpush1.bf16.msra.mxu0 0
      %3776 = vmatprep.subr.bf16.mxu0 0
      %3777 = vmatpush1.bf16.msra.mxu0 0
      %3778 = vmatprep.subr.bf16.mxu0 0
      %3779 = vmatpush1.bf16.msra.mxu0 0
      %3780 = vmatprep.mubr.bf16.mxu0 0
      %3781 = vmatmul.mubr.bf16.gmra.mrb[0].mxu0 %v3731
      %v3782 = vpop.f32.mrb[0].mxu0
      %v3783 = vadd.f32 0.0, %v3782
      %v3784 = vpop.f32.mrb[0].mxu0
      %v3785 = vadd.f32 0.0, %v3784
      %v3786 = vpop.f32.mrb[0].mxu0
      %v3787 = vadd.f32 0.0, %v3786
      %v3788 = vpop.f32.mrb[0].mxu0
      %v3789 = vadd.f32 0.0, %v3788
      %3790 = vmatprep.mubr.bf16.mxu0 0
      %3791 = vmatmul.mubr.bf16.gmra.mrb[0].mxu0 %v3734
      %v3792 = vpop.f32.mrb[0].mxu0
      %v3793 = vadd.f32 0.0, %v3792
      %v3794 = vpop.f32.mrb[0].mxu0
      %v3795 = vadd.f32 0.0, %v3794
      %v3796 = vpop.f32.mrb[0].mxu0
      %v3797 = vadd.f32 0.0, %v3796
      %v3798 = vpop.f32.mrb[0].mxu0
      %v3799 = vadd.f32 0.0, %v3798
      %3800 = vmatprep.mubr.bf16.mxu0 0
      %3801 = vmatmul.mubr.bf16.gmra.mrb[0].mxu0 %v3737
      %v3802 = vpop.f32.mrb[0].mxu0
      %v3803 = vadd.f32 0.0, %v3802
      %v3804 = vpop.f32.mrb[0].mxu0
      %v3805 = vadd.f32 0.0, %v3804
      %v3806 = vpop.f32.mrb[0].mxu0
      %v3807 = vadd.f32 0.0, %v3806
      %v3808 = vpop.f32.mrb[0].mxu0
      %v3809 = vadd.f32 0.0, %v3808
      %3810 = vmatprep.mubr.bf16.mxu0 0
      %3811 = vmatmul.mubr.bf16.gmra.mrb[0].mxu0 %v3740
      %v3812 = vpop.f32.mrb[0].mxu0
      %v3813 = vadd.f32 0.0, %v3812
      %v3814 = vpop.f32.mrb[0].mxu0
      %v3815 = vadd.f32 0.0, %v3814
      %v3816 = vpop.f32.mrb[0].mxu0
      %v3817 = vadd.f32 0.0, %v3816
      %v3818 = vpop.f32.mrb[0].mxu0
      %v3819 = vadd.f32 0.0, %v3818
      %3820 = vdwg.mxu0
      %v3829 = vunpack.c.l.b16 %v3690
      %v3830 = vunpack.c.l.b16 %v3691
      %v3831 = vunpack.c.l.b16 %v3692
      %v3832 = vunpack.c.l.b16 %v3693
      %v3833 = vunpack.c.l.b16 %v3694
      %v3834 = vunpack.c.l.b16 %v3695
      %v3835 = vunpack.c.l.b16 %v3696
      %v3836 = vunpack.c.l.b16 %v3697
      %v3837 = vpack.c.b16 %v3830, %v3829
      %v3838 = vpack.c.b16 %v3832, %v3831
      %v3839 = vpack.c.b16 %v3834, %v3833
      %v3840 = vpack.c.b16 %v3836, %v3835
      %v3842 = vsel %vm1139, %v3837, 0
      %v3845 = vsel %vm1139, %v3838, 0
      %v3848 = vsel %vm1139, %v3839, 0
      %v3851 = vsel %vm1139, %v3840, 0
      %v3854 = vand.u32 %v3698, %v1149
      %v3857 = vand.u32 %v3699, %v1149
      %3859 = vmatprep.subr.bf16.mxu0 %v3857
      %3860 = vmatpush1.bf16.msra.mxu0 %v3854
      %3861 = vmatprep.subr.bf16.mxu0 0
      %3862 = vmatpush1.bf16.msra.mxu0 0
      %3863 = vmatprep.subr.bf16.mxu0 0
      %3864 = vmatpush1.bf16.msra.mxu0 0
      %3865 = vmatprep.subr.bf16.mxu0 0
      %3866 = vmatpush1.bf16.msra.mxu0 0
      %3867 = vmatprep.subr.bf16.mxu0 0
      %3868 = vmatpush1.bf16.msra.mxu0 0
      %3869 = vmatprep.subr.bf16.mxu0 0
      %3870 = vmatpush1.bf16.msra.mxu0 0
      %3871 = vmatprep.subr.bf16.mxu0 0
      %3872 = vmatpush1.bf16.msra.mxu0 0
      %3873 = vmatprep.subr.bf16.mxu0 0
      %3874 = vmatpush1.bf16.msra.mxu0 0
      %3875 = vmatprep.subr.bf16.mxu0 0
      %3876 = vmatpush1.bf16.msra.mxu0 0
      %3877 = vmatprep.subr.bf16.mxu0 0
      %3878 = vmatpush1.bf16.msra.mxu0 0
      %3879 = vmatprep.subr.bf16.mxu0 0
      %3880 = vmatpush1.bf16.msra.mxu0 0
      %3881 = vmatprep.subr.bf16.mxu0 0
      %3882 = vmatpush1.bf16.msra.mxu0 0
      %3883 = vmatprep.subr.bf16.mxu0 0
      %3884 = vmatpush1.bf16.msra.mxu0 0
      %3885 = vmatprep.subr.bf16.mxu0 0
      %3886 = vmatpush1.bf16.msra.mxu0 0
      %3887 = vmatprep.subr.bf16.mxu0 0
      %3888 = vmatpush1.bf16.msra.mxu0 0
      %3889 = vmatprep.subr.bf16.mxu0 0
      %3890 = vmatpush1.bf16.msra.mxu0 0
      %3891 = vmatprep.mubr.bf16.mxu0 0
      %3892 = vmatmul.mubr.bf16.gmra.mrb[0].mxu0 %v3842
      %v3893 = vpop.f32.mrb[0].mxu0
      %v3894 = vadd.f32 %v3783, %v3893
      %v3895 = vpop.f32.mrb[0].mxu0
      %v3896 = vadd.f32 %v3785, %v3895
      %v3897 = vpop.f32.mrb[0].mxu0
      %v3898 = vadd.f32 %v3787, %v3897
      %v3899 = vpop.f32.mrb[0].mxu0
      %v3900 = vadd.f32 %v3789, %v3899
      %3901 = vmatprep.mubr.bf16.mxu0 0
      %3902 = vmatmul.mubr.bf16.gmra.mrb[0].mxu0 %v3845
      %v3903 = vpop.f32.mrb[0].mxu0
      %v3904 = vadd.f32 %v3793, %v3903
      %v3905 = vpop.f32.mrb[0].mxu0
      %v3906 = vadd.f32 %v3795, %v3905
      %v3907 = vpop.f32.mrb[0].mxu0
      %v3908 = vadd.f32 %v3797, %v3907
      %v3909 = vpop.f32.mrb[0].mxu0
      %v3910 = vadd.f32 %v3799, %v3909
      %3911 = vmatprep.mubr.bf16.mxu0 0
      %3912 = vmatmul.mubr.bf16.gmra.mrb[0].mxu0 %v3848
      %v3913 = vpop.f32.mrb[0].mxu0
      %v3914 = vadd.f32 %v3803, %v3913
      %v3915 = vpop.f32.mrb[0].mxu0
      %v3916 = vadd.f32 %v3805, %v3915
      %v3917 = vpop.f32.mrb[0].mxu0
      %v3918 = vadd.f32 %v3807, %v3917
      %v3919 = vpop.f32.mrb[0].mxu0
      %v3920 = vadd.f32 %v3809, %v3919
      %3921 = vmatprep.mubr.bf16.mxu0 0
      %3922 = vmatmul.mubr.bf16.gmra.mrb[0].mxu0 %v3851
      %v3923 = vpop.f32.mrb[0].mxu0
      %v3924 = vadd.f32 %v3813, %v3923
      %v3925 = vpop.f32.mrb[0].mxu0
      %v3926 = vadd.f32 %v3815, %v3925
      %v3927 = vpop.f32.mrb[0].mxu0
      %v3928 = vadd.f32 %v3817, %v3927
      %v3929 = vpop.f32.mrb[0].mxu0
      %v3930 = vadd.f32 %v3819, %v3929
      %3931 = vdwg.mxu0
      %v3932 = vld [vmem:[%s24] sm:$0xff]
      %v3933 = vld [vmem:[%s24 + $0x8] sm:$0xff]
      %v3934 = vld [vmem:[%s24 + $0x10] sm:$0xff]
      %v3935 = vld [vmem:[%s24 + $0x18] sm:$0xff]
      %v3936 = vld [vmem:[%s24 + $0x20] sm:$0xff]
      %v3937 = vld [vmem:[%s24 + $0x28] sm:$0xff]
      %v3938 = vld [vmem:[%s24 + $0x30] sm:$0xff]
      %v3939 = vld [vmem:[%s24 + $0x38] sm:$0xff]
      %3941 = vset.pattern.permute.xlu0 0
      %3942 = vperm.xlu0 %3941, %v3932
      %v3943 = vpop.permute.xlu0 %3942
      %3946 = vset.pattern.permute.xlu0 0
      %3947 = vperm.xlu0 %3946, %v3933
      %v3948 = vpop.permute.xlu0 %3947
      %3951 = vset.pattern.permute.xlu0 0
      %3952 = vperm.xlu0 %3951, %v3934
      %v3953 = vpop.permute.xlu0 %3952
      %3956 = vset.pattern.permute.xlu0 0
      %3957 = vperm.xlu0 %3956, %v3935
      %v3958 = vpop.permute.xlu0 %3957
      %3961 = vset.pattern.permute.xlu0 0
      %3962 = vperm.xlu0 %3961, %v3936
      %v3963 = vpop.permute.xlu0 %3962
      %3966 = vset.pattern.permute.xlu0 0
      %3967 = vperm.xlu0 %3966, %v3937
      %v3968 = vpop.permute.xlu0 %3967
      %3971 = vset.pattern.permute.xlu0 0
      %3972 = vperm.xlu0 %3971, %v3938
      %v3973 = vpop.permute.xlu0 %3972
      %3976 = vset.pattern.permute.xlu0 0
      %3977 = vperm.xlu0 %3976, %v3939
      %v3978 = vpop.permute.xlu0 %3977
      %v3980 = vadd.f32 %v3894, %v3943
      %v3981 = vadd.f32 %v3896, %v3943
      %v3982 = vadd.f32 %v3898, %v3948
      %v3983 = vadd.f32 %v3900, %v3948
      %v3984 = vadd.f32 %v3904, %v3953
      %v3985 = vadd.f32 %v3906, %v3953
      %v3986 = vadd.f32 %v3908, %v3958
      %v3987 = vadd.f32 %v3910, %v3958
      %v3988 = vadd.f32 %v3914, %v3963
      %v3989 = vadd.f32 %v3916, %v3963
      %v3990 = vadd.f32 %v3918, %v3968
      %v3991 = vadd.f32 %v3920, %v3968
      %v3992 = vadd.f32 %v3924, %v3973
      %v3993 = vadd.f32 %v3926, %v3973
      %v3994 = vadd.f32 %v3928, %v3978
      %v3995 = vadd.f32 %v3930, %v3978
      %v3996 = vmax.f32 %v3980, 0.0
      %v3997 = vmax.f32 %v3981, 0.0
      %v3998 = vmax.f32 %v3982, 0.0
      %v3999 = vmax.f32 %v3983, 0.0
      %v4000 = vmax.f32 %v3984, 0.0
      %v4001 = vmax.f32 %v3985, 0.0
      %v4002 = vmax.f32 %v3986, 0.0
      %v4003 = vmax.f32 %v3987, 0.0
      %v4004 = vmax.f32 %v3988, 0.0
      %v4005 = vmax.f32 %v3989, 0.0
      %v4006 = vmax.f32 %v3990, 0.0
      %v4007 = vmax.f32 %v3991, 0.0
      %v4008 = vmax.f32 %v3992, 0.0
      %v4009 = vmax.f32 %v3993, 0.0
      %v4010 = vmax.f32 %v3994, 0.0
      %v4011 = vmax.f32 %v3995, 0.0
      %v4012 = vld [vmem:[%s25] sm:$0x3]
      %v4013 = vpack.c.bf16 %v3998, %v3996
      %v4014 = vpack.c.bf16 %v3999, %v3997
      %v4015 = vpack.c.bf16 %v4002, %v4000
      %v4016 = vpack.c.bf16 %v4003, %v4001
      %v4017 = vpack.c.bf16 %v4006, %v4004
      %v4018 = vpack.c.bf16 %v4007, %v4005
      %v4019 = vpack.c.bf16 %v4010, %v4008
      %v4020 = vpack.c.bf16 %v4011, %v4009
      %v4021 = vld [vmem:[%s26] sm:$0x7]
      %4023 = vset.pattern.permute.xlu0 0
      %4024 = vperm.xlu0 %4023, %v4021
      %v4025 = vpop.permute.xlu0 %4024
      %v4028 = vsel %vm3118, %v4012, 0
      %4030 = vmatprep.subr.bf16.mxu0 %v4014
      %4031 = vmatpush1.bf16.msra.mxu0 %v4013
      %4032 = vmatprep.subr.bf16.mxu0 %v4016
      %4033 = vmatpush1.bf16.msra.mxu0 %v4015
      %4034 = vmatprep.subr.bf16.mxu0 %v4018
      %4035 = vmatpush1.bf16.msra.mxu0 %v4017
      %4036 = vmatprep.subr.bf16.mxu0 %v4020
      %4037 = vmatpush1.bf16.msra.mxu0 %v4019
      %4038 = vmatprep.subr.bf16.mxu0 0
      %4039 = vmatpush1.bf16.msra.mxu0 0
      %4040 = vmatprep.subr.bf16.mxu0 0
      %4041 = vmatpush1.bf16.msra.mxu0 0
      %4042 = vmatprep.subr.bf16.mxu0 0
      %4043 = vmatpush1.bf16.msra.mxu0 0
      %4044 = vmatprep.subr.bf16.mxu0 0
      %4045 = vmatpush1.bf16.msra.mxu0 0
      %4046 = vmatprep.subr.bf16.mxu0 0
      %4047 = vmatpush1.bf16.msra.mxu0 0
      %4048 = vmatprep.subr.bf16.mxu0 0
      %4049 = vmatpush1.bf16.msra.mxu0 0
      %4050 = vmatprep.subr.bf16.mxu0 0
      %4051 = vmatpush1.bf16.msra.mxu0 0
      %4052 = vmatprep.subr.bf16.mxu0 0
      %4053 = vmatpush1.bf16.msra.mxu0 0
      %4054 = vmatprep.subr.bf16.mxu0 0
      %4055 = vmatpush1.bf16.msra.mxu0 0
      %4056 = vmatprep.subr.bf16.mxu0 0
      %4057 = vmatpush1.bf16.msra.mxu0 0
      %4058 = vmatprep.subr.bf16.mxu0 0
      %4059 = vmatpush1.bf16.msra.mxu0 0
      %4060 = vmatprep.subr.bf16.mxu0 0
      %4061 = vmatpush1.bf16.msra.mxu0 0
      %4062 = vmatprep.mubr.bf16.mxu0 0
      %4063 = vmatmul.mubr.bf16.gmra.mrb[0].mxu0 %v4028
      %v4064 = vpop.f32.mrb[0].mxu0
      %v4065 = vadd.f32 %v4025, %v4064
      %v4066 = vpop.f32.mrb[0].mxu0
      %v4067 = vadd.f32 %v4025, %v4066
      %v4068 = vpop.f32.mrb[0].mxu0
      %v4069 = vpop.f32.mrb[0].mxu0
      %4070 = vdwg.mxu0
      %v4073 = vcombine.low %v3163, %v3164
      %4075 = vst [vmem:[%s1067] sm:$0x77] %v4073
      %v4076 = vadd.f32 %v3163, %v4065
      %v4077 = vadd.f32 %v3164, %v4067
      %v4080 = vcombine.low %v4076, %v4077
      %4082 = vst [vmem:[%s1077] sm:$0x77] %v4080
      %s4083 = smul.u32 2, %s45
      %p4084 = scmp.lt.s32.totalorder %s44, 1
      %s4085 = scalar_select %p4084, %s44, 1
      %p4086 = scmp.lt.s32.totalorder %s4083, 1
      %s4087 = scalar_select %p4086, %s4083, 1
      %s4088 = smul.addr %s4085, 2
      %s4089 = sadd.s32 %s4087, %s4088
      %s4090 = smul.addr %s4089, 4
      %s4091 = scalar_lea.vmem %s27, %s4090
      %s4092 = smul.u32 2, %s45
      %p4093 = scmp.lt.s32.totalorder %s44, 1
      %s4094 = scalar_select %p4093, %s44, 1
      %p4095 = scmp.lt.s32.totalorder %s4092, 1
      %s4096 = scalar_select %p4095, %s4092, 1
      %s4097 = smul.addr %s4094, 2
      %s4098 = sadd.s32 %s4096, %s4097
      %s4099 = smul.addr %s4098, 4
      %s4100 = scalar_lea.vmem %s28, %s4099
      // Predicated region
      $region129: #{difrint_forward.1} parent=127 // pred_check
        %p4101 = pneg %p685
      $region130: #{difrint_forward.1} parent=127 // pred_check_branch
        %4103 = sbr.rel (%p4101) target = $region132
      $region131: #{difrint_forward.1} parent=127 // pred_region
        %s4104 = smul.u32 2, %s45
      $region132: #{difrint_forward.1} parent=127 // pred_fallthru
        _
      // Predicated region
      $region133: #{difrint_forward.1} parent=127 // pred_check
        %p4105 = pneg %p713
      $region134: #{difrint_forward.1} parent=127 // pred_check_branch
        %4107 = sbr.rel (%p4105) target = $region136
      $region135: #{difrint_forward.1} parent=127 // pred_region
        %s4108 = smul.u32 2, %s45
      $region136: #{difrint_forward.1} parent=127 // pred_fallthru
        _
    $region128: #{difrint_forward.1} parent=5 // pred_fallthru
      _
    %p4109 = scmp.le.s32.totalorder 2, %s35
    // Predicated region
    $region137: #{difrint_forward.1} parent=5 // pred_check
      %p4110 = pneg %p4109
    $region138: #{difrint_forward.1} parent=5 // pred_check_branch
      %4112 = sbr.rel (%p4110) target = $region140
    $region139: #{difrint_forward.1} parent=5 // pred_region
      %s4113 = ssub.s32 %s35, 2
      // Predicated region
      $region141: #{difrint_forward.1} parent=139 // pred_check
        %p4114 = pneg %p691
      $region142: #{difrint_forward.1} parent=139 // pred_check_branch
        %4116 = sbr.rel (%p4114) target = $region144
      $region143: #{difrint_forward.1} parent=139 // pred_region
        %s4117 = smul.u32 2, %s47
        %p4118 = scmp.lt.s32.totalorder %s46, 1
        %s4119 = scalar_select %p4118, %s46, 1
        %p4120 = scmp.lt.s32.totalorder %s4117, 1
        %s4121 = scalar_select %p4120, %s4117, 1
        %s4122 = smul.addr %s4119, 2
        %s4123 = sadd.s32 %s4121, %s4122
        %s4124 = smul.addr %s4123, 4
        %s4125 = scalar_lea.vmem %s27, %s4124
      $region144: #{difrint_forward.1} parent=139 // pred_fallthru
        _
      // Predicated region
      $region145: #{difrint_forward.1} parent=139 // pred_check
        %p4126 = pneg %p719
      $region146: #{difrint_forward.1} parent=139 // pred_check_branch
        %4128 = sbr.rel (%p4126) target = $region148
      $region147: #{difrint_forward.1} parent=139 // pred_region
        %s4129 = smul.u32 2, %s47
        %p4130 = scmp.lt.s32.totalorder %s46, 1
        %s4131 = scalar_select %p4130, %s46, 1
        %p4132 = scmp.lt.s32.totalorder %s4129, 1
        %s4133 = scalar_select %p4132, %s4129, 1
        %s4134 = smul.addr %s4131, 2
        %s4135 = sadd.s32 %s4133, %s4134
        %s4136 = smul.addr %s4135, 4
        %s4137 = scalar_lea.vmem %s28, %s4136
      $region148: #{difrint_forward.1} parent=139 // pred_fallthru
        _
    $region140: #{difrint_forward.1} parent=5 // pred_fallthru
      _
  $region6: #{difrint_forward.1} parent=0 // loop_footer
    %s39 = sadd.s32 1, %s35
  $region7: #{difrint_forward.1} parent=0 // loop_footer_branch
    %34 = sbr.rel target = $region3
  $region8: #{difrint_forward.1} parent=0 // loop_exit
    _

</llo_original>
